<compile_context>
chip_gen: v5e
topology: v5e:2x2
jax: 0.10.0
libtpu: 0.0.40
codegen_flags: <defaults>
</compile_context>

<pallas_src>
import functools

import jax
import jax.numpy as jnp
import numpy as np
from jax.experimental import pallas as pl
from jax.experimental.pallas import tpu as pltpu


def _round_up(a, b):
    return (a + b - 1) // b * b


def _convlstm_kernel(x_ref, h_ref, c_ref, wx_ref, wh_ref, b_ref, mask_ref,
                     hidden_ref, cell_ref, *, k, img_w, ch_pad,
                     compute_dtype, nonlin_dtype):
    """One whole image per block, channel-major (channels x pixels).

    x_ref      : (1, Ci,  Mp)   input activations
    h_ref      : (1, Ch,  Mp)   previous hidden state
    c_ref      : (1, Chp, Mp)   previous cell state (f32, gate-padded rows)
    wx_ref     : (k*k, 4*Chp, Ci)  per-tap input weights   (bf16)
    wh_ref     : (k*k, 4*Chp, Ch)  per-tap hidden weights  (bf16)
    b_ref      : (4*Chp, 1)     conv bias (f32)
    mask_ref   : (k*k, 1, Mp)   per-tap validity mask (1.0 inside image)
    hidden_ref : (1, Chp, Mp)   new hidden state
    cell_ref   : (1, Chp, Mp)   new cell state (f32)
    """
    p = k // 2
    n_pix = x_ref.shape[-1]                 # Mp (multiple of 128)
    c_out = wx_ref.shape[1]                 # 4 * ch_pad

    # Load once; shifts/masks in f32, MXU operands in compute_dtype (bf16).
    x = x_ref[0].astype(jnp.float32)        # (Ci, Mp)
    h = h_ref[0].astype(jnp.float32)        # (Ch, Mp)

    acc = jnp.zeros((c_out, n_pix), jnp.float32)
    for tap in range(k * k):                # unrolled: k*k = 9 taps
        dy = tap // k - p
        dx = tap % k - p
        # out[m] needs pixel m + dy*W + dx  ->  roll by the negative offset.
        shift = (-(dy * img_w + dx)) % n_pix
        x_t = pltpu.roll(x, shift, 1) if shift else x   # XLU lane rotate
        h_t = pltpu.roll(h, shift, 1) if shift else h
        msk = mask_ref[tap]                              # (1, Mp) f32
        x_t = (x_t * msk).astype(compute_dtype)
        h_t = (h_t * msk).astype(compute_dtype)
        # Accumulating MXU matmuls, f32 accumulation (K = Ci and K = Ch).
        acc = acc + jnp.dot(wx_ref[tap], x_t,
                            preferred_element_type=jnp.float32)
        acc = acc + jnp.dot(wh_ref[tap], h_t,
                            preferred_element_type=jnp.float32)

    gates = acc + b_ref[...]                # (4*Chp, Mp) f32, lane broadcast

    # Gate split = sublane slices at multiples of ch_pad (multiple of 8).
    g = gates.astype(nonlin_dtype)          # no-op when nonlin_dtype == f32
    in_gate = jax.nn.sigmoid(g[0 * ch_pad:1 * ch_pad]).astype(jnp.float32)
    remember_gate = jax.nn.sigmoid(g[1 * ch_pad:2 * ch_pad]).astype(jnp.float32)
    out_gate = jax.nn.sigmoid(g[2 * ch_pad:3 * ch_pad]).astype(jnp.float32)
    cell_gate = jnp.tanh(g[3 * ch_pad:4 * ch_pad]).astype(jnp.float32)

    prev_cell = c_ref[0].astype(jnp.float32)
    cell = remember_gate * prev_cell + in_gate * cell_gate        # f32 state
    tanh_cell = jnp.tanh(cell.astype(nonlin_dtype)).astype(jnp.float32)
    hidden = out_gate * tanh_cell

    # Lane-dense stores: last dim is the pixel axis (multiple of 128).
    cell_ref[0] = cell.astype(cell_ref.dtype)
    hidden_ref[0] = hidden.astype(hidden_ref.dtype)


def conv_lstm_cell(input_nchw, prev_state, weight, bias, kernel_size, *,
                   compute_dtype=jnp.bfloat16, nonlin_dtype=None):
    """Pallas ConvLSTMCell.forward.

    input_nchw : (B, Ci, H, W)
    prev_state : None or (prev_hidden, prev_cell), each (B, Ch, H, W)
    weight     : (4*Ch, Ci+Ch, k, k)   (PyTorch OIHW conv weight)
    bias       : (4*Ch,)
    returns    : (hidden, cell); hidden in input dtype, cell always f32.
    """
    B, Ci, H, W = input_nchw.shape
    Cout, Cin, kh, kw = weight.shape
    assert kh == kernel_size and kw == kernel_size and Cin == Ci + Cout // 4
    Ch = Cout // 4
    k = kernel_size
    p = k // 2
    k2 = k * k
    in_dtype = input_nchw.dtype
    compute_dtype = jnp.dtype(compute_dtype)
    # Pass jnp.bfloat16 on v6e/v7x if the EUP slot is the measured bottleneck.
    nonlin_dtype = jnp.dtype(jnp.float32 if nonlin_dtype is None else nonlin_dtype)

    if prev_state is None:
        prev_hidden = jnp.zeros((B, Ch, H, W), in_dtype)
        prev_cell = jnp.zeros((B, Ch, H, W), jnp.float32)
    else:
        prev_hidden, prev_cell = prev_state

    # Alignment padding (no-ops for the common aligned case).
    M1 = H * W
    M1p = _round_up(M1, 128)            # lane tile
    Chp = _round_up(Ch, 8)              # sublane tile -> aligned gate offsets
    Coutp = 4 * Chp

    # ---- layout prep: reshapes / zero-pads only (no transposes, no slab) ---
    x = input_nchw.reshape(B, Ci, M1)
    h = prev_hidden.reshape(B, Ch, M1)
    c = prev_cell.reshape(B, Ch, M1).astype(jnp.float32)
    if M1p != M1:
        pad = ((0, 0), (0, 0), (0, M1p - M1))
        x, h, c = jnp.pad(x, pad), jnp.pad(h, pad), jnp.pad(c, pad)
    if Chp != Ch:
        c = jnp.pad(c, ((0, 0), (0, Chp - Ch), (0, 0)))

    # Weights: OIHW -> per-tap (Coutp, Cin), gate rows padded to Chp, then
    # split into the x-part and h-part (so the concat is never materialized).
    w4 = weight.reshape(4, Ch, Cin, k, k)
    b4 = bias.reshape(4, Ch)
    if Chp != Ch:
        w4 = jnp.pad(w4, ((0, 0), (0, Chp - Ch), (0, 0), (0, 0), (0, 0)))
        b4 = jnp.pad(b4, ((0, 0), (0, Chp - Ch)))
    w_taps = jnp.transpose(w4.reshape(Coutp, Cin, k, k),
                           (2, 3, 0, 1)).reshape(k2, Coutp, Cin)
    wx = w_taps[:, :, :Ci].astype(compute_dtype)      # (k*k, Coutp, Ci)
    wh = w_taps[:, :, Ci:].astype(compute_dtype)      # (k*k, Coutp, Ch)
    b_col = b4.reshape(Coutp, 1).astype(jnp.float32)

    # Per-tap validity masks (host-built constants, ~k*k*M1p*4 bytes).
    m_idx = np.arange(M1p, dtype=np.int32)
    row, col = m_idx // W, m_idx % W
    mask_np = np.zeros((k2, 1, M1p), np.float32)
    for tap in range(k2):
        dy, dx = tap // k - p, tap % k - p
        mask_np[tap, 0, :] = ((row + dy >= 0) & (row + dy < H) &
                              (col + dx >= 0) & (col + dx < W))
    mask = jnp.asarray(mask_np)

    kernel = functools.partial(
        _convlstm_kernel, k=k, img_w=W, ch_pad=Chp,
        compute_dtype=compute_dtype, nonlin_dtype=nonlin_dtype)

    batch_blk = lambda ch: pl.BlockSpec((1, ch, M1p), lambda b: (b, 0, 0))
    resident3 = lambda shp: pl.BlockSpec(shp, lambda b: (0, 0, 0))

    hidden_p, cell_p = pl.pallas_call(
        kernel,
        out_shape=(jax.ShapeDtypeStruct((B, Chp, M1p), in_dtype),
                   jax.ShapeDtypeStruct((B, Chp, M1p), jnp.float32)),
        grid_spec=pltpu.PrefetchScalarGridSpec(
            num_scalar_prefetch=0,
            grid=(B,),
            in_specs=[
                batch_blk(Ci),                        # x
                batch_blk(Ch),                        # prev_hidden
                batch_blk(Chp),                       # prev_cell (f32)
                resident3((k2, Coutp, Ci)),           # Wx taps (resident)
                resident3((k2, Coutp, Ch)),           # Wh taps (resident)
                pl.BlockSpec((Coutp, 1), lambda b: (0, 0)),   # bias
                resident3((k2, 1, M1p)),              # tap masks
            ],
            out_specs=(
                batch_blk(Chp),                       # hidden
                batch_blk(Chp),                       # cell (f32)
            ),
        ),
        compiler_params=pltpu.CompilerParams(
            # One independent block per batch element -> megacore on v7x.
            dimension_semantics=("parallel",),
            # Per-block working set is tiny; 32 MiB is safe on v5e/v6e/v7x
            # (v7x physical VMEM is only 64 MiB).
            vmem_limit_bytes=32 * 1024 * 1024),
    )(x, h, c, wx, wh, b_col, mask)

    # Back to the module's NCHW convention: slice off alignment padding and
    # reshape (both are no-ops when Ch % 8 == 0 and H*W % 128 == 0).
    hidden = hidden_p[:, :Ch, :M1].reshape(B, Ch, H, W)
    cell = cell_p[:, :Ch, :M1].reshape(B, Ch, H, W)
    return hidden, cell


def _reference(input_nchw, prev_hidden, prev_cell, weight, bias, kernel_size,
               operand_dtype=None):
    """Plain-JAX reference mirroring the PyTorch forward (NCHW).

    If operand_dtype is given, the conv operands are rounded to that dtype
    (mimicking the kernel's bf16 MXU operands); accumulation and gate math
    stay in f32 in both cases.
    """
    p = kernel_size // 2
    stacked = jnp.concatenate([input_nchw, prev_hidden], axis=1)
    w = weight
    if operand_dtype is not None:
        stacked = stacked.astype(operand_dtype).astype(jnp.float32)
        w = w.astype(operand_dtype).astype(jnp.float32)
    gates = jax.lax.conv_general_dilated(
        stacked, w, window_strides=(1, 1), padding=[(p, p), (p, p)],
        dimension_numbers=('NCHW', 'OIHW', 'NCHW'),
        precision=jax.lax.Precision.HIGHEST)
    gates = gates + bias[None, :, None, None]
    Ch = weight.shape[0] // 4
    in_gate = jax.nn.sigmoid(gates[:, 0 * Ch:1 * Ch])
    remember_gate = jax.nn.sigmoid(gates[:, 1 * Ch:2 * Ch])
    out_gate = jax.nn.sigmoid(gates[:, 2 * Ch:3 * Ch])
    cell_gate = jnp.tanh(gates[:, 3 * Ch:4 * Ch])
    cell = remember_gate * prev_cell + in_gate * cell_gate
    hidden = out_gate * jnp.tanh(cell)
    return hidden, cell


if __name__ == "__main__":
    # Small shapes consistent with the module's forward pass.
    B, Ci, Ch, H, W, k = 2, 4, 32, 16, 16, 3
    Cin = Ci + Ch           # conv input channels (stacked input + hidden)
    Cout = 4 * Ch           # conv output channels (4 gates)

    key = jax.random.PRNGKey(0)
    kx_, kh_, kc_, kw_, kb_ = jax.random.split(key, 5)

    x = jax.random.normal(kx_, (B, Ci, H, W), jnp.float32)
    prev_hidden = jax.random.normal(kh_, (B, Ch, H, W), jnp.float32)
    prev_cell = jax.random.normal(kc_, (B, Ch, H, W), jnp.float32)

    # Deterministic PyTorch-style init: U(-1/sqrt(fan_in), 1/sqrt(fan_in)).
    fan_in = Cin * k * k
    bound = 1.0 / np.sqrt(fan_in)
    weight = jax.random.uniform(kw_, (Cout, Cin, k, k), jnp.float32,
                                minval=-bound, maxval=bound)
    bias = jax.random.uniform(kb_, (Cout,), jnp.float32,
                              minval=-bound, maxval=bound)

    hidden, cell = conv_lstm_cell(x, (prev_hidden, prev_cell), weight, bias, k)
    hidden = jax.block_until_ready(hidden)
    cell = jax.block_until_ready(cell)

    # Tight check vs a reference with the same bf16 operand rounding
    # (conv accumulation and gate math are f32 in both).
    ref_h_bf, ref_c_bf = _reference(x, prev_hidden, prev_cell, weight, bias, k,
                                    operand_dtype=jnp.bfloat16)
    np.testing.assert_allclose(np.asarray(hidden), np.asarray(ref_h_bf),
                               atol=2e-3, rtol=2e-3)
    np.testing.assert_allclose(np.asarray(cell), np.asarray(ref_c_bf),
                               atol=2e-3, rtol=2e-3)

    # Sanity check vs the pure-f32 module semantics (bf16-operand tolerance).
    ref_h32, ref_c32 = _reference(x, prev_hidden, prev_cell, weight, bias, k)
    np.testing.assert_allclose(np.asarray(hidden), np.asarray(ref_h32),
                               atol=5e-2, rtol=5e-2)
    np.testing.assert_allclose(np.asarray(cell), np.asarray(ref_c32),
                               atol=5e-2, rtol=5e-2)

    print("KERNEL_OK")
</pallas_src>

<mosaic_0001>
module attributes {stable_mosaic.version = 11 : i64} {
  func.func @_convlstm_kernel(%arg0: i32, %arg1: memref<1x4x256xf32, #tpu.memory_space<vmem>>, %arg2: memref<1x32x256xf32, #tpu.memory_space<vmem>>, %arg3: memref<1x32x256xf32, #tpu.memory_space<vmem>>, %arg4: memref<9x128x4xbf16, #tpu.memory_space<vmem>>, %arg5: memref<9x128x32xbf16, #tpu.memory_space<vmem>>, %arg6: memref<128x1xf32, #tpu.memory_space<vmem>>, %arg7: memref<9x1x256xf32, #tpu.memory_space<vmem>>, %arg8: memref<1x32x256xf32, #tpu.memory_space<vmem>>, %arg9: memref<1x32x256xf32, #tpu.memory_space<vmem>>) attributes {dimension_semantics = [#tpu.dimension_semantics<parallel>], iteration_bounds = array<i64: 2>, scalar_prefetch = 0 : i64, scratch_operands = 0 : i64, tpu.core_type = #tpu.core_type<tc>, window_params = [{transform_indices = @transform_0, window_bounds = array<i64: 1, 4, 256>}, {transform_indices = @transform_1, window_bounds = array<i64: 1, 32, 256>}, {transform_indices = @transform_2, window_bounds = array<i64: 1, 32, 256>}, {pipeline_mode = #tpu.pipeline_mode<synchronous>, transform_indices = @transform_3, window_bounds = array<i64: 9, 128, 4>}, {pipeline_mode = #tpu.pipeline_mode<synchronous>, transform_indices = @transform_4, window_bounds = array<i64: 9, 128, 32>}, {pipeline_mode = #tpu.pipeline_mode<synchronous>, transform_indices = @transform_5, window_bounds = array<i64: 128, 1>}, {pipeline_mode = #tpu.pipeline_mode<synchronous>, transform_indices = @transform_6, window_bounds = array<i64: 9, 1, 256>}, {transform_indices = @transform_7, window_bounds = array<i64: 1, 32, 256>}, {transform_indices = @transform_8, window_bounds = array<i64: 1, 32, 256>}]} {
    %c0 = arith.constant 0 : index
    %c0_0 = arith.constant 0 : index
    %c0_1 = arith.constant 0 : index
    %0 = vector.load %arg1[%c0, %c0_0, %c0_1] : memref<1x4x256xf32, #tpu.memory_space<vmem>>, vector<1x4x256xf32>
    %1 = vector.shape_cast %0 : vector<1x4x256xf32> to vector<4x256xf32>
    %c0_2 = arith.constant 0 : index
    %c0_3 = arith.constant 0 : index
    %c0_4 = arith.constant 0 : index
    %2 = vector.load %arg2[%c0_2, %c0_3, %c0_4] : memref<1x32x256xf32, #tpu.memory_space<vmem>>, vector<1x32x256xf32>
    %3 = vector.shape_cast %2 : vector<1x32x256xf32> to vector<32x256xf32>
    %cst = arith.constant 0.000000e+00 : f32
    %4 = vector.broadcast %cst : f32 to vector<128x256xf32>
    %c17_i32 = arith.constant 17 : i32
    %5 = tpu.dynamic_rotate %1 by %c17_i32 dim 1 : vector<4x256xf32>, i32 -> vector<4x256xf32>
    %c17_i32_5 = arith.constant 17 : i32
    %6 = tpu.dynamic_rotate %3 by %c17_i32_5 dim 1 : vector<32x256xf32>, i32 -> vector<32x256xf32>
    %c0_6 = arith.constant 0 : index
    %c0_7 = arith.constant 0 : index
    %c0_8 = arith.constant 0 : index
    %7 = vector.load %arg7[%c0_6, %c0_7, %c0_8] : memref<9x1x256xf32, #tpu.memory_space<vmem>>, vector<1x1x256xf32>
    %8 = vector.shape_cast %7 : vector<1x1x256xf32> to vector<1x256xf32>
    %9 = vector.broadcast %8 : vector<1x256xf32> to vector<4x256xf32>
    %10 = arith.mulf %5, %9 : vector<4x256xf32>
    %11 = arith.truncf %10 : vector<4x256xf32> to vector<4x256xbf16>
    %12 = vector.broadcast %8 : vector<1x256xf32> to vector<32x256xf32>
    %13 = arith.mulf %6, %12 : vector<32x256xf32>
    %14 = arith.truncf %13 : vector<32x256xf32> to vector<32x256xbf16>
    %c0_9 = arith.constant 0 : index
    %c0_10 = arith.constant 0 : index
    %c0_11 = arith.constant 0 : index
    %15 = vector.load %arg4[%c0_9, %c0_10, %c0_11] : memref<9x128x4xbf16, #tpu.memory_space<vmem>>, vector<1x128x4xbf16>
    %16 = vector.shape_cast %15 : vector<1x128x4xbf16> to vector<128x4xbf16>
    %cst_12 = arith.constant dense<0.000000e+00> : vector<128x256xf32>
    %17 = tpu.matmul %16, %11, %cst_12 {dimension_numbers = #tpu.dot_dimension_numbers<[1], [0], [0], [1], [0, 0, 1, 1], [], []>} : vector<128x4xbf16>, vector<4x256xbf16>, vector<128x256xf32> -> vector<128x256xf32>
    %18 = arith.addf %4, %17 : vector<128x256xf32>
    %c0_13 = arith.constant 0 : index
    %c0_14 = arith.constant 0 : index
    %c0_15 = arith.constant 0 : index
    %19 = vector.load %arg5[%c0_13, %c0_14, %c0_15] : memref<9x128x32xbf16, #tpu.memory_space<vmem>>, vector<1x128x32xbf16>
    %20 = vector.shape_cast %19 : vector<1x128x32xbf16> to vector<128x32xbf16>
    %cst_16 = arith.constant dense<0.000000e+00> : vector<128x256xf32>
    %21 = tpu.matmul %20, %14, %cst_16 {dimension_numbers = #tpu.dot_dimension_numbers<[1], [0], [0], [1], [0, 0, 1, 1], [], []>} : vector<128x32xbf16>, vector<32x256xbf16>, vector<128x256xf32> -> vector<128x256xf32>
    %22 = arith.addf %18, %21 : vector<128x256xf32>
    %c16_i32 = arith.constant 16 : i32
    %23 = tpu.dynamic_rotate %1 by %c16_i32 dim 1 : vector<4x256xf32>, i32 -> vector<4x256xf32>
    %c16_i32_17 = arith.constant 16 : i32
    %24 = tpu.dynamic_rotate %3 by %c16_i32_17 dim 1 : vector<32x256xf32>, i32 -> vector<32x256xf32>
    %c1 = arith.constant 1 : index
    %c0_18 = arith.constant 0 : index
    %c0_19 = arith.constant 0 : index
    %25 = vector.load %arg7[%c1, %c0_18, %c0_19] : memref<9x1x256xf32, #tpu.memory_space<vmem>>, vector<1x1x256xf32>
    %26 = vector.shape_cast %25 : vector<1x1x256xf32> to vector<1x256xf32>
    %27 = vector.broadcast %26 : vector<1x256xf32> to vector<4x256xf32>
    %28 = arith.mulf %23, %27 : vector<4x256xf32>
    %29 = arith.truncf %28 : vector<4x256xf32> to vector<4x256xbf16>
    %30 = vector.broadcast %26 : vector<1x256xf32> to vector<32x256xf32>
    %31 = arith.mulf %24, %30 : vector<32x256xf32>
    %32 = arith.truncf %31 : vector<32x256xf32> to vector<32x256xbf16>
    %c1_20 = arith.constant 1 : index
    %c0_21 = arith.constant 0 : index
    %c0_22 = arith.constant 0 : index
    %33 = vector.load %arg4[%c1_20, %c0_21, %c0_22] : memref<9x128x4xbf16, #tpu.memory_space<vmem>>, vector<1x128x4xbf16>
    %34 = vector.shape_cast %33 : vector<1x128x4xbf16> to vector<128x4xbf16>
    %cst_23 = arith.constant dense<0.000000e+00> : vector<128x256xf32>
    %35 = tpu.matmul %34, %29, %cst_23 {dimension_numbers = #tpu.dot_dimension_numbers<[1], [0], [0], [1], [0, 0, 1, 1], [], []>} : vector<128x4xbf16>, vector<4x256xbf16>, vector<128x256xf32> -> vector<128x256xf32>
    %36 = arith.addf %22, %35 : vector<128x256xf32>
    %c1_24 = arith.constant 1 : index
    %c0_25 = arith.constant 0 : index
    %c0_26 = arith.constant 0 : index
    %37 = vector.load %arg5[%c1_24, %c0_25, %c0_26] : memref<9x128x32xbf16, #tpu.memory_space<vmem>>, vector<1x128x32xbf16>
    %38 = vector.shape_cast %37 : vector<1x128x32xbf16> to vector<128x32xbf16>
    %cst_27 = arith.constant dense<0.000000e+00> : vector<128x256xf32>
    %39 = tpu.matmul %38, %32, %cst_27 {dimension_numbers = #tpu.dot_dimension_numbers<[1], [0], [0], [1], [0, 0, 1, 1], [], []>} : vector<128x32xbf16>, vector<32x256xbf16>, vector<128x256xf32> -> vector<128x256xf32>
    %40 = arith.addf %36, %39 : vector<128x256xf32>
    %c15_i32 = arith.constant 15 : i32
    %41 = tpu.dynamic_rotate %1 by %c15_i32 dim 1 : vector<4x256xf32>, i32 -> vector<4x256xf32>
    %c15_i32_28 = arith.constant 15 : i32
    %42 = tpu.dynamic_rotate %3 by %c15_i32_28 dim 1 : vector<32x256xf32>, i32 -> vector<32x256xf32>
    %c2 = arith.constant 2 : index
    %c0_29 = arith.constant 0 : index
    %c0_30 = arith.constant 0 : index
    %43 = vector.load %arg7[%c2, %c0_29, %c0_30] : memref<9x1x256xf32, #tpu.memory_space<vmem>>, vector<1x1x256xf32>
    %44 = vector.shape_cast %43 : vector<1x1x256xf32> to vector<1x256xf32>
    %45 = vector.broadcast %44 : vector<1x256xf32> to vector<4x256xf32>
    %46 = arith.mulf %41, %45 : vector<4x256xf32>
    %47 = arith.truncf %46 : vector<4x256xf32> to vector<4x256xbf16>
    %48 = vector.broadcast %44 : vector<1x256xf32> to vector<32x256xf32>
    %49 = arith.mulf %42, %48 : vector<32x256xf32>
    %50 = arith.truncf %49 : vector<32x256xf32> to vector<32x256xbf16>
    %c2_31 = arith.constant 2 : index
    %c0_32 = arith.constant 0 : index
    %c0_33 = arith.constant 0 : index
    %51 = vector.load %arg4[%c2_31, %c0_32, %c0_33] : memref<9x128x4xbf16, #tpu.memory_space<vmem>>, vector<1x128x4xbf16>
    %52 = vector.shape_cast %51 : vector<1x128x4xbf16> to vector<128x4xbf16>
    %cst_34 = arith.constant dense<0.000000e+00> : vector<128x256xf32>
    %53 = tpu.matmul %52, %47, %cst_34 {dimension_numbers = #tpu.dot_dimension_numbers<[1], [0], [0], [1], [0, 0, 1, 1], [], []>} : vector<128x4xbf16>, vector<4x256xbf16>, vector<128x256xf32> -> vector<128x256xf32>
    %54 = arith.addf %40, %53 : vector<128x256xf32>
    %c2_35 = arith.constant 2 : index
    %c0_36 = arith.constant 0 : index
    %c0_37 = arith.constant 0 : index
    %55 = vector.load %arg5[%c2_35, %c0_36, %c0_37] : memref<9x128x32xbf16, #tpu.memory_space<vmem>>, vector<1x128x32xbf16>
    %56 = vector.shape_cast %55 : vector<1x128x32xbf16> to vector<128x32xbf16>
    %cst_38 = arith.constant dense<0.000000e+00> : vector<128x256xf32>
    %57 = tpu.matmul %56, %50, %cst_38 {dimension_numbers = #tpu.dot_dimension_numbers<[1], [0], [0], [1], [0, 0, 1, 1], [], []>} : vector<128x32xbf16>, vector<32x256xbf16>, vector<128x256xf32> -> vector<128x256xf32>
    %58 = arith.addf %54, %57 : vector<128x256xf32>
    %c1_i32 = arith.constant 1 : i32
    %59 = tpu.dynamic_rotate %1 by %c1_i32 dim 1 : vector<4x256xf32>, i32 -> vector<4x256xf32>
    %c1_i32_39 = arith.constant 1 : i32
    %60 = tpu.dynamic_rotate %3 by %c1_i32_39 dim 1 : vector<32x256xf32>, i32 -> vector<32x256xf32>
    %c3 = arith.constant 3 : index
    %c0_40 = arith.constant 0 : index
    %c0_41 = arith.constant 0 : index
    %61 = vector.load %arg7[%c3, %c0_40, %c0_41] : memref<9x1x256xf32, #tpu.memory_space<vmem>>, vector<1x1x256xf32>
    %62 = vector.shape_cast %61 : vector<1x1x256xf32> to vector<1x256xf32>
    %63 = vector.broadcast %62 : vector<1x256xf32> to vector<4x256xf32>
    %64 = arith.mulf %59, %63 : vector<4x256xf32>
    %65 = arith.truncf %64 : vector<4x256xf32> to vector<4x256xbf16>
    %66 = vector.broadcast %62 : vector<1x256xf32> to vector<32x256xf32>
    %67 = arith.mulf %60, %66 : vector<32x256xf32>
    %68 = arith.truncf %67 : vector<32x256xf32> to vector<32x256xbf16>
    %c3_42 = arith.constant 3 : index
    %c0_43 = arith.constant 0 : index
    %c0_44 = arith.constant 0 : index
    %69 = vector.load %arg4[%c3_42, %c0_43, %c0_44] : memref<9x128x4xbf16, #tpu.memory_space<vmem>>, vector<1x128x4xbf16>
    %70 = vector.shape_cast %69 : vector<1x128x4xbf16> to vector<128x4xbf16>
    %cst_45 = arith.constant dense<0.000000e+00> : vector<128x256xf32>
    %71 = tpu.matmul %70, %65, %cst_45 {dimension_numbers = #tpu.dot_dimension_numbers<[1], [0], [0], [1], [0, 0, 1, 1], [], []>} : vector<128x4xbf16>, vector<4x256xbf16>, vector<128x256xf32> -> vector<128x256xf32>
    %72 = arith.addf %58, %71 : vector<128x256xf32>
    %c3_46 = arith.constant 3 : index
    %c0_47 = arith.constant 0 : index
    %c0_48 = arith.constant 0 : index
    %73 = vector.load %arg5[%c3_46, %c0_47, %c0_48] : memref<9x128x32xbf16, #tpu.memory_space<vmem>>, vector<1x128x32xbf16>
    %74 = vector.shape_cast %73 : vector<1x128x32xbf16> to vector<128x32xbf16>
    %cst_49 = arith.constant dense<0.000000e+00> : vector<128x256xf32>
    %75 = tpu.matmul %74, %68, %cst_49 {dimension_numbers = #tpu.dot_dimension_numbers<[1], [0], [0], [1], [0, 0, 1, 1], [], []>} : vector<128x32xbf16>, vector<32x256xbf16>, vector<128x256xf32> -> vector<128x256xf32>
    %76 = arith.addf %72, %75 : vector<128x256xf32>
    %c4 = arith.constant 4 : index
    %c0_50 = arith.constant 0 : index
    %c0_51 = arith.constant 0 : index
    %77 = vector.load %arg7[%c4, %c0_50, %c0_51] : memref<9x1x256xf32, #tpu.memory_space<vmem>>, vector<1x1x256xf32>
    %78 = vector.shape_cast %77 : vector<1x1x256xf32> to vector<1x256xf32>
    %79 = vector.broadcast %78 : vector<1x256xf32> to vector<4x256xf32>
    %80 = arith.mulf %1, %79 : vector<4x256xf32>
    %81 = arith.truncf %80 : vector<4x256xf32> to vector<4x256xbf16>
    %82 = vector.broadcast %78 : vector<1x256xf32> to vector<32x256xf32>
    %83 = arith.mulf %3, %82 : vector<32x256xf32>
    %84 = arith.truncf %83 : vector<32x256xf32> to vector<32x256xbf16>
    %c4_52 = arith.constant 4 : index
    %c0_53 = arith.constant 0 : index
    %c0_54 = arith.constant 0 : index
    %85 = vector.load %arg4[%c4_52, %c0_53, %c0_54] : memref<9x128x4xbf16, #tpu.memory_space<vmem>>, vector<1x128x4xbf16>
    %86 = vector.shape_cast %85 : vector<1x128x4xbf16> to vector<128x4xbf16>
    %cst_55 = arith.constant dense<0.000000e+00> : vector<128x256xf32>
    %87 = tpu.matmul %86, %81, %cst_55 {dimension_numbers = #tpu.dot_dimension_numbers<[1], [0], [0], [1], [0, 0, 1, 1], [], []>} : vector<128x4xbf16>, vector<4x256xbf16>, vector<128x256xf32> -> vector<128x256xf32>
    %88 = arith.addf %76, %87 : vector<128x256xf32>
    %c4_56 = arith.constant 4 : index
    %c0_57 = arith.constant 0 : index
    %c0_58 = arith.constant 0 : index
    %89 = vector.load %arg5[%c4_56, %c0_57, %c0_58] : memref<9x128x32xbf16, #tpu.memory_space<vmem>>, vector<1x128x32xbf16>
    %90 = vector.shape_cast %89 : vector<1x128x32xbf16> to vector<128x32xbf16>
    %cst_59 = arith.constant dense<0.000000e+00> : vector<128x256xf32>
    %91 = tpu.matmul %90, %84, %cst_59 {dimension_numbers = #tpu.dot_dimension_numbers<[1], [0], [0], [1], [0, 0, 1, 1], [], []>} : vector<128x32xbf16>, vector<32x256xbf16>, vector<128x256xf32> -> vector<128x256xf32>
    %92 = arith.addf %88, %91 : vector<128x256xf32>
    %c255_i32 = arith.constant 255 : i32
    %93 = tpu.dynamic_rotate %1 by %c255_i32 dim 1 : vector<4x256xf32>, i32 -> vector<4x256xf32>
    %c255_i32_60 = arith.constant 255 : i32
    %94 = tpu.dynamic_rotate %3 by %c255_i32_60 dim 1 : vector<32x256xf32>, i32 -> vector<32x256xf32>
    %c5 = arith.constant 5 : index
    %c0_61 = arith.constant 0 : index
    %c0_62 = arith.constant 0 : index
    %95 = vector.load %arg7[%c5, %c0_61, %c0_62] : memref<9x1x256xf32, #tpu.memory_space<vmem>>, vector<1x1x256xf32>
    %96 = vector.shape_cast %95 : vector<1x1x256xf32> to vector<1x256xf32>
    %97 = vector.broadcast %96 : vector<1x256xf32> to vector<4x256xf32>
    %98 = arith.mulf %93, %97 : vector<4x256xf32>
    %99 = arith.truncf %98 : vector<4x256xf32> to vector<4x256xbf16>
    %100 = vector.broadcast %96 : vector<1x256xf32> to vector<32x256xf32>
    %101 = arith.mulf %94, %100 : vector<32x256xf32>
    %102 = arith.truncf %101 : vector<32x256xf32> to vector<32x256xbf16>
    %c5_63 = arith.constant 5 : index
    %c0_64 = arith.constant 0 : index
    %c0_65 = arith.constant 0 : index
    %103 = vector.load %arg4[%c5_63, %c0_64, %c0_65] : memref<9x128x4xbf16, #tpu.memory_space<vmem>>, vector<1x128x4xbf16>
    %104 = vector.shape_cast %103 : vector<1x128x4xbf16> to vector<128x4xbf16>
    %cst_66 = arith.constant dense<0.000000e+00> : vector<128x256xf32>
    %105 = tpu.matmul %104, %99, %cst_66 {dimension_numbers = #tpu.dot_dimension_numbers<[1], [0], [0], [1], [0, 0, 1, 1], [], []>} : vector<128x4xbf16>, vector<4x256xbf16>, vector<128x256xf32> -> vector<128x256xf32>
    %106 = arith.addf %92, %105 : vector<128x256xf32>
    %c5_67 = arith.constant 5 : index
    %c0_68 = arith.constant 0 : index
    %c0_69 = arith.constant 0 : index
    %107 = vector.load %arg5[%c5_67, %c0_68, %c0_69] : memref<9x128x32xbf16, #tpu.memory_space<vmem>>, vector<1x128x32xbf16>
    %108 = vector.shape_cast %107 : vector<1x128x32xbf16> to vector<128x32xbf16>
    %cst_70 = arith.constant dense<0.000000e+00> : vector<128x256xf32>
    %109 = tpu.matmul %108, %102, %cst_70 {dimension_numbers = #tpu.dot_dimension_numbers<[1], [0], [0], [1], [0, 0, 1, 1], [], []>} : vector<128x32xbf16>, vector<32x256xbf16>, vector<128x256xf32> -> vector<128x256xf32>
    %110 = arith.addf %106, %109 : vector<128x256xf32>
    %c241_i32 = arith.constant 241 : i32
    %111 = tpu.dynamic_rotate %1 by %c241_i32 dim 1 : vector<4x256xf32>, i32 -> vector<4x256xf32>
    %c241_i32_71 = arith.constant 241 : i32
    %112 = tpu.dynamic_rotate %3 by %c241_i32_71 dim 1 : vector<32x256xf32>, i32 -> vector<32x256xf32>
    %c6 = arith.constant 6 : index
    %c0_72 = arith.constant 0 : index
    %c0_73 = arith.constant 0 : index
    %113 = vector.load %arg7[%c6, %c0_72, %c0_73] : memref<9x1x256xf32, #tpu.memory_space<vmem>>, vector<1x1x256xf32>
    %114 = vector.shape_cast %113 : vector<1x1x256xf32> to vector<1x256xf32>
    %115 = vector.broadcast %114 : vector<1x256xf32> to vector<4x256xf32>
    %116 = arith.mulf %111, %115 : vector<4x256xf32>
    %117 = arith.truncf %116 : vector<4x256xf32> to vector<4x256xbf16>
    %118 = vector.broadcast %114 : vector<1x256xf32> to vector<32x256xf32>
    %119 = arith.mulf %112, %118 : vector<32x256xf32>
    %120 = arith.truncf %119 : vector<32x256xf32> to vector<32x256xbf16>
    %c6_74 = arith.constant 6 : index
    %c0_75 = arith.constant 0 : index
    %c0_76 = arith.constant 0 : index
    %121 = vector.load %arg4[%c6_74, %c0_75, %c0_76] : memref<9x128x4xbf16, #tpu.memory_space<vmem>>, vector<1x128x4xbf16>
    %122 = vector.shape_cast %121 : vector<1x128x4xbf16> to vector<128x4xbf16>
    %cst_77 = arith.constant dense<0.000000e+00> : vector<128x256xf32>
    %123 = tpu.matmul %122, %117, %cst_77 {dimension_numbers = #tpu.dot_dimension_numbers<[1], [0], [0], [1], [0, 0, 1, 1], [], []>} : vector<128x4xbf16>, vector<4x256xbf16>, vector<128x256xf32> -> vector<128x256xf32>
    %124 = arith.addf %110, %123 : vector<128x256xf32>
    %c6_78 = arith.constant 6 : index
    %c0_79 = arith.constant 0 : index
    %c0_80 = arith.constant 0 : index
    %125 = vector.load %arg5[%c6_78, %c0_79, %c0_80] : memref<9x128x32xbf16, #tpu.memory_space<vmem>>, vector<1x128x32xbf16>
    %126 = vector.shape_cast %125 : vector<1x128x32xbf16> to vector<128x32xbf16>
    %cst_81 = arith.constant dense<0.000000e+00> : vector<128x256xf32>
    %127 = tpu.matmul %126, %120, %cst_81 {dimension_numbers = #tpu.dot_dimension_numbers<[1], [0], [0], [1], [0, 0, 1, 1], [], []>} : vector<128x32xbf16>, vector<32x256xbf16>, vector<128x256xf32> -> vector<128x256xf32>
    %128 = arith.addf %124, %127 : vector<128x256xf32>
    %c240_i32 = arith.constant 240 : i32
    %129 = tpu.dynamic_rotate %1 by %c240_i32 dim 1 : vector<4x256xf32>, i32 -> vector<4x256xf32>
    %c240_i32_82 = arith.constant 240 : i32
    %130 = tpu.dynamic_rotate %3 by %c240_i32_82 dim 1 : vector<32x256xf32>, i32 -> vector<32x256xf32>
    %c7 = arith.constant 7 : index
    %c0_83 = arith.constant 0 : index
    %c0_84 = arith.constant 0 : index
    %131 = vector.load %arg7[%c7, %c0_83, %c0_84] : memref<9x1x256xf32, #tpu.memory_space<vmem>>, vector<1x1x256xf32>
    %132 = vector.shape_cast %131 : vector<1x1x256xf32> to vector<1x256xf32>
    %133 = vector.broadcast %132 : vector<1x256xf32> to vector<4x256xf32>
    %134 = arith.mulf %129, %133 : vector<4x256xf32>
    %135 = arith.truncf %134 : vector<4x256xf32> to vector<4x256xbf16>
    %136 = vector.broadcast %132 : vector<1x256xf32> to vector<32x256xf32>
    %137 = arith.mulf %130, %136 : vector<32x256xf32>
    %138 = arith.truncf %137 : vector<32x256xf32> to vector<32x256xbf16>
    %c7_85 = arith.constant 7 : index
    %c0_86 = arith.constant 0 : index
    %c0_87 = arith.constant 0 : index
    %139 = vector.load %arg4[%c7_85, %c0_86, %c0_87] : memref<9x128x4xbf16, #tpu.memory_space<vmem>>, vector<1x128x4xbf16>
    %140 = vector.shape_cast %139 : vector<1x128x4xbf16> to vector<128x4xbf16>
    %cst_88 = arith.constant dense<0.000000e+00> : vector<128x256xf32>
    %141 = tpu.matmul %140, %135, %cst_88 {dimension_numbers = #tpu.dot_dimension_numbers<[1], [0], [0], [1], [0, 0, 1, 1], [], []>} : vector<128x4xbf16>, vector<4x256xbf16>, vector<128x256xf32> -> vector<128x256xf32>
    %142 = arith.addf %128, %141 : vector<128x256xf32>
    %c7_89 = arith.constant 7 : index
    %c0_90 = arith.constant 0 : index
    %c0_91 = arith.constant 0 : index
    %143 = vector.load %arg5[%c7_89, %c0_90, %c0_91] : memref<9x128x32xbf16, #tpu.memory_space<vmem>>, vector<1x128x32xbf16>
    %144 = vector.shape_cast %143 : vector<1x128x32xbf16> to vector<128x32xbf16>
    %cst_92 = arith.constant dense<0.000000e+00> : vector<128x256xf32>
    %145 = tpu.matmul %144, %138, %cst_92 {dimension_numbers = #tpu.dot_dimension_numbers<[1], [0], [0], [1], [0, 0, 1, 1], [], []>} : vector<128x32xbf16>, vector<32x256xbf16>, vector<128x256xf32> -> vector<128x256xf32>
    %146 = arith.addf %142, %145 : vector<128x256xf32>
    %c239_i32 = arith.constant 239 : i32
    %147 = tpu.dynamic_rotate %1 by %c239_i32 dim 1 : vector<4x256xf32>, i32 -> vector<4x256xf32>
    %c239_i32_93 = arith.constant 239 : i32
    %148 = tpu.dynamic_rotate %3 by %c239_i32_93 dim 1 : vector<32x256xf32>, i32 -> vector<32x256xf32>
    %c8 = arith.constant 8 : index
    %c0_94 = arith.constant 0 : index
    %c0_95 = arith.constant 0 : index
    %149 = vector.load %arg7[%c8, %c0_94, %c0_95] : memref<9x1x256xf32, #tpu.memory_space<vmem>>, vector<1x1x256xf32>
    %150 = vector.shape_cast %149 : vector<1x1x256xf32> to vector<1x256xf32>
    %151 = vector.broadcast %150 : vector<1x256xf32> to vector<4x256xf32>
    %152 = arith.mulf %147, %151 : vector<4x256xf32>
    %153 = arith.truncf %152 : vector<4x256xf32> to vector<4x256xbf16>
    %154 = vector.broadcast %150 : vector<1x256xf32> to vector<32x256xf32>
    %155 = arith.mulf %148, %154 : vector<32x256xf32>
    %156 = arith.truncf %155 : vector<32x256xf32> to vector<32x256xbf16>
    %c8_96 = arith.constant 8 : index
    %c0_97 = arith.constant 0 : index
    %c0_98 = arith.constant 0 : index
    %157 = vector.load %arg4[%c8_96, %c0_97, %c0_98] : memref<9x128x4xbf16, #tpu.memory_space<vmem>>, vector<1x128x4xbf16>
    %158 = vector.shape_cast %157 : vector<1x128x4xbf16> to vector<128x4xbf16>
    %cst_99 = arith.constant dense<0.000000e+00> : vector<128x256xf32>
    %159 = tpu.matmul %158, %153, %cst_99 {dimension_numbers = #tpu.dot_dimension_numbers<[1], [0], [0], [1], [0, 0, 1, 1], [], []>} : vector<128x4xbf16>, vector<4x256xbf16>, vector<128x256xf32> -> vector<128x256xf32>
    %160 = arith.addf %146, %159 : vector<128x256xf32>
    %c8_100 = arith.constant 8 : index
    %c0_101 = arith.constant 0 : index
    %c0_102 = arith.constant 0 : index
    %161 = vector.load %arg5[%c8_100, %c0_101, %c0_102] : memref<9x128x32xbf16, #tpu.memory_space<vmem>>, vector<1x128x32xbf16>
    %162 = vector.shape_cast %161 : vector<1x128x32xbf16> to vector<128x32xbf16>
    %cst_103 = arith.constant dense<0.000000e+00> : vector<128x256xf32>
    %163 = tpu.matmul %162, %156, %cst_103 {dimension_numbers = #tpu.dot_dimension_numbers<[1], [0], [0], [1], [0, 0, 1, 1], [], []>} : vector<128x32xbf16>, vector<32x256xbf16>, vector<128x256xf32> -> vector<128x256xf32>
    %164 = arith.addf %160, %163 : vector<128x256xf32>
    %c0_104 = arith.constant 0 : index
    %c0_105 = arith.constant 0 : index
    %165 = vector.load %arg6[%c0_104, %c0_105] : memref<128x1xf32, #tpu.memory_space<vmem>>, vector<128x1xf32>
    %166 = vector.broadcast %165 : vector<128x1xf32> to vector<128x256xf32>
    %167 = arith.addf %164, %166 : vector<128x256xf32>
    %168 = vector.extract_strided_slice %167 {offsets = [0, 0], sizes = [32, 256], strides = [1, 1]} : vector<128x256xf32> to vector<32x256xf32>
    %169 = arith.negf %168 : vector<32x256xf32>
    %170 = math.exp %169 : vector<32x256xf32>
    %cst_106 = arith.constant 1.000000e+00 : f32
    %171 = vector.broadcast %cst_106 : f32 to vector<32x256xf32>
    %172 = arith.addf %171, %170 : vector<32x256xf32>
    %173 = arith.divf %171, %172 : vector<32x256xf32>
    %174 = vector.extract_strided_slice %167 {offsets = [32, 0], sizes = [32, 256], strides = [1, 1]} : vector<128x256xf32> to vector<32x256xf32>
    %175 = arith.negf %174 : vector<32x256xf32>
    %176 = math.exp %175 : vector<32x256xf32>
    %cst_107 = arith.constant 1.000000e+00 : f32
    %177 = vector.broadcast %cst_107 : f32 to vector<32x256xf32>
    %178 = arith.addf %177, %176 : vector<32x256xf32>
    %179 = arith.divf %177, %178 : vector<32x256xf32>
    %180 = vector.extract_strided_slice %167 {offsets = [64, 0], sizes = [32, 256], strides = [1, 1]} : vector<128x256xf32> to vector<32x256xf32>
    %181 = arith.negf %180 : vector<32x256xf32>
    %182 = math.exp %181 : vector<32x256xf32>
    %cst_108 = arith.constant 1.000000e+00 : f32
    %183 = vector.broadcast %cst_108 : f32 to vector<32x256xf32>
    %184 = arith.addf %183, %182 : vector<32x256xf32>
    %185 = arith.divf %183, %184 : vector<32x256xf32>
    %186 = vector.extract_strided_slice %167 {offsets = [96, 0], sizes = [32, 256], strides = [1, 1]} : vector<128x256xf32> to vector<32x256xf32>
    %187 = math.tanh %186 : vector<32x256xf32>
    %c0_109 = arith.constant 0 : index
    %c0_110 = arith.constant 0 : index
    %c0_111 = arith.constant 0 : index
    %188 = vector.load %arg3[%c0_109, %c0_110, %c0_111] : memref<1x32x256xf32, #tpu.memory_space<vmem>>, vector<1x32x256xf32>
    %189 = vector.shape_cast %188 : vector<1x32x256xf32> to vector<32x256xf32>
    %190 = arith.mulf %179, %189 : vector<32x256xf32>
    %191 = arith.mulf %173, %187 : vector<32x256xf32>
    %192 = arith.addf %190, %191 : vector<32x256xf32>
    %193 = math.tanh %192 : vector<32x256xf32>
    %194 = arith.mulf %185, %193 : vector<32x256xf32>
    %c0_112 = arith.constant 0 : index
    %c0_113 = arith.constant 0 : index
    %c0_114 = arith.constant 0 : index
    %195 = vector.load %arg9[%c0_112, %c0_113, %c0_114] : memref<1x32x256xf32, #tpu.memory_space<vmem>>, vector<1x32x256xf32>
    %196 = vector.shape_cast %195 : vector<1x32x256xf32> to vector<32x256xf32>
    %197 = vector.shape_cast %192 : vector<32x256xf32> to vector<1x32x256xf32>
    tpu.vector_store %arg9[%c0_112, %c0_113, %c0_114], %197 {strides = array<i32>} : memref<1x32x256xf32, #tpu.memory_space<vmem>>, vector<1x32x256xf32>,
    %c0_115 = arith.constant 0 : index
    %c0_116 = arith.constant 0 : index
    %c0_117 = arith.constant 0 : index
    %198 = vector.load %arg8[%c0_115, %c0_116, %c0_117] : memref<1x32x256xf32, #tpu.memory_space<vmem>>, vector<1x32x256xf32>
    %199 = vector.shape_cast %198 : vector<1x32x256xf32> to vector<32x256xf32>
    %200 = vector.shape_cast %194 : vector<32x256xf32> to vector<1x32x256xf32>
    tpu.vector_store %arg8[%c0_115, %c0_116, %c0_117], %200 {strides = array<i32>} : memref<1x32x256xf32, #tpu.memory_space<vmem>>, vector<1x32x256xf32>,
    return
  }
  func.func @transform_0(%arg0: i32) -> (i32, i32, i32) {
    %c0_i32 = arith.constant 0 : i32
    %c0_i32_0 = arith.constant 0 : i32
    %c0_i32_1 = arith.constant 0 : i32
    return %arg0, %c0_i32, %c0_i32_0 : i32, i32, i32
  }
  func.func @transform_1(%arg0: i32) -> (i32, i32, i32) {
    %c0_i32 = arith.constant 0 : i32
    %c0_i32_0 = arith.constant 0 : i32
    %c0_i32_1 = arith.constant 0 : i32
    return %arg0, %c0_i32, %c0_i32_0 : i32, i32, i32
  }
  func.func @transform_2(%arg0: i32) -> (i32, i32, i32) {
    %c0_i32 = arith.constant 0 : i32
    %c0_i32_0 = arith.constant 0 : i32
    %c0_i32_1 = arith.constant 0 : i32
    return %arg0, %c0_i32, %c0_i32_0 : i32, i32, i32
  }
  func.func @transform_3(%arg0: i32) -> (i32, i32, i32) {
    %c0_i32 = arith.constant 0 : i32
    %c0_i32_0 = arith.constant 0 : i32
    %c0_i32_1 = arith.constant 0 : i32
    %c0_i32_2 = arith.constant 0 : i32
    return %c0_i32, %c0_i32_0, %c0_i32_1 : i32, i32, i32
  }
  func.func @transform_4(%arg0: i32) -> (i32, i32, i32) {
    %c0_i32 = arith.constant 0 : i32
    %c0_i32_0 = arith.constant 0 : i32
    %c0_i32_1 = arith.constant 0 : i32
    %c0_i32_2 = arith.constant 0 : i32
    return %c0_i32, %c0_i32_0, %c0_i32_1 : i32, i32, i32
  }
  func.func @transform_5(%arg0: i32) -> (i32, i32) {
    %c0_i32 = arith.constant 0 : i32
    %c0_i32_0 = arith.constant 0 : i32
    %c0_i32_1 = arith.constant 0 : i32
    return %c0_i32, %c0_i32_0 : i32, i32
  }
  func.func @transform_6(%arg0: i32) -> (i32, i32, i32) {
    %c0_i32 = arith.constant 0 : i32
    %c0_i32_0 = arith.constant 0 : i32
    %c0_i32_1 = arith.constant 0 : i32
    %c0_i32_2 = arith.constant 0 : i32
    return %c0_i32, %c0_i32_0, %c0_i32_1 : i32, i32, i32
  }
  func.func @transform_7(%arg0: i32) -> (i32, i32, i32) {
    %c0_i32 = arith.constant 0 : i32
    %c0_i32_0 = arith.constant 0 : i32
    %c0_i32_1 = arith.constant 0 : i32
    return %arg0, %c0_i32, %c0_i32_0 : i32, i32, i32
  }
  func.func @transform_8(%arg0: i32) -> (i32, i32, i32) {
    %c0_i32 = arith.constant 0 : i32
    %c0_i32_0 = arith.constant 0 : i32
    %c0_i32_1 = arith.constant 0 : i32
    return %arg0, %c0_i32, %c0_i32_0 : i32, i32, i32
  }
}

</mosaic_0001>

<llo_original>
// kernel: tpu_custom_call.1
$region0: #{tpu_custom_call.1}
  #allocation0 [shape = 'u32[]', space=smem, size = 0x4, offset = 0x4, fixed_abs, tag = 'smem constant byte address 0x4 - core index']
  #allocation1 [shape = 'u32[72,128]{1,0:T(1,128)}', space=vmem, size = 0x9000, scoped, tag = 'internal scratch']
  %s0 = inlined_call_operand.vmem [shape: f32[2,4,256], index: 0, kind: input, shape index: {}]
  %s1 = inlined_call_operand.vmem [shape: f32[2,32,256], index: 1, kind: input, shape index: {}]
  %s2 = inlined_call_operand.vmem [shape: f32[2,32,256], index: 2, kind: input, shape index: {}]
  %s3 = inlined_call_operand.vmem [shape: bf16[9,128,4], index: 3, kind: input, shape index: {}]
  %s4 = inlined_call_operand.vmem [shape: bf16[9,128,32], index: 4, kind: input, shape index: {}]
  %s5 = inlined_call_operand.vmem [shape: f32[128,1], index: 5, kind: input, shape index: {}]
  %s6 = inlined_call_operand.vmem [shape: f32[9,1,256], index: 6, kind: input, shape index: {}]
  %s7 = inlined_call_operand.hbm [shape: f32[2,32,256], index: 7, kind: output, shape index: {0}]
  %s8 = inlined_call_operand.hbm [shape: f32[2,32,256], index: 8, kind: output, shape index: {1}]
  %9 = xla_tuple %s7, %s8
  %s10 = sld [smem:[#allocation0]]
  $region69: #{tpu_custom_call.1} parent=0
    _
  %s12 = ssub.s32 1, %s10
  %s13 = scalar_select 0, %s12, %s10
  $region1: #{tpu_custom_call.1} parent=0
    #allocation2 [shape = 'u8[65536]{0}', space=vmem, size = 0x10000, scoped, tag = 'output window, operand 0']
    #allocation3 [shape = 's32[2]{0}', space=sflag, size = 0x8, scoped, tag = 'scoped memory for tpu_custom_call.1']
    #allocation4 [shape = 'u8[65536]{0}', space=vmem, size = 0x10000, scoped, tag = 'output window, operand 1']
    #allocation5 [shape = 's32[2]{0}', space=sflag, size = 0x8, scoped, tag = 'scoped memory for tpu_custom_call.1']
    %14 = vsyncpa [#allocation3], 0
    %s15 = scalar_lea.sflag [#allocation3], 1
    %16 = vsyncpa %s15, 0
    %17 = vsyncpa [#allocation5], 0
    %s18 = scalar_lea.sflag [#allocation5], 1
    %19 = vsyncpa %s18, 0
    loop: start=0, step=1, limit=4
    $region2: #{tpu_custom_call.1} parent=1 // loop_pre_header
      _
    $region3: #{tpu_custom_call.1} parent=1 // loop_header
      %s21 = sphi 0, %s25
      %p22 = scmp.ge.s32.totalorder %s21, 4
      %s31 = sphi 0, %s33
      %s34 = sphi 0, %s31
      %s35 = sphi 0, %s34
      %s51 = sphi 0, %s35
      %s57 = sphi 0, %s59
      %s60 = sphi 0, %s57
      %s61 = sphi 0, %s60
      %s77 = sphi 0, %s61
      %s83 = sphi 0, %s85
      %s86 = sphi 0, %s83
      %s87 = sphi 0, %s86
      %s103 = sphi 0, %s87
      %s107 = sphi 0, %s107
      %s109 = sphi 0, %s107
      %s110 = sphi 0, %s109
      %s124 = sphi 0, %s110
      %s128 = sphi 0, %s128
      %s130 = sphi 0, %s128
      %s131 = sphi 0, %s130
      %s145 = sphi 0, %s131
      %s149 = sphi 0, %s149
      %s151 = sphi 0, %s149
      %s152 = sphi 0, %s151
      %s166 = sphi 0, %s152
      %s170 = sphi 0, %s170
      %s172 = sphi 0, %s170
      %s173 = sphi 0, %s172
      %s187 = sphi 0, %s173
      %s193 = sphi 0, %s195
      %s196 = sphi 0, %s193
      %s197 = sphi 0, %s196
      %s213 = sphi 0, %s197
      %s219 = sphi 0, %s221
      %s222 = sphi 0, %s219
      %s223 = sphi 0, %s222
      %s239 = sphi 0, %s223
    $region4: #{tpu_custom_call.1} parent=1 // loop_header_branch
      %24 = sbr.rel (%p22) target = $region8
    $region5: #{tpu_custom_call.1} parent=1 // loop_body
      %s26 = ssub.s32 %s21, 1
      %s27 = ssub.s32 %s21, 2
      %s28 = sadd.s32 %s21, 1
      %s29 = ssub.s32 %s21, %s28
      %p30 = scmp.eq.s32.totalorder %s29, 0
      %s32 = sadd.s32 %s31, 1
      %s33 = scalar_select %p30, %s31, %s32
      %p36 = pneg %p30
      %p37 = scmp.eq.s32.totalorder %s21, 1
      %p38 = por %p36, %p37
      %p39 = scmp.ne.s32.totalorder %s31, %s34
      %p40 = scmp.eq.s32.totalorder %s21, 0
      %p41 = por %p39, %p40
      %p42 = scmp.ne.s32.totalorder %s31, %s34
      %p43 = scmp.eq.s32.totalorder %s26, 1
      %p44 = por %p42, %p43
      %p45 = scmp.ne.s32.totalorder %s34, %s35
      %p46 = scmp.eq.s32.totalorder %s26, 0
      %p47 = por %p45, %p46
      %p48 = scmp.ne.s32.totalorder %s34, %s35
      %p49 = scmp.eq.s32.totalorder %s27, 1
      %p50 = por %p48, %p49
      %p52 = scmp.ne.s32.totalorder %s35, %s51
      %p53 = scmp.eq.s32.totalorder %s27, 0
      %p54 = por %p52, %p53
      %s55 = ssub.s32 %s21, %s28
      %p56 = scmp.eq.s32.totalorder %s55, 0
      %s58 = sadd.s32 %s57, 1
      %s59 = scalar_select %p56, %s57, %s58
      %p62 = pneg %p56
      %p63 = scmp.eq.s32.totalorder %s21, 1
      %p64 = por %p62, %p63
      %p65 = scmp.ne.s32.totalorder %s57, %s60
      %p66 = scmp.eq.s32.totalorder %s21, 0
      %p67 = por %p65, %p66
      %p68 = scmp.ne.s32.totalorder %s57, %s60
      %p69 = scmp.eq.s32.totalorder %s26, 1
      %p70 = por %p68, %p69
      %p71 = scmp.ne.s32.totalorder %s60, %s61
      %p72 = scmp.eq.s32.totalorder %s26, 0
      %p73 = por %p71, %p72
      %p74 = scmp.ne.s32.totalorder %s60, %s61
      %p75 = scmp.eq.s32.totalorder %s27, 1
      %p76 = por %p74, %p75
      %p78 = scmp.ne.s32.totalorder %s61, %s77
      %p79 = scmp.eq.s32.totalorder %s27, 0
      %p80 = por %p78, %p79
      %s81 = ssub.s32 %s21, %s28
      %p82 = scmp.eq.s32.totalorder %s81, 0
      %s84 = sadd.s32 %s83, 1
      %s85 = scalar_select %p82, %s83, %s84
      %p88 = pneg %p82
      %p89 = scmp.eq.s32.totalorder %s21, 1
      %p90 = por %p88, %p89
      %p91 = scmp.ne.s32.totalorder %s83, %s86
      %p92 = scmp.eq.s32.totalorder %s21, 0
      %p93 = por %p91, %p92
      %p94 = scmp.ne.s32.totalorder %s83, %s86
      %p95 = scmp.eq.s32.totalorder %s26, 1
      %p96 = por %p94, %p95
      %p97 = scmp.ne.s32.totalorder %s86, %s87
      %p98 = scmp.eq.s32.totalorder %s26, 0
      %p99 = por %p97, %p98
      %p100 = scmp.ne.s32.totalorder %s86, %s87
      %p101 = scmp.eq.s32.totalorder %s27, 1
      %p102 = por %p100, %p101
      %p104 = scmp.ne.s32.totalorder %s87, %s103
      %p105 = scmp.eq.s32.totalorder %s27, 0
      %p106 = por %p104, %p105
      %s108 = sadd.s32 %s107, 1
      %p111 = scmp.eq.s32.totalorder %s21, 1
      %p112 = scmp.ne.s32.totalorder %s107, %s109
      %p113 = scmp.eq.s32.totalorder %s21, 0
      %p114 = por %p112, %p113
      %p115 = scmp.ne.s32.totalorder %s107, %s109
      %p116 = scmp.eq.s32.totalorder %s26, 1
      %p117 = por %p115, %p116
      %p118 = scmp.ne.s32.totalorder %s109, %s110
      %p119 = scmp.eq.s32.totalorder %s26, 0
      %p120 = por %p118, %p119
      %p121 = scmp.ne.s32.totalorder %s109, %s110
      %p122 = scmp.eq.s32.totalorder %s27, 1
      %p123 = por %p121, %p122
      %p125 = scmp.ne.s32.totalorder %s110, %s124
      %p126 = scmp.eq.s32.totalorder %s27, 0
      %p127 = por %p125, %p126
      %s129 = sadd.s32 %s128, 1
      %p132 = scmp.eq.s32.totalorder %s21, 1
      %p133 = scmp.ne.s32.totalorder %s128, %s130
      %p134 = scmp.eq.s32.totalorder %s21, 0
      %p135 = por %p133, %p134
      %p136 = scmp.ne.s32.totalorder %s128, %s130
      %p137 = scmp.eq.s32.totalorder %s26, 1
      %p138 = por %p136, %p137
      %p139 = scmp.ne.s32.totalorder %s130, %s131
      %p140 = scmp.eq.s32.totalorder %s26, 0
      %p141 = por %p139, %p140
      %p142 = scmp.ne.s32.totalorder %s130, %s131
      %p143 = scmp.eq.s32.totalorder %s27, 1
      %p144 = por %p142, %p143
      %p146 = scmp.ne.s32.totalorder %s131, %s145
      %p147 = scmp.eq.s32.totalorder %s27, 0
      %p148 = por %p146, %p147
      %s150 = sadd.s32 %s149, 1
      %p153 = scmp.eq.s32.totalorder %s21, 1
      %p154 = scmp.ne.s32.totalorder %s149, %s151
      %p155 = scmp.eq.s32.totalorder %s21, 0
      %p156 = por %p154, %p155
      %p157 = scmp.ne.s32.totalorder %s149, %s151
      %p158 = scmp.eq.s32.totalorder %s26, 1
      %p159 = por %p157, %p158
      %p160 = scmp.ne.s32.totalorder %s151, %s152
      %p161 = scmp.eq.s32.totalorder %s26, 0
      %p162 = por %p160, %p161
      %p163 = scmp.ne.s32.totalorder %s151, %s152
      %p164 = scmp.eq.s32.totalorder %s27, 1
      %p165 = por %p163, %p164
      %p167 = scmp.ne.s32.totalorder %s152, %s166
      %p168 = scmp.eq.s32.totalorder %s27, 0
      %p169 = por %p167, %p168
      %s171 = sadd.s32 %s170, 1
      %p174 = scmp.eq.s32.totalorder %s21, 1
      %p175 = scmp.ne.s32.totalorder %s170, %s172
      %p176 = scmp.eq.s32.totalorder %s21, 0
      %p177 = por %p175, %p176
      %p178 = scmp.ne.s32.totalorder %s170, %s172
      %p179 = scmp.eq.s32.totalorder %s26, 1
      %p180 = por %p178, %p179
      %p181 = scmp.ne.s32.totalorder %s172, %s173
      %p182 = scmp.eq.s32.totalorder %s26, 0
      %p183 = por %p181, %p182
      %p184 = scmp.ne.s32.totalorder %s172, %s173
      %p185 = scmp.eq.s32.totalorder %s27, 1
      %p186 = por %p184, %p185
      %p188 = scmp.ne.s32.totalorder %s173, %s187
      %p189 = scmp.eq.s32.totalorder %s27, 0
      %p190 = por %p188, %p189
      %s191 = ssub.s32 %s21, %s28
      %p192 = scmp.eq.s32.totalorder %s191, 0
      %s194 = sadd.s32 %s193, 1
      %s195 = scalar_select %p192, %s193, %s194
      %p198 = pneg %p192
      %p199 = scmp.eq.s32.totalorder %s21, 1
      %p200 = por %p198, %p199
      %p201 = scmp.ne.s32.totalorder %s193, %s196
      %p202 = scmp.eq.s32.totalorder %s21, 0
      %p203 = por %p201, %p202
      %p204 = scmp.ne.s32.totalorder %s193, %s196
      %p205 = scmp.eq.s32.totalorder %s26, 1
      %p206 = por %p204, %p205
      %p207 = scmp.ne.s32.totalorder %s196, %s197
      %p208 = scmp.eq.s32.totalorder %s26, 0
      %p209 = por %p207, %p208
      %p210 = scmp.ne.s32.totalorder %s196, %s197
      %p211 = scmp.eq.s32.totalorder %s27, 1
      %p212 = por %p210, %p211
      %p214 = scmp.ne.s32.totalorder %s197, %s213
      %p215 = scmp.eq.s32.totalorder %s27, 0
      %p216 = por %p214, %p215
      %s217 = ssub.s32 %s21, %s28
      %p218 = scmp.eq.s32.totalorder %s217, 0
      %s220 = sadd.s32 %s219, 1
      %s221 = scalar_select %p218, %s219, %s220
      %p224 = pneg %p218
      %p225 = scmp.eq.s32.totalorder %s21, 1
      %p226 = por %p224, %p225
      %p227 = scmp.ne.s32.totalorder %s219, %s222
      %p228 = scmp.eq.s32.totalorder %s21, 0
      %p229 = por %p227, %p228
      %p230 = scmp.ne.s32.totalorder %s219, %s222
      %p231 = scmp.eq.s32.totalorder %s26, 1
      %p232 = por %p230, %p231
      %p233 = scmp.ne.s32.totalorder %s222, %s223
      %p234 = scmp.eq.s32.totalorder %s26, 0
      %p235 = por %p233, %p234
      %p236 = scmp.ne.s32.totalorder %s222, %s223
      %p237 = scmp.eq.s32.totalorder %s27, 1
      %p238 = por %p236, %p237
      %p240 = scmp.ne.s32.totalorder %s223, %s239
      %p241 = scmp.eq.s32.totalorder %s27, 0
      %p242 = por %p240, %p241
      %p243 = scmp.le.s32.totalorder 1, %s21
      %p244 = scmp.lt.s32.totalorder %s21, 3
      %p245 = pnand %p243, %p244
      %p246 = pneg %p245
      // Predicated region
      $region9: #{tpu_custom_call.1} parent=5 // pred_check
        _
      $region10: #{tpu_custom_call.1} parent=5 // pred_check_branch
        %248 = sbr.rel (%p245) target = $region12
      $region11: #{tpu_custom_call.1} parent=5 // pred_region
        %s249 = ssub.s32 %s21, 1
        // Predicated region
        $region13: #{tpu_custom_call.1} parent=11 // pred_check
          %p250 = pneg %p120
        $region14: #{tpu_custom_call.1} parent=11 // pred_check_branch
          %252 = sbr.rel (%p250) target = $region16
        $region15: #{tpu_custom_call.1} parent=11 // pred_region
          _
        $region16: #{tpu_custom_call.1} parent=11 // pred_fallthru
          _
        // Predicated region
        $region17: #{tpu_custom_call.1} parent=11 // pred_check
          %p253 = pneg %p141
        $region18: #{tpu_custom_call.1} parent=11 // pred_check_branch
          %255 = sbr.rel (%p253) target = $region20
        $region19: #{tpu_custom_call.1} parent=11 // pred_region
          _
        $region20: #{tpu_custom_call.1} parent=11 // pred_fallthru
          _
        // Predicated region
        $region21: #{tpu_custom_call.1} parent=11 // pred_check
          %p256 = pneg %p162
        $region22: #{tpu_custom_call.1} parent=11 // pred_check_branch
          %258 = sbr.rel (%p256) target = $region24
        $region23: #{tpu_custom_call.1} parent=11 // pred_region
          _
        $region24: #{tpu_custom_call.1} parent=11 // pred_fallthru
          _
        // Predicated region
        $region25: #{tpu_custom_call.1} parent=11 // pred_check
          %p259 = pneg %p183
        $region26: #{tpu_custom_call.1} parent=11 // pred_check_branch
          %261 = sbr.rel (%p259) target = $region28
        $region27: #{tpu_custom_call.1} parent=11 // pred_region
          _
        $region28: #{tpu_custom_call.1} parent=11 // pred_fallthru
          _
      $region12: #{tpu_custom_call.1} parent=5 // pred_fallthru
        _
      %p262 = scmp.lt.s32.totalorder %s21, 2
      // Predicated region
      $region29: #{tpu_custom_call.1} parent=5 // pred_check
        %p263 = pneg %p262
      $region30: #{tpu_custom_call.1} parent=5 // pred_check_branch
        %265 = sbr.rel (%p263) target = $region32
      $region31: #{tpu_custom_call.1} parent=5 // pred_region
        // Predicated region
        $region33: #{tpu_custom_call.1} parent=31 // pred_check
          %p266 = pneg %p41
        $region34: #{tpu_custom_call.1} parent=31 // pred_check_branch
          %268 = sbr.rel (%p266) target = $region36
        $region35: #{tpu_custom_call.1} parent=31 // pred_region
          %p269 = scmp.lt.s32.totalorder %s21, 1
          %s270 = scalar_select %p269, %s21, 1
          %s271 = smul.addr %s270, 2
          %s272 = smul.addr %s271, 4
          %s273 = scalar_lea.vmem %s0, %s272
        $region36: #{tpu_custom_call.1} parent=31 // pred_fallthru
          _
        // Predicated region
        $region37: #{tpu_custom_call.1} parent=31 // pred_check
          %p274 = pneg %p67
        $region38: #{tpu_custom_call.1} parent=31 // pred_check_branch
          %276 = sbr.rel (%p274) target = $region40
        $region39: #{tpu_custom_call.1} parent=31 // pred_region
          %p277 = scmp.lt.s32.totalorder %s21, 1
          %s278 = scalar_select %p277, %s21, 1
          %s279 = smul.addr %s278, 8
          %s280 = smul.addr %s279, 8
          %s281 = scalar_lea.vmem %s1, %s280
        $region40: #{tpu_custom_call.1} parent=31 // pred_fallthru
          _
        // Predicated region
        $region41: #{tpu_custom_call.1} parent=31 // pred_check
          %p282 = pneg %p93
        $region42: #{tpu_custom_call.1} parent=31 // pred_check_branch
          %284 = sbr.rel (%p282) target = $region44
        $region43: #{tpu_custom_call.1} parent=31 // pred_region
          %p285 = scmp.lt.s32.totalorder %s21, 1
          %s286 = scalar_select %p285, %s21, 1
          %s287 = smul.addr %s286, 8
          %s288 = smul.addr %s287, 8
          %s289 = scalar_lea.vmem %s2, %s288
        $region44: #{tpu_custom_call.1} parent=31 // pred_fallthru
          _
      $region32: #{tpu_custom_call.1} parent=5 // pred_fallthru
        _
      %p290 = scmp.le.s32.totalorder 1, %s21
      %p291 = scmp.lt.s32.totalorder %s21, 3
      %p292 = pnand %p290, %p291
      %p293 = pneg %p292
      // Predicated region
      $region45: #{tpu_custom_call.1} parent=5 // pred_check
        _
      $region46: #{tpu_custom_call.1} parent=5 // pred_check_branch
        %295 = sbr.rel (%p292) target = $region48
      $region47: #{tpu_custom_call.1} parent=5 // pred_region
        %s296 = ssub.s32 %s21, 1
        %p297 = scmp.lt.s32.totalorder %s26, 1
        %s298 = scalar_select %p297, %s26, 1
        %s299 = smul.addr %s298, 2
        %s300 = smul.addr %s299, 4
        %s301 = scalar_lea.vmem %s0, %s300
        %p302 = pneg %p47
        %p303 = pneg %p44
        %p304 = scmp.lt.s32.totalorder %s26, 1
        %s305 = scalar_select %p304, %s26, 1
        %s306 = smul.addr %s305, 8
        %s307 = smul.addr %s306, 8
        %s308 = scalar_lea.vmem %s1, %s307
        %p309 = pneg %p73
        %p310 = pneg %p70
        %p311 = scmp.lt.s32.totalorder %s26, 1
        %s312 = scalar_select %p311, %s26, 1
        %s313 = smul.addr %s312, 8
        %s314 = smul.addr %s313, 8
        %s315 = scalar_lea.vmem %s2, %s314
        %p316 = pneg %p99
        %p317 = pneg %p96
        %p318 = pneg %p120
        %p319 = pneg %p117
        %p320 = pneg %p141
        %p321 = pneg %p138
        %p322 = pneg %p162
        %p323 = pneg %p159
        %p324 = pneg %p183
        %p325 = pneg %p180
        %p326 = pneg %p209
        %p327 = pneg %p206
        %s328 = sand.u32 %s196, 1
        %s329 = scalar_lea.sflag [#allocation3], %s328
        %s330 = sand.u32 %s196, 1
        %s331 = smul.addr %s330, 64
        %s332 = scalar_lea.vmem [#allocation2], %s331
        %p333 = pneg %p235
        %p334 = pneg %p232
        %s335 = sand.u32 %s222, 1
        %s336 = scalar_lea.sflag [#allocation5], %s335
        %s337 = sand.u32 %s222, 1
        %s338 = smul.addr %s337, 64
        %s339 = scalar_lea.vmem [#allocation4], %s338
        %p340 = scmp.lt.s32.totalorder %s26, 1
        %s341 = scalar_select %p340, %s26, 1
        %s342 = smul.addr %s341, 2
        %s343 = smul.addr %s342, 4
        %s344 = scalar_lea.vmem %s0, %s343
        %p345 = scmp.lt.s32.totalorder %s26, 1
        %s346 = scalar_select %p345, %s26, 1
        %s347 = smul.addr %s346, 8
        %s348 = smul.addr %s347, 8
        %s349 = scalar_lea.vmem %s1, %s348
        %p350 = scmp.lt.s32.totalorder %s26, 1
        %s351 = scalar_select %p350, %s26, 1
        %s352 = smul.addr %s351, 8
        %s353 = smul.addr %s352, 8
        %s354 = scalar_lea.vmem %s2, %s353
        %v356 = vld [vmem:[%s344] sm:$0xff]
        %v357 = vld [vmem:[%s349] sm:$0xff]
        %v358 = vld [vmem:[%s349 + $0x8] sm:$0xff]
        %v359 = vld [vmem:[%s349 + $0x10] sm:$0xff]
        %v360 = vld [vmem:[%s349 + $0x18] sm:$0xff]
        %v361 = vld [vmem:[%s349 + $0x20] sm:$0xff]
        %v362 = vld [vmem:[%s349 + $0x28] sm:$0xff]
        %v363 = vld [vmem:[%s349 + $0x30] sm:$0xff]
        %v364 = vld [vmem:[%s349 + $0x38] sm:$0xff]
        %366 = vst [vmem:[#allocation1] ss:$2 sm:$0xff] %v356
        %v367 = vld.sshfl [vmem:[#allocation1] sm:$0xff pattern:$0x75316420]
        %v368 = vld.sshfl [vmem:[#allocation1 + $0x8] sm:$0xff pattern:$0x75316420]
        %371 = vrot.lane.b32.xlu0 %v367, 17
        %v372 = vpop.permute.xlu0 %371
        %373 = vrot.lane.b32.xlu0 %v368, 17
        %v374 = vpop.permute.xlu0 %373
        %v375 = vlaneseq
        %v376 = vand.u32 %v375, 127
        %vm377 = vcmp.lt.s32.totalorder %v376, 17
        %v378 = vsel %vm377, %v372, %v374
        %v379 = vsel %vm377, %v374, %v372
        %380 = vrot.lane.b32.xlu0 %v357, 17
        %v381 = vpop.permute.xlu0 %380
        %382 = vrot.lane.b32.xlu0 %v359, 17
        %v383 = vpop.permute.xlu0 %382
        %384 = vrot.lane.b32.xlu0 %v361, 17
        %v385 = vpop.permute.xlu0 %384
        %386 = vrot.lane.b32.xlu0 %v363, 17
        %v387 = vpop.permute.xlu0 %386
        %388 = vrot.lane.b32.xlu0 %v358, 17
        %v389 = vpop.permute.xlu0 %388
        %390 = vrot.lane.b32.xlu0 %v360, 17
        %v391 = vpop.permute.xlu0 %390
        %392 = vrot.lane.b32.xlu0 %v362, 17
        %v393 = vpop.permute.xlu0 %392
        %394 = vrot.lane.b32.xlu0 %v364, 17
        %v395 = vpop.permute.xlu0 %394
        %v396 = vsel %vm377, %v381, %v389
        %v397 = vsel %vm377, %v383, %v391
        %v398 = vsel %vm377, %v385, %v393
        %v399 = vsel %vm377, %v387, %v395
        %v400 = vsel %vm377, %v389, %v381
        %v401 = vsel %vm377, %v391, %v383
        %v402 = vsel %vm377, %v393, %v385
        %v403 = vsel %vm377, %v395, %v387
        %v404 = vld [vmem:[%s6] sm:$0x3]
        %v406 = vperm.slane %v404, 0
        %v407 = vperm.slane %v404, 1
        %v410 = vmul.f32 %v379, %v406
        %v411 = vmul.f32 %v378, %v407
        %v412 = vpack.c.bf16 %v410, %v410
        %v413 = vpack.c.bf16 %v411, %v411
        %v414 = vmul.f32 %v400, %v406
        %v415 = vmul.f32 %v396, %v407
        %v416 = vmul.f32 %v401, %v406
        %v417 = vmul.f32 %v397, %v407
        %v418 = vmul.f32 %v402, %v406
        %v419 = vmul.f32 %v398, %v407
        %v420 = vmul.f32 %v403, %v406
        %v421 = vmul.f32 %v399, %v407
        %v422 = vpack.c.bf16 %v416, %v414
        %v423 = vpack.c.bf16 %v417, %v415
        %v424 = vpack.c.bf16 %v420, %v418
        %v425 = vpack.c.bf16 %v421, %v419
        %v426 = vld [vmem:[%s3] sm:$0xf]
        %v427 = vld [vmem:[%s3 + $0x4] sm:$0xf]
        %v428 = vld [vmem:[%s3 + $0x8] sm:$0xf]
        %v429 = vld [vmem:[%s3 + $0xc] sm:$0xf]
        %v430 = vld [vmem:[%s3 + $0x10] sm:$0xf]
        %v431 = vld [vmem:[%s3 + $0x14] sm:$0xf]
        %v432 = vld [vmem:[%s3 + $0x18] sm:$0xf]
        %v433 = vld [vmem:[%s3 + $0x1c] sm:$0xf]
        %v434 = vld [vmem:[%s3 + $0x20] sm:$0xf]
        %v435 = vld [vmem:[%s3 + $0x24] sm:$0xf]
        %v436 = vld [vmem:[%s3 + $0x28] sm:$0xf]
        %v437 = vld [vmem:[%s3 + $0x2c] sm:$0xf]
        %v438 = vld [vmem:[%s3 + $0x30] sm:$0xf]
        %v439 = vld [vmem:[%s3 + $0x34] sm:$0xf]
        %v440 = vld [vmem:[%s3 + $0x38] sm:$0xf]
        %v441 = vld [vmem:[%s3 + $0x3c] sm:$0xf]
        %v442 = vld [vmem:[%s4] sm:$0xf]
        %v443 = vld [vmem:[%s4 + $0x4] sm:$0xf]
        %v444 = vld [vmem:[%s4 + $0x8] sm:$0xf]
        %v445 = vld [vmem:[%s4 + $0xc] sm:$0xf]
        %v446 = vld [vmem:[%s4 + $0x10] sm:$0xf]
        %v447 = vld [vmem:[%s4 + $0x14] sm:$0xf]
        %v448 = vld [vmem:[%s4 + $0x18] sm:$0xf]
        %v449 = vld [vmem:[%s4 + $0x1c] sm:$0xf]
        %v450 = vld [vmem:[%s4 + $0x20] sm:$0xf]
        %v451 = vld [vmem:[%s4 + $0x24] sm:$0xf]
        %v452 = vld [vmem:[%s4 + $0x28] sm:$0xf]
        %v453 = vld [vmem:[%s4 + $0x2c] sm:$0xf]
        %v454 = vld [vmem:[%s4 + $0x30] sm:$0xf]
        %v455 = vld [vmem:[%s4 + $0x34] sm:$0xf]
        %v456 = vld [vmem:[%s4 + $0x38] sm:$0xf]
        %v457 = vld [vmem:[%s4 + $0x3c] sm:$0xf]
        %v474 = vunpack.c.l.b16 %v442
        %v475 = vunpack.c.l.b16 %v443
        %v476 = vunpack.c.l.b16 %v444
        %v477 = vunpack.c.l.b16 %v445
        %v478 = vunpack.c.l.b16 %v446
        %v479 = vunpack.c.l.b16 %v447
        %v480 = vunpack.c.l.b16 %v448
        %v481 = vunpack.c.l.b16 %v449
        %v482 = vunpack.c.l.b16 %v450
        %v483 = vunpack.c.l.b16 %v451
        %v484 = vunpack.c.l.b16 %v452
        %v485 = vunpack.c.l.b16 %v453
        %v486 = vunpack.c.l.b16 %v454
        %v487 = vunpack.c.l.b16 %v455
        %v488 = vunpack.c.l.b16 %v456
        %v489 = vunpack.c.l.b16 %v457
        %v490 = vpack.c.b16 %v475, %v474
        %v491 = vpack.c.b16 %v477, %v476
        %v492 = vpack.c.b16 %v479, %v478
        %v493 = vpack.c.b16 %v481, %v480
        %v494 = vpack.c.b16 %v483, %v482
        %v495 = vpack.c.b16 %v485, %v484
        %v496 = vpack.c.b16 %v487, %v486
        %v497 = vpack.c.b16 %v489, %v488
        %vm498 = vcmask 261120
        %v500 = vsel %vm498, %v490, 0
        %v503 = vsel %vm498, %v491, 0
        %v506 = vsel %vm498, %v492, 0
        %v509 = vsel %vm498, %v493, 0
        %v512 = vsel %vm498, %v494, 0
        %v515 = vsel %vm498, %v495, 0
        %v518 = vsel %vm498, %v496, 0
        %v521 = vsel %vm498, %v497, 0
        %523 = vmatpush.bf16.msra.mxu0 0
        %524 = vmatpush.bf16.msra.mxu0 0
        %525 = vmatpush.bf16.msra.mxu0 0
        %526 = vmatpush.bf16.msra.mxu0 0
        %527 = vmatpush.bf16.msra.mxu0 0
        %528 = vmatpush.bf16.msra.mxu0 0
        %529 = vmatpush.bf16.msra.mxu0 %v424
        %530 = vmatpush.bf16.msra.mxu0 %v422
        %531 = vmatmul.bf16.gmra.mxu0 %v500
        %v532 = vpop.f32.mrf.mxu0
        %v533 = vadd.f32 0.0, %v532
        %v534 = vpop.f32.mrf.mxu0
        %v535 = vadd.f32 0.0, %v534
        %536 = vmatmul.bf16.gmra.mxu0 %v503
        %v537 = vpop.f32.mrf.mxu0
        %v538 = vadd.f32 0.0, %v537
        %v539 = vpop.f32.mrf.mxu0
        %v540 = vadd.f32 0.0, %v539
        %541 = vmatmul.bf16.gmra.mxu0 %v506
        %v542 = vpop.f32.mrf.mxu0
        %v543 = vadd.f32 0.0, %v542
        %v544 = vpop.f32.mrf.mxu0
        %v545 = vadd.f32 0.0, %v544
        %546 = vmatmul.bf16.gmra.mxu0 %v509
        %v547 = vpop.f32.mrf.mxu0
        %v548 = vadd.f32 0.0, %v547
        %v549 = vpop.f32.mrf.mxu0
        %v550 = vadd.f32 0.0, %v549
        %551 = vmatmul.bf16.gmra.mxu0 %v512
        %v552 = vpop.f32.mrf.mxu0
        %v553 = vadd.f32 0.0, %v552
        %v554 = vpop.f32.mrf.mxu0
        %v555 = vadd.f32 0.0, %v554
        %556 = vmatmul.bf16.gmra.mxu0 %v515
        %v557 = vpop.f32.mrf.mxu0
        %v558 = vadd.f32 0.0, %v557
        %v559 = vpop.f32.mrf.mxu0
        %v560 = vadd.f32 0.0, %v559
        %561 = vmatmul.bf16.gmra.mxu0 %v518
        %v562 = vpop.f32.mrf.mxu0
        %v563 = vadd.f32 0.0, %v562
        %v564 = vpop.f32.mrf.mxu0
        %v565 = vadd.f32 0.0, %v564
        %566 = vmatmul.bf16.gmra.mxu0 %v521
        %v567 = vpop.f32.mrf.mxu0
        %v568 = vadd.f32 0.0, %v567
        %v569 = vpop.f32.mrf.mxu0
        %v570 = vadd.f32 0.0, %v569
        %571 = vdwg.mxu0
        %572 = vmatpush.bf16.msra.mxu0 0
        %573 = vmatpush.bf16.msra.mxu0 0
        %574 = vmatpush.bf16.msra.mxu0 0
        %575 = vmatpush.bf16.msra.mxu0 0
        %576 = vmatpush.bf16.msra.mxu0 0
        %577 = vmatpush.bf16.msra.mxu0 0
        %578 = vmatpush.bf16.msra.mxu0 %v425
        %579 = vmatpush.bf16.msra.mxu0 %v423
        %580 = vmatmul.bf16.gmra.mxu0 %v500
        %v581 = vpop.f32.mrf.mxu0
        %v582 = vadd.f32 0.0, %v581
        %v583 = vpop.f32.mrf.mxu0
        %v584 = vadd.f32 0.0, %v583
        %585 = vmatmul.bf16.gmra.mxu0 %v503
        %v586 = vpop.f32.mrf.mxu0
        %v587 = vadd.f32 0.0, %v586
        %v588 = vpop.f32.mrf.mxu0
        %v589 = vadd.f32 0.0, %v588
        %590 = vmatmul.bf16.gmra.mxu0 %v506
        %v591 = vpop.f32.mrf.mxu0
        %v592 = vadd.f32 0.0, %v591
        %v593 = vpop.f32.mrf.mxu0
        %v594 = vadd.f32 0.0, %v593
        %595 = vmatmul.bf16.gmra.mxu0 %v509
        %v596 = vpop.f32.mrf.mxu0
        %v597 = vadd.f32 0.0, %v596
        %v598 = vpop.f32.mrf.mxu0
        %v599 = vadd.f32 0.0, %v598
        %600 = vmatmul.bf16.gmra.mxu0 %v512
        %v601 = vpop.f32.mrf.mxu0
        %v602 = vadd.f32 0.0, %v601
        %v603 = vpop.f32.mrf.mxu0
        %v604 = vadd.f32 0.0, %v603
        %605 = vmatmul.bf16.gmra.mxu0 %v515
        %v606 = vpop.f32.mrf.mxu0
        %v607 = vadd.f32 0.0, %v606
        %v608 = vpop.f32.mrf.mxu0
        %v609 = vadd.f32 0.0, %v608
        %610 = vmatmul.bf16.gmra.mxu0 %v518
        %v611 = vpop.f32.mrf.mxu0
        %v612 = vadd.f32 0.0, %v611
        %v613 = vpop.f32.mrf.mxu0
        %v614 = vadd.f32 0.0, %v613
        %615 = vmatmul.bf16.gmra.mxu0 %v521
        %v616 = vpop.f32.mrf.mxu0
        %v617 = vadd.f32 0.0, %v616
        %v618 = vpop.f32.mrf.mxu0
        %v619 = vadd.f32 0.0, %v618
        %620 = vdwg.mxu0
        %v637 = vunpack.c.l.b16 %v426
        %v638 = vunpack.c.l.b16 %v427
        %v639 = vunpack.c.l.b16 %v428
        %v640 = vunpack.c.l.b16 %v429
        %v641 = vunpack.c.l.b16 %v430
        %v642 = vunpack.c.l.b16 %v431
        %v643 = vunpack.c.l.b16 %v432
        %v644 = vunpack.c.l.b16 %v433
        %v645 = vunpack.c.l.b16 %v434
        %v646 = vunpack.c.l.b16 %v435
        %v647 = vunpack.c.l.b16 %v436
        %v648 = vunpack.c.l.b16 %v437
        %v649 = vunpack.c.l.b16 %v438
        %v650 = vunpack.c.l.b16 %v439
        %v651 = vunpack.c.l.b16 %v440
        %v652 = vunpack.c.l.b16 %v441
        %v653 = vpack.c.b16 %v638, %v637
        %v654 = vpack.c.b16 %v640, %v639
        %v655 = vpack.c.b16 %v642, %v641
        %v656 = vpack.c.b16 %v644, %v643
        %v657 = vpack.c.b16 %v646, %v645
        %v658 = vpack.c.b16 %v648, %v647
        %v659 = vpack.c.b16 %v650, %v649
        %v660 = vpack.c.b16 %v652, %v651
        %vm661 = vcmask 31744
        %v663 = vsel %vm661, %v653, 0
        %v666 = vsel %vm661, %v654, 0
        %v669 = vsel %vm661, %v655, 0
        %v672 = vsel %vm661, %v656, 0
        %v675 = vsel %vm661, %v657, 0
        %v678 = vsel %vm661, %v658, 0
        %v681 = vsel %vm661, %v659, 0
        %v684 = vsel %vm661, %v660, 0
        %vm686 = vcmask 1041408
        %v688 = vsel %vm686, %v412, 0
        %v691 = vsel %vm686, %v413, 0
        %693 = vmatpush.bf16.msra.mxu0 0
        %694 = vmatpush.bf16.msra.mxu0 0
        %695 = vmatpush.bf16.msra.mxu0 0
        %696 = vmatpush.bf16.msra.mxu0 0
        %697 = vmatpush.bf16.msra.mxu0 0
        %698 = vmatpush.bf16.msra.mxu0 0
        %699 = vmatpush.bf16.msra.mxu0 0
        %700 = vmatpush.bf16.msra.mxu0 %v688
        %701 = vmatmul.bf16.gmra.mxu0 %v663
        %v702 = vpop.f32.mrf.mxu0
        %v703 = vadd.f32 %v533, %v702
        %v704 = vpop.f32.mrf.mxu0
        %v705 = vadd.f32 %v535, %v704
        %706 = vmatmul.bf16.gmra.mxu0 %v666
        %v707 = vpop.f32.mrf.mxu0
        %v708 = vadd.f32 %v538, %v707
        %v709 = vpop.f32.mrf.mxu0
        %v710 = vadd.f32 %v540, %v709
        %711 = vmatmul.bf16.gmra.mxu0 %v669
        %v712 = vpop.f32.mrf.mxu0
        %v713 = vadd.f32 %v543, %v712
        %v714 = vpop.f32.mrf.mxu0
        %v715 = vadd.f32 %v545, %v714
        %716 = vmatmul.bf16.gmra.mxu0 %v672
        %v717 = vpop.f32.mrf.mxu0
        %v718 = vadd.f32 %v548, %v717
        %v719 = vpop.f32.mrf.mxu0
        %v720 = vadd.f32 %v550, %v719
        %721 = vmatmul.bf16.gmra.mxu0 %v675
        %v722 = vpop.f32.mrf.mxu0
        %v723 = vadd.f32 %v553, %v722
        %v724 = vpop.f32.mrf.mxu0
        %v725 = vadd.f32 %v555, %v724
        %726 = vmatmul.bf16.gmra.mxu0 %v678
        %v727 = vpop.f32.mrf.mxu0
        %v728 = vadd.f32 %v558, %v727
        %v729 = vpop.f32.mrf.mxu0
        %v730 = vadd.f32 %v560, %v729
        %731 = vmatmul.bf16.gmra.mxu0 %v681
        %v732 = vpop.f32.mrf.mxu0
        %v733 = vadd.f32 %v563, %v732
        %v734 = vpop.f32.mrf.mxu0
        %v735 = vadd.f32 %v565, %v734
        %736 = vmatmul.bf16.gmra.mxu0 %v684
        %v737 = vpop.f32.mrf.mxu0
        %v738 = vadd.f32 %v568, %v737
        %v739 = vpop.f32.mrf.mxu0
        %v740 = vadd.f32 %v570, %v739
        %741 = vdwg.mxu0
        %742 = vmatpush.bf16.msra.mxu0 0
        %743 = vmatpush.bf16.msra.mxu0 0
        %744 = vmatpush.bf16.msra.mxu0 0
        %745 = vmatpush.bf16.msra.mxu0 0
        %746 = vmatpush.bf16.msra.mxu0 0
        %747 = vmatpush.bf16.msra.mxu0 0
        %748 = vmatpush.bf16.msra.mxu0 0
        %749 = vmatpush.bf16.msra.mxu0 %v691
        %750 = vmatmul.bf16.gmra.mxu0 %v663
        %v751 = vpop.f32.mrf.mxu0
        %v752 = vadd.f32 %v582, %v751
        %v753 = vpop.f32.mrf.mxu0
        %v754 = vadd.f32 %v584, %v753
        %755 = vmatmul.bf16.gmra.mxu0 %v666
        %v756 = vpop.f32.mrf.mxu0
        %v757 = vadd.f32 %v587, %v756
        %v758 = vpop.f32.mrf.mxu0
        %v759 = vadd.f32 %v589, %v758
        %760 = vmatmul.bf16.gmra.mxu0 %v669
        %v761 = vpop.f32.mrf.mxu0
        %v762 = vadd.f32 %v592, %v761
        %v763 = vpop.f32.mrf.mxu0
        %v764 = vadd.f32 %v594, %v763
        %765 = vmatmul.bf16.gmra.mxu0 %v672
        %v766 = vpop.f32.mrf.mxu0
        %v767 = vadd.f32 %v597, %v766
        %v768 = vpop.f32.mrf.mxu0
        %v769 = vadd.f32 %v599, %v768
        %770 = vmatmul.bf16.gmra.mxu0 %v675
        %v771 = vpop.f32.mrf.mxu0
        %v772 = vadd.f32 %v602, %v771
        %v773 = vpop.f32.mrf.mxu0
        %v774 = vadd.f32 %v604, %v773
        %775 = vmatmul.bf16.gmra.mxu0 %v678
        %v776 = vpop.f32.mrf.mxu0
        %v777 = vadd.f32 %v607, %v776
        %v778 = vpop.f32.mrf.mxu0
        %v779 = vadd.f32 %v609, %v778
        %780 = vmatmul.bf16.gmra.mxu0 %v681
        %v781 = vpop.f32.mrf.mxu0
        %v782 = vadd.f32 %v612, %v781
        %v783 = vpop.f32.mrf.mxu0
        %v784 = vadd.f32 %v614, %v783
        %785 = vmatmul.bf16.gmra.mxu0 %v684
        %v786 = vpop.f32.mrf.mxu0
        %v787 = vadd.f32 %v617, %v786
        %v788 = vpop.f32.mrf.mxu0
        %v789 = vadd.f32 %v619, %v788
        %790 = vdwg.mxu0
        %791 = vst [vmem:[#allocation1] ss:$2 sm:$0xff] %v356
        %v792 = vld.sshfl [vmem:[#allocation1] sm:$0xff pattern:$0x75316420]
        %v793 = vld.sshfl [vmem:[#allocation1 + $0x8] sm:$0xff pattern:$0x75316420]
        %796 = vrot.lane.b32.xlu0 %v792, 16
        %v797 = vpop.permute.xlu0 %796
        %798 = vrot.lane.b32.xlu0 %v793, 16
        %v799 = vpop.permute.xlu0 %798
        %vm800 = vcmp.lt.s32.totalorder %v376, 16
        %v801 = vsel %vm800, %v797, %v799
        %v802 = vsel %vm800, %v799, %v797
        %803 = vrot.lane.b32.xlu0 %v357, 16
        %v804 = vpop.permute.xlu0 %803
        %805 = vrot.lane.b32.xlu0 %v359, 16
        %v806 = vpop.permute.xlu0 %805
        %807 = vrot.lane.b32.xlu0 %v361, 16
        %v808 = vpop.permute.xlu0 %807
        %809 = vrot.lane.b32.xlu0 %v363, 16
        %v810 = vpop.permute.xlu0 %809
        %811 = vrot.lane.b32.xlu0 %v358, 16
        %v812 = vpop.permute.xlu0 %811
        %813 = vrot.lane.b32.xlu0 %v360, 16
        %v814 = vpop.permute.xlu0 %813
        %815 = vrot.lane.b32.xlu0 %v362, 16
        %v816 = vpop.permute.xlu0 %815
        %817 = vrot.lane.b32.xlu0 %v364, 16
        %v818 = vpop.permute.xlu0 %817
        %v819 = vsel %vm800, %v804, %v812
        %v820 = vsel %vm800, %v806, %v814
        %v821 = vsel %vm800, %v808, %v816
        %v822 = vsel %vm800, %v810, %v818
        %v823 = vsel %vm800, %v812, %v804
        %v824 = vsel %vm800, %v814, %v806
        %v825 = vsel %vm800, %v816, %v808
        %v826 = vsel %vm800, %v818, %v810
        %s827 = scalar_lea.vmem %s6, 2
        %v828 = vld [vmem:[%s827] sm:$0x3]
        %v830 = vperm.slane %v828, 0
        %v831 = vperm.slane %v828, 1
        %v834 = vmul.f32 %v802, %v830
        %v835 = vmul.f32 %v801, %v831
        %v836 = vpack.c.bf16 %v834, %v834
        %v837 = vpack.c.bf16 %v835, %v835
        %v838 = vmul.f32 %v823, %v830
        %v839 = vmul.f32 %v819, %v831
        %v840 = vmul.f32 %v824, %v830
        %v841 = vmul.f32 %v820, %v831
        %v842 = vmul.f32 %v825, %v830
        %v843 = vmul.f32 %v821, %v831
        %v844 = vmul.f32 %v826, %v830
        %v845 = vmul.f32 %v822, %v831
        %v846 = vpack.c.bf16 %v840, %v838
        %v847 = vpack.c.bf16 %v841, %v839
        %v848 = vpack.c.bf16 %v844, %v842
        %v849 = vpack.c.bf16 %v845, %v843
        %s850 = scalar_lea.vmem %s3, 64
        %v851 = vld [vmem:[%s850] sm:$0xf]
        %v852 = vld [vmem:[%s850 + $0x4] sm:$0xf]
        %v853 = vld [vmem:[%s850 + $0x8] sm:$0xf]
        %v854 = vld [vmem:[%s850 + $0xc] sm:$0xf]
        %v855 = vld [vmem:[%s850 + $0x10] sm:$0xf]
        %v856 = vld [vmem:[%s850 + $0x14] sm:$0xf]
        %v857 = vld [vmem:[%s850 + $0x18] sm:$0xf]
        %v858 = vld [vmem:[%s850 + $0x1c] sm:$0xf]
        %v859 = vld [vmem:[%s850 + $0x20] sm:$0xf]
        %v860 = vld [vmem:[%s850 + $0x24] sm:$0xf]
        %v861 = vld [vmem:[%s850 + $0x28] sm:$0xf]
        %v862 = vld [vmem:[%s850 + $0x2c] sm:$0xf]
        %v863 = vld [vmem:[%s850 + $0x30] sm:$0xf]
        %v864 = vld [vmem:[%s850 + $0x34] sm:$0xf]
        %v865 = vld [vmem:[%s850 + $0x38] sm:$0xf]
        %v866 = vld [vmem:[%s850 + $0x3c] sm:$0xf]
        %v883 = vunpack.c.l.b16 %v851
        %v884 = vunpack.c.l.b16 %v852
        %v885 = vunpack.c.l.b16 %v853
        %v886 = vunpack.c.l.b16 %v854
        %v887 = vunpack.c.l.b16 %v855
        %v888 = vunpack.c.l.b16 %v856
        %v889 = vunpack.c.l.b16 %v857
        %v890 = vunpack.c.l.b16 %v858
        %v891 = vunpack.c.l.b16 %v859
        %v892 = vunpack.c.l.b16 %v860
        %v893 = vunpack.c.l.b16 %v861
        %v894 = vunpack.c.l.b16 %v862
        %v895 = vunpack.c.l.b16 %v863
        %v896 = vunpack.c.l.b16 %v864
        %v897 = vunpack.c.l.b16 %v865
        %v898 = vunpack.c.l.b16 %v866
        %v899 = vpack.c.b16 %v884, %v883
        %v900 = vpack.c.b16 %v886, %v885
        %v901 = vpack.c.b16 %v888, %v887
        %v902 = vpack.c.b16 %v890, %v889
        %v903 = vpack.c.b16 %v892, %v891
        %v904 = vpack.c.b16 %v894, %v893
        %v905 = vpack.c.b16 %v896, %v895
        %v906 = vpack.c.b16 %v898, %v897
        %v908 = vsel %vm661, %v899, 0
        %v911 = vsel %vm661, %v900, 0
        %v914 = vsel %vm661, %v901, 0
        %v917 = vsel %vm661, %v902, 0
        %v920 = vsel %vm661, %v903, 0
        %v923 = vsel %vm661, %v904, 0
        %v926 = vsel %vm661, %v905, 0
        %v929 = vsel %vm661, %v906, 0
        %v932 = vsel %vm686, %v836, 0
        %v935 = vsel %vm686, %v837, 0
        %937 = vmatpush.bf16.msra.mxu0 0
        %938 = vmatpush.bf16.msra.mxu0 0
        %939 = vmatpush.bf16.msra.mxu0 0
        %940 = vmatpush.bf16.msra.mxu0 0
        %941 = vmatpush.bf16.msra.mxu0 0
        %942 = vmatpush.bf16.msra.mxu0 0
        %943 = vmatpush.bf16.msra.mxu0 0
        %944 = vmatpush.bf16.msra.mxu0 %v932
        %945 = vmatmul.bf16.gmra.mxu0 %v908
        %v946 = vpop.f32.mrf.mxu0
        %v947 = vadd.f32 0.0, %v946
        %v948 = vpop.f32.mrf.mxu0
        %v949 = vadd.f32 0.0, %v948
        %950 = vmatmul.bf16.gmra.mxu0 %v911
        %v951 = vpop.f32.mrf.mxu0
        %v952 = vadd.f32 0.0, %v951
        %v953 = vpop.f32.mrf.mxu0
        %v954 = vadd.f32 0.0, %v953
        %955 = vmatmul.bf16.gmra.mxu0 %v914
        %v956 = vpop.f32.mrf.mxu0
        %v957 = vadd.f32 0.0, %v956
        %v958 = vpop.f32.mrf.mxu0
        %v959 = vadd.f32 0.0, %v958
        %960 = vmatmul.bf16.gmra.mxu0 %v917
        %v961 = vpop.f32.mrf.mxu0
        %v962 = vadd.f32 0.0, %v961
        %v963 = vpop.f32.mrf.mxu0
        %v964 = vadd.f32 0.0, %v963
        %965 = vmatmul.bf16.gmra.mxu0 %v920
        %v966 = vpop.f32.mrf.mxu0
        %v967 = vadd.f32 0.0, %v966
        %v968 = vpop.f32.mrf.mxu0
        %v969 = vadd.f32 0.0, %v968
        %970 = vmatmul.bf16.gmra.mxu0 %v923
        %v971 = vpop.f32.mrf.mxu0
        %v972 = vadd.f32 0.0, %v971
        %v973 = vpop.f32.mrf.mxu0
        %v974 = vadd.f32 0.0, %v973
        %975 = vmatmul.bf16.gmra.mxu0 %v926
        %v976 = vpop.f32.mrf.mxu0
        %v977 = vadd.f32 0.0, %v976
        %v978 = vpop.f32.mrf.mxu0
        %v979 = vadd.f32 0.0, %v978
        %980 = vmatmul.bf16.gmra.mxu0 %v929
        %v981 = vpop.f32.mrf.mxu0
        %v982 = vadd.f32 0.0, %v981
        %v983 = vpop.f32.mrf.mxu0
        %v984 = vadd.f32 0.0, %v983
        %985 = vdwg.mxu0
        %986 = vmatpush.bf16.msra.mxu0 0
        %987 = vmatpush.bf16.msra.mxu0 0
        %988 = vmatpush.bf16.msra.mxu0 0
        %989 = vmatpush.bf16.msra.mxu0 0
        %990 = vmatpush.bf16.msra.mxu0 0
        %991 = vmatpush.bf16.msra.mxu0 0
        %992 = vmatpush.bf16.msra.mxu0 0
        %993 = vmatpush.bf16.msra.mxu0 %v935
        %994 = vmatmul.bf16.gmra.mxu0 %v908
        %v995 = vpop.f32.mrf.mxu0
        %v996 = vadd.f32 0.0, %v995
        %v997 = vpop.f32.mrf.mxu0
        %v998 = vadd.f32 0.0, %v997
        %999 = vmatmul.bf16.gmra.mxu0 %v911
        %v1000 = vpop.f32.mrf.mxu0
        %v1001 = vadd.f32 0.0, %v1000
        %v1002 = vpop.f32.mrf.mxu0
        %v1003 = vadd.f32 0.0, %v1002
        %1004 = vmatmul.bf16.gmra.mxu0 %v914
        %v1005 = vpop.f32.mrf.mxu0
        %v1006 = vadd.f32 0.0, %v1005
        %v1007 = vpop.f32.mrf.mxu0
        %v1008 = vadd.f32 0.0, %v1007
        %1009 = vmatmul.bf16.gmra.mxu0 %v917
        %v1010 = vpop.f32.mrf.mxu0
        %v1011 = vadd.f32 0.0, %v1010
        %v1012 = vpop.f32.mrf.mxu0
        %v1013 = vadd.f32 0.0, %v1012
        %1014 = vmatmul.bf16.gmra.mxu0 %v920
        %v1015 = vpop.f32.mrf.mxu0
        %v1016 = vadd.f32 0.0, %v1015
        %v1017 = vpop.f32.mrf.mxu0
        %v1018 = vadd.f32 0.0, %v1017
        %1019 = vmatmul.bf16.gmra.mxu0 %v923
        %v1020 = vpop.f32.mrf.mxu0
        %v1021 = vadd.f32 0.0, %v1020
        %v1022 = vpop.f32.mrf.mxu0
        %v1023 = vadd.f32 0.0, %v1022
        %1024 = vmatmul.bf16.gmra.mxu0 %v926
        %v1025 = vpop.f32.mrf.mxu0
        %v1026 = vadd.f32 0.0, %v1025
        %v1027 = vpop.f32.mrf.mxu0
        %v1028 = vadd.f32 0.0, %v1027
        %1029 = vmatmul.bf16.gmra.mxu0 %v929
        %v1030 = vpop.f32.mrf.mxu0
        %v1031 = vadd.f32 0.0, %v1030
        %v1032 = vpop.f32.mrf.mxu0
        %v1033 = vadd.f32 0.0, %v1032
        %1034 = vdwg.mxu0
        %v1035 = vadd.f32 %v703, %v947
        %v1036 = vadd.f32 %v752, %v996
        %v1037 = vadd.f32 %v705, %v949
        %v1038 = vadd.f32 %v754, %v998
        %v1039 = vadd.f32 %v708, %v952
        %v1040 = vadd.f32 %v757, %v1001
        %v1041 = vadd.f32 %v710, %v954
        %v1042 = vadd.f32 %v759, %v1003
        %v1043 = vadd.f32 %v713, %v957
        %v1044 = vadd.f32 %v762, %v1006
        %v1045 = vadd.f32 %v715, %v959
        %v1046 = vadd.f32 %v764, %v1008
        %v1047 = vadd.f32 %v718, %v962
        %v1048 = vadd.f32 %v767, %v1011
        %v1049 = vadd.f32 %v720, %v964
        %v1050 = vadd.f32 %v769, %v1013
        %v1051 = vadd.f32 %v723, %v967
        %v1052 = vadd.f32 %v772, %v1016
        %v1053 = vadd.f32 %v725, %v969
        %v1054 = vadd.f32 %v774, %v1018
        %v1055 = vadd.f32 %v728, %v972
        %v1056 = vadd.f32 %v777, %v1021
        %v1057 = vadd.f32 %v730, %v974
        %v1058 = vadd.f32 %v779, %v1023
        %v1059 = vadd.f32 %v733, %v977
        %v1060 = vadd.f32 %v782, %v1026
        %v1061 = vadd.f32 %v735, %v979
        %v1062 = vadd.f32 %v784, %v1028
        %v1063 = vadd.f32 %v738, %v982
        %v1064 = vadd.f32 %v787, %v1031
        %v1065 = vadd.f32 %v740, %v984
        %v1066 = vadd.f32 %v789, %v1033
        %s1067 = scalar_lea.vmem %s4, 64
        %v1068 = vld [vmem:[%s1067] sm:$0xf]
        %v1069 = vld [vmem:[%s1067 + $0x4] sm:$0xf]
        %v1070 = vld [vmem:[%s1067 + $0x8] sm:$0xf]
        %v1071 = vld [vmem:[%s1067 + $0xc] sm:$0xf]
        %v1072 = vld [vmem:[%s1067 + $0x10] sm:$0xf]
        %v1073 = vld [vmem:[%s1067 + $0x14] sm:$0xf]
        %v1074 = vld [vmem:[%s1067 + $0x18] sm:$0xf]
        %v1075 = vld [vmem:[%s1067 + $0x1c] sm:$0xf]
        %v1076 = vld [vmem:[%s1067 + $0x20] sm:$0xf]
        %v1077 = vld [vmem:[%s1067 + $0x24] sm:$0xf]
        %v1078 = vld [vmem:[%s1067 + $0x28] sm:$0xf]
        %v1079 = vld [vmem:[%s1067 + $0x2c] sm:$0xf]
        %v1080 = vld [vmem:[%s1067 + $0x30] sm:$0xf]
        %v1081 = vld [vmem:[%s1067 + $0x34] sm:$0xf]
        %v1082 = vld [vmem:[%s1067 + $0x38] sm:$0xf]
        %v1083 = vld [vmem:[%s1067 + $0x3c] sm:$0xf]
        %v1100 = vunpack.c.l.b16 %v1068
        %v1101 = vunpack.c.l.b16 %v1069
        %v1102 = vunpack.c.l.b16 %v1070
        %v1103 = vunpack.c.l.b16 %v1071
        %v1104 = vunpack.c.l.b16 %v1072
        %v1105 = vunpack.c.l.b16 %v1073
        %v1106 = vunpack.c.l.b16 %v1074
        %v1107 = vunpack.c.l.b16 %v1075
        %v1108 = vunpack.c.l.b16 %v1076
        %v1109 = vunpack.c.l.b16 %v1077
        %v1110 = vunpack.c.l.b16 %v1078
        %v1111 = vunpack.c.l.b16 %v1079
        %v1112 = vunpack.c.l.b16 %v1080
        %v1113 = vunpack.c.l.b16 %v1081
        %v1114 = vunpack.c.l.b16 %v1082
        %v1115 = vunpack.c.l.b16 %v1083
        %v1116 = vpack.c.b16 %v1101, %v1100
        %v1117 = vpack.c.b16 %v1103, %v1102
        %v1118 = vpack.c.b16 %v1105, %v1104
        %v1119 = vpack.c.b16 %v1107, %v1106
        %v1120 = vpack.c.b16 %v1109, %v1108
        %v1121 = vpack.c.b16 %v1111, %v1110
        %v1122 = vpack.c.b16 %v1113, %v1112
        %v1123 = vpack.c.b16 %v1115, %v1114
        %v1125 = vsel %vm498, %v1116, 0
        %v1128 = vsel %vm498, %v1117, 0
        %v1131 = vsel %vm498, %v1118, 0
        %v1134 = vsel %vm498, %v1119, 0
        %v1137 = vsel %vm498, %v1120, 0
        %v1140 = vsel %vm498, %v1121, 0
        %v1143 = vsel %vm498, %v1122, 0
        %v1146 = vsel %vm498, %v1123, 0
        %1148 = vmatpush.bf16.msra.mxu0 0
        %1149 = vmatpush.bf16.msra.mxu0 0
        %1150 = vmatpush.bf16.msra.mxu0 0
        %1151 = vmatpush.bf16.msra.mxu0 0
        %1152 = vmatpush.bf16.msra.mxu0 0
        %1153 = vmatpush.bf16.msra.mxu0 0
        %1154 = vmatpush.bf16.msra.mxu0 %v848
        %1155 = vmatpush.bf16.msra.mxu0 %v846
        %1156 = vmatmul.bf16.gmra.mxu0 %v1125
        %v1157 = vpop.f32.mrf.mxu0
        %v1158 = vadd.f32 0.0, %v1157
        %v1159 = vpop.f32.mrf.mxu0
        %v1160 = vadd.f32 0.0, %v1159
        %1161 = vmatmul.bf16.gmra.mxu0 %v1128
        %v1162 = vpop.f32.mrf.mxu0
        %v1163 = vadd.f32 0.0, %v1162
        %v1164 = vpop.f32.mrf.mxu0
        %v1165 = vadd.f32 0.0, %v1164
        %1166 = vmatmul.bf16.gmra.mxu0 %v1131
        %v1167 = vpop.f32.mrf.mxu0
        %v1168 = vadd.f32 0.0, %v1167
        %v1169 = vpop.f32.mrf.mxu0
        %v1170 = vadd.f32 0.0, %v1169
        %1171 = vmatmul.bf16.gmra.mxu0 %v1134
        %v1172 = vpop.f32.mrf.mxu0
        %v1173 = vadd.f32 0.0, %v1172
        %v1174 = vpop.f32.mrf.mxu0
        %v1175 = vadd.f32 0.0, %v1174
        %1176 = vmatmul.bf16.gmra.mxu0 %v1137
        %v1177 = vpop.f32.mrf.mxu0
        %v1178 = vadd.f32 0.0, %v1177
        %v1179 = vpop.f32.mrf.mxu0
        %v1180 = vadd.f32 0.0, %v1179
        %1181 = vmatmul.bf16.gmra.mxu0 %v1140
        %v1182 = vpop.f32.mrf.mxu0
        %v1183 = vadd.f32 0.0, %v1182
        %v1184 = vpop.f32.mrf.mxu0
        %v1185 = vadd.f32 0.0, %v1184
        %1186 = vmatmul.bf16.gmra.mxu0 %v1143
        %v1187 = vpop.f32.mrf.mxu0
        %v1188 = vadd.f32 0.0, %v1187
        %v1189 = vpop.f32.mrf.mxu0
        %v1190 = vadd.f32 0.0, %v1189
        %1191 = vmatmul.bf16.gmra.mxu0 %v1146
        %v1192 = vpop.f32.mrf.mxu0
        %v1193 = vadd.f32 0.0, %v1192
        %v1194 = vpop.f32.mrf.mxu0
        %v1195 = vadd.f32 0.0, %v1194
        %1196 = vdwg.mxu0
        %1197 = vmatpush.bf16.msra.mxu0 0
        %1198 = vmatpush.bf16.msra.mxu0 0
        %1199 = vmatpush.bf16.msra.mxu0 0
        %1200 = vmatpush.bf16.msra.mxu0 0
        %1201 = vmatpush.bf16.msra.mxu0 0
        %1202 = vmatpush.bf16.msra.mxu0 0
        %1203 = vmatpush.bf16.msra.mxu0 %v849
        %1204 = vmatpush.bf16.msra.mxu0 %v847
        %1205 = vmatmul.bf16.gmra.mxu0 %v1125
        %v1206 = vpop.f32.mrf.mxu0
        %v1207 = vadd.f32 0.0, %v1206
        %v1208 = vpop.f32.mrf.mxu0
        %v1209 = vadd.f32 0.0, %v1208
        %1210 = vmatmul.bf16.gmra.mxu0 %v1128
        %v1211 = vpop.f32.mrf.mxu0
        %v1212 = vadd.f32 0.0, %v1211
        %v1213 = vpop.f32.mrf.mxu0
        %v1214 = vadd.f32 0.0, %v1213
        %1215 = vmatmul.bf16.gmra.mxu0 %v1131
        %v1216 = vpop.f32.mrf.mxu0
        %v1217 = vadd.f32 0.0, %v1216
        %v1218 = vpop.f32.mrf.mxu0
        %v1219 = vadd.f32 0.0, %v1218
        %1220 = vmatmul.bf16.gmra.mxu0 %v1134
        %v1221 = vpop.f32.mrf.mxu0
        %v1222 = vadd.f32 0.0, %v1221
        %v1223 = vpop.f32.mrf.mxu0
        %v1224 = vadd.f32 0.0, %v1223
        %1225 = vmatmul.bf16.gmra.mxu0 %v1137
        %v1226 = vpop.f32.mrf.mxu0
        %v1227 = vadd.f32 0.0, %v1226
        %v1228 = vpop.f32.mrf.mxu0
        %v1229 = vadd.f32 0.0, %v1228
        %1230 = vmatmul.bf16.gmra.mxu0 %v1140
        %v1231 = vpop.f32.mrf.mxu0
        %v1232 = vadd.f32 0.0, %v1231
        %v1233 = vpop.f32.mrf.mxu0
        %v1234 = vadd.f32 0.0, %v1233
        %1235 = vmatmul.bf16.gmra.mxu0 %v1143
        %v1236 = vpop.f32.mrf.mxu0
        %v1237 = vadd.f32 0.0, %v1236
        %v1238 = vpop.f32.mrf.mxu0
        %v1239 = vadd.f32 0.0, %v1238
        %1240 = vmatmul.bf16.gmra.mxu0 %v1146
        %v1241 = vpop.f32.mrf.mxu0
        %v1242 = vadd.f32 0.0, %v1241
        %v1243 = vpop.f32.mrf.mxu0
        %v1244 = vadd.f32 0.0, %v1243
        %1245 = vdwg.mxu0
        %v1246 = vadd.f32 %v1035, %v1158
        %v1247 = vadd.f32 %v1036, %v1207
        %v1248 = vadd.f32 %v1037, %v1160
        %v1249 = vadd.f32 %v1038, %v1209
        %v1250 = vadd.f32 %v1039, %v1163
        %v1251 = vadd.f32 %v1040, %v1212
        %v1252 = vadd.f32 %v1041, %v1165
        %v1253 = vadd.f32 %v1042, %v1214
        %v1254 = vadd.f32 %v1043, %v1168
        %v1255 = vadd.f32 %v1044, %v1217
        %v1256 = vadd.f32 %v1045, %v1170
        %v1257 = vadd.f32 %v1046, %v1219
        %v1258 = vadd.f32 %v1047, %v1173
        %v1259 = vadd.f32 %v1048, %v1222
        %v1260 = vadd.f32 %v1049, %v1175
        %v1261 = vadd.f32 %v1050, %v1224
        %v1262 = vadd.f32 %v1051, %v1178
        %v1263 = vadd.f32 %v1052, %v1227
        %v1264 = vadd.f32 %v1053, %v1180
        %v1265 = vadd.f32 %v1054, %v1229
        %v1266 = vadd.f32 %v1055, %v1183
        %v1267 = vadd.f32 %v1056, %v1232
        %v1268 = vadd.f32 %v1057, %v1185
        %v1269 = vadd.f32 %v1058, %v1234
        %v1270 = vadd.f32 %v1059, %v1188
        %v1271 = vadd.f32 %v1060, %v1237
        %v1272 = vadd.f32 %v1061, %v1190
        %v1273 = vadd.f32 %v1062, %v1239
        %v1274 = vadd.f32 %v1063, %v1193
        %v1275 = vadd.f32 %v1064, %v1242
        %v1276 = vadd.f32 %v1065, %v1195
        %v1277 = vadd.f32 %v1066, %v1244
        %1278 = vst [vmem:[#allocation1] ss:$2 sm:$0xff] %v356
        %v1279 = vld.sshfl [vmem:[#allocation1] sm:$0xff pattern:$0x75316420]
        %v1280 = vld.sshfl [vmem:[#allocation1 + $0x8] sm:$0xff pattern:$0x75316420]
        %1283 = vrot.lane.b32.xlu0 %v1279, 15
        %v1284 = vpop.permute.xlu0 %1283
        %1285 = vrot.lane.b32.xlu0 %v1280, 15
        %v1286 = vpop.permute.xlu0 %1285
        %vm1287 = vcmp.lt.s32.totalorder %v376, 15
        %v1288 = vsel %vm1287, %v1284, %v1286
        %v1289 = vsel %vm1287, %v1286, %v1284
        %1290 = vrot.lane.b32.xlu0 %v357, 15
        %v1291 = vpop.permute.xlu0 %1290
        %1292 = vrot.lane.b32.xlu0 %v359, 15
        %v1293 = vpop.permute.xlu0 %1292
        %1294 = vrot.lane.b32.xlu0 %v361, 15
        %v1295 = vpop.permute.xlu0 %1294
        %1296 = vrot.lane.b32.xlu0 %v363, 15
        %v1297 = vpop.permute.xlu0 %1296
        %1298 = vrot.lane.b32.xlu0 %v358, 15
        %v1299 = vpop.permute.xlu0 %1298
        %1300 = vrot.lane.b32.xlu0 %v360, 15
        %v1301 = vpop.permute.xlu0 %1300
        %1302 = vrot.lane.b32.xlu0 %v362, 15
        %v1303 = vpop.permute.xlu0 %1302
        %1304 = vrot.lane.b32.xlu0 %v364, 15
        %v1305 = vpop.permute.xlu0 %1304
        %v1306 = vsel %vm1287, %v1291, %v1299
        %v1307 = vsel %vm1287, %v1293, %v1301
        %v1308 = vsel %vm1287, %v1295, %v1303
        %v1309 = vsel %vm1287, %v1297, %v1305
        %v1310 = vsel %vm1287, %v1299, %v1291
        %v1311 = vsel %vm1287, %v1301, %v1293
        %v1312 = vsel %vm1287, %v1303, %v1295
        %v1313 = vsel %vm1287, %v1305, %v1297
        %s1314 = scalar_lea.vmem %s6, 4
        %v1315 = vld [vmem:[%s1314] sm:$0x3]
        %v1317 = vperm.slane %v1315, 0
        %v1318 = vperm.slane %v1315, 1
        %v1321 = vmul.f32 %v1289, %v1317
        %v1322 = vmul.f32 %v1288, %v1318
        %v1323 = vpack.c.bf16 %v1321, %v1321
        %v1324 = vpack.c.bf16 %v1322, %v1322
        %v1325 = vmul.f32 %v1310, %v1317
        %v1326 = vmul.f32 %v1306, %v1318
        %v1327 = vmul.f32 %v1311, %v1317
        %v1328 = vmul.f32 %v1307, %v1318
        %v1329 = vmul.f32 %v1312, %v1317
        %v1330 = vmul.f32 %v1308, %v1318
        %v1331 = vmul.f32 %v1313, %v1317
        %v1332 = vmul.f32 %v1309, %v1318
        %v1333 = vpack.c.bf16 %v1327, %v1325
        %v1334 = vpack.c.bf16 %v1328, %v1326
        %v1335 = vpack.c.bf16 %v1331, %v1329
        %v1336 = vpack.c.bf16 %v1332, %v1330
        %s1337 = scalar_lea.vmem %s3, 128
        %v1338 = vld [vmem:[%s1337] sm:$0xf]
        %v1339 = vld [vmem:[%s1337 + $0x4] sm:$0xf]
        %v1340 = vld [vmem:[%s1337 + $0x8] sm:$0xf]
        %v1341 = vld [vmem:[%s1337 + $0xc] sm:$0xf]
        %v1342 = vld [vmem:[%s1337 + $0x10] sm:$0xf]
        %v1343 = vld [vmem:[%s1337 + $0x14] sm:$0xf]
        %v1344 = vld [vmem:[%s1337 + $0x18] sm:$0xf]
        %v1345 = vld [vmem:[%s1337 + $0x1c] sm:$0xf]
        %v1346 = vld [vmem:[%s1337 + $0x20] sm:$0xf]
        %v1347 = vld [vmem:[%s1337 + $0x24] sm:$0xf]
        %v1348 = vld [vmem:[%s1337 + $0x28] sm:$0xf]
        %v1349 = vld [vmem:[%s1337 + $0x2c] sm:$0xf]
        %v1350 = vld [vmem:[%s1337 + $0x30] sm:$0xf]
        %v1351 = vld [vmem:[%s1337 + $0x34] sm:$0xf]
        %v1352 = vld [vmem:[%s1337 + $0x38] sm:$0xf]
        %v1353 = vld [vmem:[%s1337 + $0x3c] sm:$0xf]
        %v1370 = vunpack.c.l.b16 %v1338
        %v1371 = vunpack.c.l.b16 %v1339
        %v1372 = vunpack.c.l.b16 %v1340
        %v1373 = vunpack.c.l.b16 %v1341
        %v1374 = vunpack.c.l.b16 %v1342
        %v1375 = vunpack.c.l.b16 %v1343
        %v1376 = vunpack.c.l.b16 %v1344
        %v1377 = vunpack.c.l.b16 %v1345
        %v1378 = vunpack.c.l.b16 %v1346
        %v1379 = vunpack.c.l.b16 %v1347
        %v1380 = vunpack.c.l.b16 %v1348
        %v1381 = vunpack.c.l.b16 %v1349
        %v1382 = vunpack.c.l.b16 %v1350
        %v1383 = vunpack.c.l.b16 %v1351
        %v1384 = vunpack.c.l.b16 %v1352
        %v1385 = vunpack.c.l.b16 %v1353
        %v1386 = vpack.c.b16 %v1371, %v1370
        %v1387 = vpack.c.b16 %v1373, %v1372
        %v1388 = vpack.c.b16 %v1375, %v1374
        %v1389 = vpack.c.b16 %v1377, %v1376
        %v1390 = vpack.c.b16 %v1379, %v1378
        %v1391 = vpack.c.b16 %v1381, %v1380
        %v1392 = vpack.c.b16 %v1383, %v1382
        %v1393 = vpack.c.b16 %v1385, %v1384
        %v1395 = vsel %vm661, %v1386, 0
        %v1398 = vsel %vm661, %v1387, 0
        %v1401 = vsel %vm661, %v1388, 0
        %v1404 = vsel %vm661, %v1389, 0
        %v1407 = vsel %vm661, %v1390, 0
        %v1410 = vsel %vm661, %v1391, 0
        %v1413 = vsel %vm661, %v1392, 0
        %v1416 = vsel %vm661, %v1393, 0
        %v1419 = vsel %vm686, %v1323, 0
        %v1422 = vsel %vm686, %v1324, 0
        %1424 = vmatpush.bf16.msra.mxu0 0
        %1425 = vmatpush.bf16.msra.mxu0 0
        %1426 = vmatpush.bf16.msra.mxu0 0
        %1427 = vmatpush.bf16.msra.mxu0 0
        %1428 = vmatpush.bf16.msra.mxu0 0
        %1429 = vmatpush.bf16.msra.mxu0 0
        %1430 = vmatpush.bf16.msra.mxu0 0
        %1431 = vmatpush.bf16.msra.mxu0 %v1419
        %1432 = vmatmul.bf16.gmra.mxu0 %v1395
        %v1433 = vpop.f32.mrf.mxu0
        %v1434 = vadd.f32 0.0, %v1433
        %v1435 = vpop.f32.mrf.mxu0
        %v1436 = vadd.f32 0.0, %v1435
        %1437 = vmatmul.bf16.gmra.mxu0 %v1398
        %v1438 = vpop.f32.mrf.mxu0
        %v1439 = vadd.f32 0.0, %v1438
        %v1440 = vpop.f32.mrf.mxu0
        %v1441 = vadd.f32 0.0, %v1440
        %1442 = vmatmul.bf16.gmra.mxu0 %v1401
        %v1443 = vpop.f32.mrf.mxu0
        %v1444 = vadd.f32 0.0, %v1443
        %v1445 = vpop.f32.mrf.mxu0
        %v1446 = vadd.f32 0.0, %v1445
        %1447 = vmatmul.bf16.gmra.mxu0 %v1404
        %v1448 = vpop.f32.mrf.mxu0
        %v1449 = vadd.f32 0.0, %v1448
        %v1450 = vpop.f32.mrf.mxu0
        %v1451 = vadd.f32 0.0, %v1450
        %1452 = vmatmul.bf16.gmra.mxu0 %v1407
        %v1453 = vpop.f32.mrf.mxu0
        %v1454 = vadd.f32 0.0, %v1453
        %v1455 = vpop.f32.mrf.mxu0
        %v1456 = vadd.f32 0.0, %v1455
        %1457 = vmatmul.bf16.gmra.mxu0 %v1410
        %v1458 = vpop.f32.mrf.mxu0
        %v1459 = vadd.f32 0.0, %v1458
        %v1460 = vpop.f32.mrf.mxu0
        %v1461 = vadd.f32 0.0, %v1460
        %1462 = vmatmul.bf16.gmra.mxu0 %v1413
        %v1463 = vpop.f32.mrf.mxu0
        %v1464 = vadd.f32 0.0, %v1463
        %v1465 = vpop.f32.mrf.mxu0
        %v1466 = vadd.f32 0.0, %v1465
        %1467 = vmatmul.bf16.gmra.mxu0 %v1416
        %v1468 = vpop.f32.mrf.mxu0
        %v1469 = vadd.f32 0.0, %v1468
        %v1470 = vpop.f32.mrf.mxu0
        %v1471 = vadd.f32 0.0, %v1470
        %1472 = vdwg.mxu0
        %1473 = vmatpush.bf16.msra.mxu0 0
        %1474 = vmatpush.bf16.msra.mxu0 0
        %1475 = vmatpush.bf16.msra.mxu0 0
        %1476 = vmatpush.bf16.msra.mxu0 0
        %1477 = vmatpush.bf16.msra.mxu0 0
        %1478 = vmatpush.bf16.msra.mxu0 0
        %1479 = vmatpush.bf16.msra.mxu0 0
        %1480 = vmatpush.bf16.msra.mxu0 %v1422
        %1481 = vmatmul.bf16.gmra.mxu0 %v1395
        %v1482 = vpop.f32.mrf.mxu0
        %v1483 = vadd.f32 0.0, %v1482
        %v1484 = vpop.f32.mrf.mxu0
        %v1485 = vadd.f32 0.0, %v1484
        %1486 = vmatmul.bf16.gmra.mxu0 %v1398
        %v1487 = vpop.f32.mrf.mxu0
        %v1488 = vadd.f32 0.0, %v1487
        %v1489 = vpop.f32.mrf.mxu0
        %v1490 = vadd.f32 0.0, %v1489
        %1491 = vmatmul.bf16.gmra.mxu0 %v1401
        %v1492 = vpop.f32.mrf.mxu0
        %v1493 = vadd.f32 0.0, %v1492
        %v1494 = vpop.f32.mrf.mxu0
        %v1495 = vadd.f32 0.0, %v1494
        %1496 = vmatmul.bf16.gmra.mxu0 %v1404
        %v1497 = vpop.f32.mrf.mxu0
        %v1498 = vadd.f32 0.0, %v1497
        %v1499 = vpop.f32.mrf.mxu0
        %v1500 = vadd.f32 0.0, %v1499
        %1501 = vmatmul.bf16.gmra.mxu0 %v1407
        %v1502 = vpop.f32.mrf.mxu0
        %v1503 = vadd.f32 0.0, %v1502
        %v1504 = vpop.f32.mrf.mxu0
        %v1505 = vadd.f32 0.0, %v1504
        %1506 = vmatmul.bf16.gmra.mxu0 %v1410
        %v1507 = vpop.f32.mrf.mxu0
        %v1508 = vadd.f32 0.0, %v1507
        %v1509 = vpop.f32.mrf.mxu0
        %v1510 = vadd.f32 0.0, %v1509
        %1511 = vmatmul.bf16.gmra.mxu0 %v1413
        %v1512 = vpop.f32.mrf.mxu0
        %v1513 = vadd.f32 0.0, %v1512
        %v1514 = vpop.f32.mrf.mxu0
        %v1515 = vadd.f32 0.0, %v1514
        %1516 = vmatmul.bf16.gmra.mxu0 %v1416
        %v1517 = vpop.f32.mrf.mxu0
        %v1518 = vadd.f32 0.0, %v1517
        %v1519 = vpop.f32.mrf.mxu0
        %v1520 = vadd.f32 0.0, %v1519
        %1521 = vdwg.mxu0
        %v1522 = vadd.f32 %v1246, %v1434
        %v1523 = vadd.f32 %v1247, %v1483
        %v1524 = vadd.f32 %v1248, %v1436
        %v1525 = vadd.f32 %v1249, %v1485
        %v1526 = vadd.f32 %v1250, %v1439
        %v1527 = vadd.f32 %v1251, %v1488
        %v1528 = vadd.f32 %v1252, %v1441
        %v1529 = vadd.f32 %v1253, %v1490
        %v1530 = vadd.f32 %v1254, %v1444
        %v1531 = vadd.f32 %v1255, %v1493
        %v1532 = vadd.f32 %v1256, %v1446
        %v1533 = vadd.f32 %v1257, %v1495
        %v1534 = vadd.f32 %v1258, %v1449
        %v1535 = vadd.f32 %v1259, %v1498
        %v1536 = vadd.f32 %v1260, %v1451
        %v1537 = vadd.f32 %v1261, %v1500
        %v1538 = vadd.f32 %v1262, %v1454
        %v1539 = vadd.f32 %v1263, %v1503
        %v1540 = vadd.f32 %v1264, %v1456
        %v1541 = vadd.f32 %v1265, %v1505
        %v1542 = vadd.f32 %v1266, %v1459
        %v1543 = vadd.f32 %v1267, %v1508
        %v1544 = vadd.f32 %v1268, %v1461
        %v1545 = vadd.f32 %v1269, %v1510
        %v1546 = vadd.f32 %v1270, %v1464
        %v1547 = vadd.f32 %v1271, %v1513
        %v1548 = vadd.f32 %v1272, %v1466
        %v1549 = vadd.f32 %v1273, %v1515
        %v1550 = vadd.f32 %v1274, %v1469
        %v1551 = vadd.f32 %v1275, %v1518
        %v1552 = vadd.f32 %v1276, %v1471
        %v1553 = vadd.f32 %v1277, %v1520
        %s1554 = scalar_lea.vmem %s4, 128
        %v1555 = vld [vmem:[%s1554] sm:$0xf]
        %v1556 = vld [vmem:[%s1554 + $0x4] sm:$0xf]
        %v1557 = vld [vmem:[%s1554 + $0x8] sm:$0xf]
        %v1558 = vld [vmem:[%s1554 + $0xc] sm:$0xf]
        %v1559 = vld [vmem:[%s1554 + $0x10] sm:$0xf]
        %v1560 = vld [vmem:[%s1554 + $0x14] sm:$0xf]
        %v1561 = vld [vmem:[%s1554 + $0x18] sm:$0xf]
        %v1562 = vld [vmem:[%s1554 + $0x1c] sm:$0xf]
        %v1563 = vld [vmem:[%s1554 + $0x20] sm:$0xf]
        %v1564 = vld [vmem:[%s1554 + $0x24] sm:$0xf]
        %v1565 = vld [vmem:[%s1554 + $0x28] sm:$0xf]
        %v1566 = vld [vmem:[%s1554 + $0x2c] sm:$0xf]
        %v1567 = vld [vmem:[%s1554 + $0x30] sm:$0xf]
        %v1568 = vld [vmem:[%s1554 + $0x34] sm:$0xf]
        %v1569 = vld [vmem:[%s1554 + $0x38] sm:$0xf]
        %v1570 = vld [vmem:[%s1554 + $0x3c] sm:$0xf]
        %v1587 = vunpack.c.l.b16 %v1555
        %v1588 = vunpack.c.l.b16 %v1556
        %v1589 = vunpack.c.l.b16 %v1557
        %v1590 = vunpack.c.l.b16 %v1558
        %v1591 = vunpack.c.l.b16 %v1559
        %v1592 = vunpack.c.l.b16 %v1560
        %v1593 = vunpack.c.l.b16 %v1561
        %v1594 = vunpack.c.l.b16 %v1562
        %v1595 = vunpack.c.l.b16 %v1563
        %v1596 = vunpack.c.l.b16 %v1564
        %v1597 = vunpack.c.l.b16 %v1565
        %v1598 = vunpack.c.l.b16 %v1566
        %v1599 = vunpack.c.l.b16 %v1567
        %v1600 = vunpack.c.l.b16 %v1568
        %v1601 = vunpack.c.l.b16 %v1569
        %v1602 = vunpack.c.l.b16 %v1570
        %v1603 = vpack.c.b16 %v1588, %v1587
        %v1604 = vpack.c.b16 %v1590, %v1589
        %v1605 = vpack.c.b16 %v1592, %v1591
        %v1606 = vpack.c.b16 %v1594, %v1593
        %v1607 = vpack.c.b16 %v1596, %v1595
        %v1608 = vpack.c.b16 %v1598, %v1597
        %v1609 = vpack.c.b16 %v1600, %v1599
        %v1610 = vpack.c.b16 %v1602, %v1601
        %v1612 = vsel %vm498, %v1603, 0
        %v1615 = vsel %vm498, %v1604, 0
        %v1618 = vsel %vm498, %v1605, 0
        %v1621 = vsel %vm498, %v1606, 0
        %v1624 = vsel %vm498, %v1607, 0
        %v1627 = vsel %vm498, %v1608, 0
        %v1630 = vsel %vm498, %v1609, 0
        %v1633 = vsel %vm498, %v1610, 0
        %1635 = vmatpush.bf16.msra.mxu0 0
        %1636 = vmatpush.bf16.msra.mxu0 0
        %1637 = vmatpush.bf16.msra.mxu0 0
        %1638 = vmatpush.bf16.msra.mxu0 0
        %1639 = vmatpush.bf16.msra.mxu0 0
        %1640 = vmatpush.bf16.msra.mxu0 0
        %1641 = vmatpush.bf16.msra.mxu0 %v1335
        %1642 = vmatpush.bf16.msra.mxu0 %v1333
        %1643 = vmatmul.bf16.gmra.mxu0 %v1612
        %v1644 = vpop.f32.mrf.mxu0
        %v1645 = vadd.f32 0.0, %v1644
        %v1646 = vpop.f32.mrf.mxu0
        %v1647 = vadd.f32 0.0, %v1646
        %1648 = vmatmul.bf16.gmra.mxu0 %v1615
        %v1649 = vpop.f32.mrf.mxu0
        %v1650 = vadd.f32 0.0, %v1649
        %v1651 = vpop.f32.mrf.mxu0
        %v1652 = vadd.f32 0.0, %v1651
        %1653 = vmatmul.bf16.gmra.mxu0 %v1618
        %v1654 = vpop.f32.mrf.mxu0
        %v1655 = vadd.f32 0.0, %v1654
        %v1656 = vpop.f32.mrf.mxu0
        %v1657 = vadd.f32 0.0, %v1656
        %1658 = vmatmul.bf16.gmra.mxu0 %v1621
        %v1659 = vpop.f32.mrf.mxu0
        %v1660 = vadd.f32 0.0, %v1659
        %v1661 = vpop.f32.mrf.mxu0
        %v1662 = vadd.f32 0.0, %v1661
        %1663 = vmatmul.bf16.gmra.mxu0 %v1624
        %v1664 = vpop.f32.mrf.mxu0
        %v1665 = vadd.f32 0.0, %v1664
        %v1666 = vpop.f32.mrf.mxu0
        %v1667 = vadd.f32 0.0, %v1666
        %1668 = vmatmul.bf16.gmra.mxu0 %v1627
        %v1669 = vpop.f32.mrf.mxu0
        %v1670 = vadd.f32 0.0, %v1669
        %v1671 = vpop.f32.mrf.mxu0
        %v1672 = vadd.f32 0.0, %v1671
        %1673 = vmatmul.bf16.gmra.mxu0 %v1630
        %v1674 = vpop.f32.mrf.mxu0
        %v1675 = vadd.f32 0.0, %v1674
        %v1676 = vpop.f32.mrf.mxu0
        %v1677 = vadd.f32 0.0, %v1676
        %1678 = vmatmul.bf16.gmra.mxu0 %v1633
        %v1679 = vpop.f32.mrf.mxu0
        %v1680 = vadd.f32 0.0, %v1679
        %v1681 = vpop.f32.mrf.mxu0
        %v1682 = vadd.f32 0.0, %v1681
        %1683 = vdwg.mxu0
        %1684 = vmatpush.bf16.msra.mxu0 0
        %1685 = vmatpush.bf16.msra.mxu0 0
        %1686 = vmatpush.bf16.msra.mxu0 0
        %1687 = vmatpush.bf16.msra.mxu0 0
        %1688 = vmatpush.bf16.msra.mxu0 0
        %1689 = vmatpush.bf16.msra.mxu0 0
        %1690 = vmatpush.bf16.msra.mxu0 %v1336
        %1691 = vmatpush.bf16.msra.mxu0 %v1334
        %1692 = vmatmul.bf16.gmra.mxu0 %v1612
        %v1693 = vpop.f32.mrf.mxu0
        %v1694 = vadd.f32 0.0, %v1693
        %v1695 = vpop.f32.mrf.mxu0
        %v1696 = vadd.f32 0.0, %v1695
        %1697 = vmatmul.bf16.gmra.mxu0 %v1615
        %v1698 = vpop.f32.mrf.mxu0
        %v1699 = vadd.f32 0.0, %v1698
        %v1700 = vpop.f32.mrf.mxu0
        %v1701 = vadd.f32 0.0, %v1700
        %1702 = vmatmul.bf16.gmra.mxu0 %v1618
        %v1703 = vpop.f32.mrf.mxu0
        %v1704 = vadd.f32 0.0, %v1703
        %v1705 = vpop.f32.mrf.mxu0
        %v1706 = vadd.f32 0.0, %v1705
        %1707 = vmatmul.bf16.gmra.mxu0 %v1621
        %v1708 = vpop.f32.mrf.mxu0
        %v1709 = vadd.f32 0.0, %v1708
        %v1710 = vpop.f32.mrf.mxu0
        %v1711 = vadd.f32 0.0, %v1710
        %1712 = vmatmul.bf16.gmra.mxu0 %v1624
        %v1713 = vpop.f32.mrf.mxu0
        %v1714 = vadd.f32 0.0, %v1713
        %v1715 = vpop.f32.mrf.mxu0
        %v1716 = vadd.f32 0.0, %v1715
        %1717 = vmatmul.bf16.gmra.mxu0 %v1627
        %v1718 = vpop.f32.mrf.mxu0
        %v1719 = vadd.f32 0.0, %v1718
        %v1720 = vpop.f32.mrf.mxu0
        %v1721 = vadd.f32 0.0, %v1720
        %1722 = vmatmul.bf16.gmra.mxu0 %v1630
        %v1723 = vpop.f32.mrf.mxu0
        %v1724 = vadd.f32 0.0, %v1723
        %v1725 = vpop.f32.mrf.mxu0
        %v1726 = vadd.f32 0.0, %v1725
        %1727 = vmatmul.bf16.gmra.mxu0 %v1633
        %v1728 = vpop.f32.mrf.mxu0
        %v1729 = vadd.f32 0.0, %v1728
        %v1730 = vpop.f32.mrf.mxu0
        %v1731 = vadd.f32 0.0, %v1730
        %1732 = vdwg.mxu0
        %v1733 = vadd.f32 %v1522, %v1645
        %v1734 = vadd.f32 %v1523, %v1694
        %v1735 = vadd.f32 %v1524, %v1647
        %v1736 = vadd.f32 %v1525, %v1696
        %v1737 = vadd.f32 %v1526, %v1650
        %v1738 = vadd.f32 %v1527, %v1699
        %v1739 = vadd.f32 %v1528, %v1652
        %v1740 = vadd.f32 %v1529, %v1701
        %v1741 = vadd.f32 %v1530, %v1655
        %v1742 = vadd.f32 %v1531, %v1704
        %v1743 = vadd.f32 %v1532, %v1657
        %v1744 = vadd.f32 %v1533, %v1706
        %v1745 = vadd.f32 %v1534, %v1660
        %v1746 = vadd.f32 %v1535, %v1709
        %v1747 = vadd.f32 %v1536, %v1662
        %v1748 = vadd.f32 %v1537, %v1711
        %v1749 = vadd.f32 %v1538, %v1665
        %v1750 = vadd.f32 %v1539, %v1714
        %v1751 = vadd.f32 %v1540, %v1667
        %v1752 = vadd.f32 %v1541, %v1716
        %v1753 = vadd.f32 %v1542, %v1670
        %v1754 = vadd.f32 %v1543, %v1719
        %v1755 = vadd.f32 %v1544, %v1672
        %v1756 = vadd.f32 %v1545, %v1721
        %v1757 = vadd.f32 %v1546, %v1675
        %v1758 = vadd.f32 %v1547, %v1724
        %v1759 = vadd.f32 %v1548, %v1677
        %v1760 = vadd.f32 %v1549, %v1726
        %v1761 = vadd.f32 %v1550, %v1680
        %v1762 = vadd.f32 %v1551, %v1729
        %v1763 = vadd.f32 %v1552, %v1682
        %v1764 = vadd.f32 %v1553, %v1731
        %1765 = vst [vmem:[#allocation1] ss:$2 sm:$0xff] %v356
        %v1766 = vld.sshfl [vmem:[#allocation1] sm:$0xff pattern:$0x75316420]
        %v1767 = vld.sshfl [vmem:[#allocation1 + $0x8] sm:$0xff pattern:$0x75316420]
        %1770 = vrot.lane.b32.xlu0 %v1766, 1
        %v1771 = vpop.permute.xlu0 %1770
        %1772 = vrot.lane.b32.xlu0 %v1767, 1
        %v1773 = vpop.permute.xlu0 %1772
        %vm1774 = vcmp.lt.s32.totalorder %v376, 1
        %v1775 = vsel %vm1774, %v1771, %v1773
        %v1776 = vsel %vm1774, %v1773, %v1771
        %1777 = vrot.lane.b32.xlu0 %v357, 1
        %v1778 = vpop.permute.xlu0 %1777
        %1779 = vrot.lane.b32.xlu0 %v359, 1
        %v1780 = vpop.permute.xlu0 %1779
        %1781 = vrot.lane.b32.xlu0 %v361, 1
        %v1782 = vpop.permute.xlu0 %1781
        %1783 = vrot.lane.b32.xlu0 %v363, 1
        %v1784 = vpop.permute.xlu0 %1783
        %1785 = vrot.lane.b32.xlu0 %v358, 1
        %v1786 = vpop.permute.xlu0 %1785
        %1787 = vrot.lane.b32.xlu0 %v360, 1
        %v1788 = vpop.permute.xlu0 %1787
        %1789 = vrot.lane.b32.xlu0 %v362, 1
        %v1790 = vpop.permute.xlu0 %1789
        %1791 = vrot.lane.b32.xlu0 %v364, 1
        %v1792 = vpop.permute.xlu0 %1791
        %v1793 = vsel %vm1774, %v1778, %v1786
        %v1794 = vsel %vm1774, %v1780, %v1788
        %v1795 = vsel %vm1774, %v1782, %v1790
        %v1796 = vsel %vm1774, %v1784, %v1792
        %v1797 = vsel %vm1774, %v1786, %v1778
        %v1798 = vsel %vm1774, %v1788, %v1780
        %v1799 = vsel %vm1774, %v1790, %v1782
        %v1800 = vsel %vm1774, %v1792, %v1784
        %s1801 = scalar_lea.vmem %s6, 6
        %v1802 = vld [vmem:[%s1801] sm:$0x3]
        %v1804 = vperm.slane %v1802, 0
        %v1805 = vperm.slane %v1802, 1
        %v1808 = vmul.f32 %v1776, %v1804
        %v1809 = vmul.f32 %v1775, %v1805
        %v1810 = vpack.c.bf16 %v1808, %v1808
        %v1811 = vpack.c.bf16 %v1809, %v1809
        %v1812 = vmul.f32 %v1797, %v1804
        %v1813 = vmul.f32 %v1793, %v1805
        %v1814 = vmul.f32 %v1798, %v1804
        %v1815 = vmul.f32 %v1794, %v1805
        %v1816 = vmul.f32 %v1799, %v1804
        %v1817 = vmul.f32 %v1795, %v1805
        %v1818 = vmul.f32 %v1800, %v1804
        %v1819 = vmul.f32 %v1796, %v1805
        %v1820 = vpack.c.bf16 %v1814, %v1812
        %v1821 = vpack.c.bf16 %v1815, %v1813
        %v1822 = vpack.c.bf16 %v1818, %v1816
        %v1823 = vpack.c.bf16 %v1819, %v1817
        %s1824 = scalar_lea.vmem %s3, 192
        %v1825 = vld [vmem:[%s1824] sm:$0xf]
        %v1826 = vld [vmem:[%s1824 + $0x4] sm:$0xf]
        %v1827 = vld [vmem:[%s1824 + $0x8] sm:$0xf]
        %v1828 = vld [vmem:[%s1824 + $0xc] sm:$0xf]
        %v1829 = vld [vmem:[%s1824 + $0x10] sm:$0xf]
        %v1830 = vld [vmem:[%s1824 + $0x14] sm:$0xf]
        %v1831 = vld [vmem:[%s1824 + $0x18] sm:$0xf]
        %v1832 = vld [vmem:[%s1824 + $0x1c] sm:$0xf]
        %v1833 = vld [vmem:[%s1824 + $0x20] sm:$0xf]
        %v1834 = vld [vmem:[%s1824 + $0x24] sm:$0xf]
        %v1835 = vld [vmem:[%s1824 + $0x28] sm:$0xf]
        %v1836 = vld [vmem:[%s1824 + $0x2c] sm:$0xf]
        %v1837 = vld [vmem:[%s1824 + $0x30] sm:$0xf]
        %v1838 = vld [vmem:[%s1824 + $0x34] sm:$0xf]
        %v1839 = vld [vmem:[%s1824 + $0x38] sm:$0xf]
        %v1840 = vld [vmem:[%s1824 + $0x3c] sm:$0xf]
        %v1857 = vunpack.c.l.b16 %v1825
        %v1858 = vunpack.c.l.b16 %v1826
        %v1859 = vunpack.c.l.b16 %v1827
        %v1860 = vunpack.c.l.b16 %v1828
        %v1861 = vunpack.c.l.b16 %v1829
        %v1862 = vunpack.c.l.b16 %v1830
        %v1863 = vunpack.c.l.b16 %v1831
        %v1864 = vunpack.c.l.b16 %v1832
        %v1865 = vunpack.c.l.b16 %v1833
        %v1866 = vunpack.c.l.b16 %v1834
        %v1867 = vunpack.c.l.b16 %v1835
        %v1868 = vunpack.c.l.b16 %v1836
        %v1869 = vunpack.c.l.b16 %v1837
        %v1870 = vunpack.c.l.b16 %v1838
        %v1871 = vunpack.c.l.b16 %v1839
        %v1872 = vunpack.c.l.b16 %v1840
        %v1873 = vpack.c.b16 %v1858, %v1857
        %v1874 = vpack.c.b16 %v1860, %v1859
        %v1875 = vpack.c.b16 %v1862, %v1861
        %v1876 = vpack.c.b16 %v1864, %v1863
        %v1877 = vpack.c.b16 %v1866, %v1865
        %v1878 = vpack.c.b16 %v1868, %v1867
        %v1879 = vpack.c.b16 %v1870, %v1869
        %v1880 = vpack.c.b16 %v1872, %v1871
        %v1882 = vsel %vm661, %v1873, 0
        %v1885 = vsel %vm661, %v1874, 0
        %v1888 = vsel %vm661, %v1875, 0
        %v1891 = vsel %vm661, %v1876, 0
        %v1894 = vsel %vm661, %v1877, 0
        %v1897 = vsel %vm661, %v1878, 0
        %v1900 = vsel %vm661, %v1879, 0
        %v1903 = vsel %vm661, %v1880, 0
        %v1906 = vsel %vm686, %v1810, 0
        %v1909 = vsel %vm686, %v1811, 0
        %1911 = vmatpush.bf16.msra.mxu0 0
        %1912 = vmatpush.bf16.msra.mxu0 0
        %1913 = vmatpush.bf16.msra.mxu0 0
        %1914 = vmatpush.bf16.msra.mxu0 0
        %1915 = vmatpush.bf16.msra.mxu0 0
        %1916 = vmatpush.bf16.msra.mxu0 0
        %1917 = vmatpush.bf16.msra.mxu0 0
        %1918 = vmatpush.bf16.msra.mxu0 %v1906
        %1919 = vmatmul.bf16.gmra.mxu0 %v1882
        %v1920 = vpop.f32.mrf.mxu0
        %v1921 = vadd.f32 0.0, %v1920
        %v1922 = vpop.f32.mrf.mxu0
        %v1923 = vadd.f32 0.0, %v1922
        %1924 = vmatmul.bf16.gmra.mxu0 %v1885
        %v1925 = vpop.f32.mrf.mxu0
        %v1926 = vadd.f32 0.0, %v1925
        %v1927 = vpop.f32.mrf.mxu0
        %v1928 = vadd.f32 0.0, %v1927
        %1929 = vmatmul.bf16.gmra.mxu0 %v1888
        %v1930 = vpop.f32.mrf.mxu0
        %v1931 = vadd.f32 0.0, %v1930
        %v1932 = vpop.f32.mrf.mxu0
        %v1933 = vadd.f32 0.0, %v1932
        %1934 = vmatmul.bf16.gmra.mxu0 %v1891
        %v1935 = vpop.f32.mrf.mxu0
        %v1936 = vadd.f32 0.0, %v1935
        %v1937 = vpop.f32.mrf.mxu0
        %v1938 = vadd.f32 0.0, %v1937
        %1939 = vmatmul.bf16.gmra.mxu0 %v1894
        %v1940 = vpop.f32.mrf.mxu0
        %v1941 = vadd.f32 0.0, %v1940
        %v1942 = vpop.f32.mrf.mxu0
        %v1943 = vadd.f32 0.0, %v1942
        %1944 = vmatmul.bf16.gmra.mxu0 %v1897
        %v1945 = vpop.f32.mrf.mxu0
        %v1946 = vadd.f32 0.0, %v1945
        %v1947 = vpop.f32.mrf.mxu0
        %v1948 = vadd.f32 0.0, %v1947
        %1949 = vmatmul.bf16.gmra.mxu0 %v1900
        %v1950 = vpop.f32.mrf.mxu0
        %v1951 = vadd.f32 0.0, %v1950
        %v1952 = vpop.f32.mrf.mxu0
        %v1953 = vadd.f32 0.0, %v1952
        %1954 = vmatmul.bf16.gmra.mxu0 %v1903
        %v1955 = vpop.f32.mrf.mxu0
        %v1956 = vadd.f32 0.0, %v1955
        %v1957 = vpop.f32.mrf.mxu0
        %v1958 = vadd.f32 0.0, %v1957
        %1959 = vdwg.mxu0
        %1960 = vmatpush.bf16.msra.mxu0 0
        %1961 = vmatpush.bf16.msra.mxu0 0
        %1962 = vmatpush.bf16.msra.mxu0 0
        %1963 = vmatpush.bf16.msra.mxu0 0
        %1964 = vmatpush.bf16.msra.mxu0 0
        %1965 = vmatpush.bf16.msra.mxu0 0
        %1966 = vmatpush.bf16.msra.mxu0 0
        %1967 = vmatpush.bf16.msra.mxu0 %v1909
        %1968 = vmatmul.bf16.gmra.mxu0 %v1882
        %v1969 = vpop.f32.mrf.mxu0
        %v1970 = vadd.f32 0.0, %v1969
        %v1971 = vpop.f32.mrf.mxu0
        %v1972 = vadd.f32 0.0, %v1971
        %1973 = vmatmul.bf16.gmra.mxu0 %v1885
        %v1974 = vpop.f32.mrf.mxu0
        %v1975 = vadd.f32 0.0, %v1974
        %v1976 = vpop.f32.mrf.mxu0
        %v1977 = vadd.f32 0.0, %v1976
        %1978 = vmatmul.bf16.gmra.mxu0 %v1888
        %v1979 = vpop.f32.mrf.mxu0
        %v1980 = vadd.f32 0.0, %v1979
        %v1981 = vpop.f32.mrf.mxu0
        %v1982 = vadd.f32 0.0, %v1981
        %1983 = vmatmul.bf16.gmra.mxu0 %v1891
        %v1984 = vpop.f32.mrf.mxu0
        %v1985 = vadd.f32 0.0, %v1984
        %v1986 = vpop.f32.mrf.mxu0
        %v1987 = vadd.f32 0.0, %v1986
        %1988 = vmatmul.bf16.gmra.mxu0 %v1894
        %v1989 = vpop.f32.mrf.mxu0
        %v1990 = vadd.f32 0.0, %v1989
        %v1991 = vpop.f32.mrf.mxu0
        %v1992 = vadd.f32 0.0, %v1991
        %1993 = vmatmul.bf16.gmra.mxu0 %v1897
        %v1994 = vpop.f32.mrf.mxu0
        %v1995 = vadd.f32 0.0, %v1994
        %v1996 = vpop.f32.mrf.mxu0
        %v1997 = vadd.f32 0.0, %v1996
        %1998 = vmatmul.bf16.gmra.mxu0 %v1900
        %v1999 = vpop.f32.mrf.mxu0
        %v2000 = vadd.f32 0.0, %v1999
        %v2001 = vpop.f32.mrf.mxu0
        %v2002 = vadd.f32 0.0, %v2001
        %2003 = vmatmul.bf16.gmra.mxu0 %v1903
        %v2004 = vpop.f32.mrf.mxu0
        %v2005 = vadd.f32 0.0, %v2004
        %v2006 = vpop.f32.mrf.mxu0
        %v2007 = vadd.f32 0.0, %v2006
        %2008 = vdwg.mxu0
        %v2009 = vadd.f32 %v1733, %v1921
        %v2010 = vadd.f32 %v1734, %v1970
        %v2011 = vadd.f32 %v1735, %v1923
        %v2012 = vadd.f32 %v1736, %v1972
        %v2013 = vadd.f32 %v1737, %v1926
        %v2014 = vadd.f32 %v1738, %v1975
        %v2015 = vadd.f32 %v1739, %v1928
        %v2016 = vadd.f32 %v1740, %v1977
        %v2017 = vadd.f32 %v1741, %v1931
        %v2018 = vadd.f32 %v1742, %v1980
        %v2019 = vadd.f32 %v1743, %v1933
        %v2020 = vadd.f32 %v1744, %v1982
        %v2021 = vadd.f32 %v1745, %v1936
        %v2022 = vadd.f32 %v1746, %v1985
        %v2023 = vadd.f32 %v1747, %v1938
        %v2024 = vadd.f32 %v1748, %v1987
        %v2025 = vadd.f32 %v1749, %v1941
        %v2026 = vadd.f32 %v1750, %v1990
        %v2027 = vadd.f32 %v1751, %v1943
        %v2028 = vadd.f32 %v1752, %v1992
        %v2029 = vadd.f32 %v1753, %v1946
        %v2030 = vadd.f32 %v1754, %v1995
        %v2031 = vadd.f32 %v1755, %v1948
        %v2032 = vadd.f32 %v1756, %v1997
        %v2033 = vadd.f32 %v1757, %v1951
        %v2034 = vadd.f32 %v1758, %v2000
        %v2035 = vadd.f32 %v1759, %v1953
        %v2036 = vadd.f32 %v1760, %v2002
        %v2037 = vadd.f32 %v1761, %v1956
        %v2038 = vadd.f32 %v1762, %v2005
        %v2039 = vadd.f32 %v1763, %v1958
        %v2040 = vadd.f32 %v1764, %v2007
        %s2041 = scalar_lea.vmem %s4, 192
        %v2042 = vld [vmem:[%s2041] sm:$0xf]
        %v2043 = vld [vmem:[%s2041 + $0x4] sm:$0xf]
        %v2044 = vld [vmem:[%s2041 + $0x8] sm:$0xf]
        %v2045 = vld [vmem:[%s2041 + $0xc] sm:$0xf]
        %v2046 = vld [vmem:[%s2041 + $0x10] sm:$0xf]
        %v2047 = vld [vmem:[%s2041 + $0x14] sm:$0xf]
        %v2048 = vld [vmem:[%s2041 + $0x18] sm:$0xf]
        %v2049 = vld [vmem:[%s2041 + $0x1c] sm:$0xf]
        %v2050 = vld [vmem:[%s2041 + $0x20] sm:$0xf]
        %v2051 = vld [vmem:[%s2041 + $0x24] sm:$0xf]
        %v2052 = vld [vmem:[%s2041 + $0x28] sm:$0xf]
        %v2053 = vld [vmem:[%s2041 + $0x2c] sm:$0xf]
        %v2054 = vld [vmem:[%s2041 + $0x30] sm:$0xf]
        %v2055 = vld [vmem:[%s2041 + $0x34] sm:$0xf]
        %v2056 = vld [vmem:[%s2041 + $0x38] sm:$0xf]
        %v2057 = vld [vmem:[%s2041 + $0x3c] sm:$0xf]
        %v2074 = vunpack.c.l.b16 %v2042
        %v2075 = vunpack.c.l.b16 %v2043
        %v2076 = vunpack.c.l.b16 %v2044
        %v2077 = vunpack.c.l.b16 %v2045
        %v2078 = vunpack.c.l.b16 %v2046
        %v2079 = vunpack.c.l.b16 %v2047
        %v2080 = vunpack.c.l.b16 %v2048
        %v2081 = vunpack.c.l.b16 %v2049
        %v2082 = vunpack.c.l.b16 %v2050
        %v2083 = vunpack.c.l.b16 %v2051
        %v2084 = vunpack.c.l.b16 %v2052
        %v2085 = vunpack.c.l.b16 %v2053
        %v2086 = vunpack.c.l.b16 %v2054
        %v2087 = vunpack.c.l.b16 %v2055
        %v2088 = vunpack.c.l.b16 %v2056
        %v2089 = vunpack.c.l.b16 %v2057
        %v2090 = vpack.c.b16 %v2075, %v2074
        %v2091 = vpack.c.b16 %v2077, %v2076
        %v2092 = vpack.c.b16 %v2079, %v2078
        %v2093 = vpack.c.b16 %v2081, %v2080
        %v2094 = vpack.c.b16 %v2083, %v2082
        %v2095 = vpack.c.b16 %v2085, %v2084
        %v2096 = vpack.c.b16 %v2087, %v2086
        %v2097 = vpack.c.b16 %v2089, %v2088
        %v2099 = vsel %vm498, %v2090, 0
        %v2102 = vsel %vm498, %v2091, 0
        %v2105 = vsel %vm498, %v2092, 0
        %v2108 = vsel %vm498, %v2093, 0
        %v2111 = vsel %vm498, %v2094, 0
        %v2114 = vsel %vm498, %v2095, 0
        %v2117 = vsel %vm498, %v2096, 0
        %v2120 = vsel %vm498, %v2097, 0
        %2122 = vmatpush.bf16.msra.mxu0 0
        %2123 = vmatpush.bf16.msra.mxu0 0
        %2124 = vmatpush.bf16.msra.mxu0 0
        %2125 = vmatpush.bf16.msra.mxu0 0
        %2126 = vmatpush.bf16.msra.mxu0 0
        %2127 = vmatpush.bf16.msra.mxu0 0
        %2128 = vmatpush.bf16.msra.mxu0 %v1822
        %2129 = vmatpush.bf16.msra.mxu0 %v1820
        %2130 = vmatmul.bf16.gmra.mxu0 %v2099
        %v2131 = vpop.f32.mrf.mxu0
        %v2132 = vadd.f32 0.0, %v2131
        %v2133 = vpop.f32.mrf.mxu0
        %v2134 = vadd.f32 0.0, %v2133
        %2135 = vmatmul.bf16.gmra.mxu0 %v2102
        %v2136 = vpop.f32.mrf.mxu0
        %v2137 = vadd.f32 0.0, %v2136
        %v2138 = vpop.f32.mrf.mxu0
        %v2139 = vadd.f32 0.0, %v2138
        %2140 = vmatmul.bf16.gmra.mxu0 %v2105
        %v2141 = vpop.f32.mrf.mxu0
        %v2142 = vadd.f32 0.0, %v2141
        %v2143 = vpop.f32.mrf.mxu0
        %v2144 = vadd.f32 0.0, %v2143
        %2145 = vmatmul.bf16.gmra.mxu0 %v2108
        %v2146 = vpop.f32.mrf.mxu0
        %v2147 = vadd.f32 0.0, %v2146
        %v2148 = vpop.f32.mrf.mxu0
        %v2149 = vadd.f32 0.0, %v2148
        %2150 = vmatmul.bf16.gmra.mxu0 %v2111
        %v2151 = vpop.f32.mrf.mxu0
        %v2152 = vadd.f32 0.0, %v2151
        %v2153 = vpop.f32.mrf.mxu0
        %v2154 = vadd.f32 0.0, %v2153
        %2155 = vmatmul.bf16.gmra.mxu0 %v2114
        %v2156 = vpop.f32.mrf.mxu0
        %v2157 = vadd.f32 0.0, %v2156
        %v2158 = vpop.f32.mrf.mxu0
        %v2159 = vadd.f32 0.0, %v2158
        %2160 = vmatmul.bf16.gmra.mxu0 %v2117
        %v2161 = vpop.f32.mrf.mxu0
        %v2162 = vadd.f32 0.0, %v2161
        %v2163 = vpop.f32.mrf.mxu0
        %v2164 = vadd.f32 0.0, %v2163
        %2165 = vmatmul.bf16.gmra.mxu0 %v2120
        %v2166 = vpop.f32.mrf.mxu0
        %v2167 = vadd.f32 0.0, %v2166
        %v2168 = vpop.f32.mrf.mxu0
        %v2169 = vadd.f32 0.0, %v2168
        %2170 = vdwg.mxu0
        %2171 = vmatpush.bf16.msra.mxu0 0
        %2172 = vmatpush.bf16.msra.mxu0 0
        %2173 = vmatpush.bf16.msra.mxu0 0
        %2174 = vmatpush.bf16.msra.mxu0 0
        %2175 = vmatpush.bf16.msra.mxu0 0
        %2176 = vmatpush.bf16.msra.mxu0 0
        %2177 = vmatpush.bf16.msra.mxu0 %v1823
        %2178 = vmatpush.bf16.msra.mxu0 %v1821
        %2179 = vmatmul.bf16.gmra.mxu0 %v2099
        %v2180 = vpop.f32.mrf.mxu0
        %v2181 = vadd.f32 0.0, %v2180
        %v2182 = vpop.f32.mrf.mxu0
        %v2183 = vadd.f32 0.0, %v2182
        %2184 = vmatmul.bf16.gmra.mxu0 %v2102
        %v2185 = vpop.f32.mrf.mxu0
        %v2186 = vadd.f32 0.0, %v2185
        %v2187 = vpop.f32.mrf.mxu0
        %v2188 = vadd.f32 0.0, %v2187
        %2189 = vmatmul.bf16.gmra.mxu0 %v2105
        %v2190 = vpop.f32.mrf.mxu0
        %v2191 = vadd.f32 0.0, %v2190
        %v2192 = vpop.f32.mrf.mxu0
        %v2193 = vadd.f32 0.0, %v2192
        %2194 = vmatmul.bf16.gmra.mxu0 %v2108
        %v2195 = vpop.f32.mrf.mxu0
        %v2196 = vadd.f32 0.0, %v2195
        %v2197 = vpop.f32.mrf.mxu0
        %v2198 = vadd.f32 0.0, %v2197
        %2199 = vmatmul.bf16.gmra.mxu0 %v2111
        %v2200 = vpop.f32.mrf.mxu0
        %v2201 = vadd.f32 0.0, %v2200
        %v2202 = vpop.f32.mrf.mxu0
        %v2203 = vadd.f32 0.0, %v2202
        %2204 = vmatmul.bf16.gmra.mxu0 %v2114
        %v2205 = vpop.f32.mrf.mxu0
        %v2206 = vadd.f32 0.0, %v2205
        %v2207 = vpop.f32.mrf.mxu0
        %v2208 = vadd.f32 0.0, %v2207
        %2209 = vmatmul.bf16.gmra.mxu0 %v2117
        %v2210 = vpop.f32.mrf.mxu0
        %v2211 = vadd.f32 0.0, %v2210
        %v2212 = vpop.f32.mrf.mxu0
        %v2213 = vadd.f32 0.0, %v2212
        %2214 = vmatmul.bf16.gmra.mxu0 %v2120
        %v2215 = vpop.f32.mrf.mxu0
        %v2216 = vadd.f32 0.0, %v2215
        %v2217 = vpop.f32.mrf.mxu0
        %v2218 = vadd.f32 0.0, %v2217
        %2219 = vdwg.mxu0
        %v2220 = vadd.f32 %v2009, %v2132
        %v2221 = vadd.f32 %v2010, %v2181
        %v2222 = vadd.f32 %v2011, %v2134
        %v2223 = vadd.f32 %v2012, %v2183
        %v2224 = vadd.f32 %v2013, %v2137
        %v2225 = vadd.f32 %v2014, %v2186
        %v2226 = vadd.f32 %v2015, %v2139
        %v2227 = vadd.f32 %v2016, %v2188
        %v2228 = vadd.f32 %v2017, %v2142
        %v2229 = vadd.f32 %v2018, %v2191
        %v2230 = vadd.f32 %v2019, %v2144
        %v2231 = vadd.f32 %v2020, %v2193
        %v2232 = vadd.f32 %v2021, %v2147
        %v2233 = vadd.f32 %v2022, %v2196
        %v2234 = vadd.f32 %v2023, %v2149
        %v2235 = vadd.f32 %v2024, %v2198
        %v2236 = vadd.f32 %v2025, %v2152
        %v2237 = vadd.f32 %v2026, %v2201
        %v2238 = vadd.f32 %v2027, %v2154
        %v2239 = vadd.f32 %v2028, %v2203
        %v2240 = vadd.f32 %v2029, %v2157
        %v2241 = vadd.f32 %v2030, %v2206
        %v2242 = vadd.f32 %v2031, %v2159
        %v2243 = vadd.f32 %v2032, %v2208
        %v2244 = vadd.f32 %v2033, %v2162
        %v2245 = vadd.f32 %v2034, %v2211
        %v2246 = vadd.f32 %v2035, %v2164
        %v2247 = vadd.f32 %v2036, %v2213
        %v2248 = vadd.f32 %v2037, %v2167
        %v2249 = vadd.f32 %v2038, %v2216
        %v2250 = vadd.f32 %v2039, %v2169
        %v2251 = vadd.f32 %v2040, %v2218
        %s2252 = scalar_lea.vmem %s6, 8
        %v2253 = vld [vmem:[%s2252] sm:$0x3]
        %v2255 = vperm.slane %v2253, 0
        %v2256 = vperm.slane %v2253, 1
        %v2257 = vrot.slane %v2256, 4
        %vm2258 = vcmask 1043456
        %v2259 = vsel %vm2258, %v2255, %v2257
        %v2261 = vmul.f32 %v356, %v2259
        %2263 = vst [vmem:[#allocation1] ss:$2 sm:$0xff] %v2261
        %v2264 = vld.sshfl [vmem:[#allocation1] sm:$0xff pattern:$0x75316420]
        %v2265 = vld.sshfl [vmem:[#allocation1 + $0x8] sm:$0xff pattern:$0x75316420]
        %v2268 = vpack.c.bf16 %v2264, %v2264
        %v2269 = vpack.c.bf16 %v2265, %v2265
        %v2272 = vmul.f32 %v357, %v2255
        %v2273 = vmul.f32 %v358, %v2256
        %v2274 = vmul.f32 %v359, %v2255
        %v2275 = vmul.f32 %v360, %v2256
        %v2276 = vmul.f32 %v361, %v2255
        %v2277 = vmul.f32 %v362, %v2256
        %v2278 = vmul.f32 %v363, %v2255
        %v2279 = vmul.f32 %v364, %v2256
        %v2280 = vpack.c.bf16 %v2274, %v2272
        %v2281 = vpack.c.bf16 %v2275, %v2273
        %v2282 = vpack.c.bf16 %v2278, %v2276
        %v2283 = vpack.c.bf16 %v2279, %v2277
        %s2284 = scalar_lea.vmem %s3, 256
        %v2285 = vld [vmem:[%s2284] sm:$0xf]
        %v2286 = vld [vmem:[%s2284 + $0x4] sm:$0xf]
        %v2287 = vld [vmem:[%s2284 + $0x8] sm:$0xf]
        %v2288 = vld [vmem:[%s2284 + $0xc] sm:$0xf]
        %v2289 = vld [vmem:[%s2284 + $0x10] sm:$0xf]
        %v2290 = vld [vmem:[%s2284 + $0x14] sm:$0xf]
        %v2291 = vld [vmem:[%s2284 + $0x18] sm:$0xf]
        %v2292 = vld [vmem:[%s2284 + $0x1c] sm:$0xf]
        %v2293 = vld [vmem:[%s2284 + $0x20] sm:$0xf]
        %v2294 = vld [vmem:[%s2284 + $0x24] sm:$0xf]
        %v2295 = vld [vmem:[%s2284 + $0x28] sm:$0xf]
        %v2296 = vld [vmem:[%s2284 + $0x2c] sm:$0xf]
        %v2297 = vld [vmem:[%s2284 + $0x30] sm:$0xf]
        %v2298 = vld [vmem:[%s2284 + $0x34] sm:$0xf]
        %v2299 = vld [vmem:[%s2284 + $0x38] sm:$0xf]
        %v2300 = vld [vmem:[%s2284 + $0x3c] sm:$0xf]
        %v2317 = vunpack.c.l.b16 %v2285
        %v2318 = vunpack.c.l.b16 %v2286
        %v2319 = vunpack.c.l.b16 %v2287
        %v2320 = vunpack.c.l.b16 %v2288
        %v2321 = vunpack.c.l.b16 %v2289
        %v2322 = vunpack.c.l.b16 %v2290
        %v2323 = vunpack.c.l.b16 %v2291
        %v2324 = vunpack.c.l.b16 %v2292
        %v2325 = vunpack.c.l.b16 %v2293
        %v2326 = vunpack.c.l.b16 %v2294
        %v2327 = vunpack.c.l.b16 %v2295
        %v2328 = vunpack.c.l.b16 %v2296
        %v2329 = vunpack.c.l.b16 %v2297
        %v2330 = vunpack.c.l.b16 %v2298
        %v2331 = vunpack.c.l.b16 %v2299
        %v2332 = vunpack.c.l.b16 %v2300
        %v2333 = vpack.c.b16 %v2318, %v2317
        %v2334 = vpack.c.b16 %v2320, %v2319
        %v2335 = vpack.c.b16 %v2322, %v2321
        %v2336 = vpack.c.b16 %v2324, %v2323
        %v2337 = vpack.c.b16 %v2326, %v2325
        %v2338 = vpack.c.b16 %v2328, %v2327
        %v2339 = vpack.c.b16 %v2330, %v2329
        %v2340 = vpack.c.b16 %v2332, %v2331
        %v2342 = vsel %vm661, %v2333, 0
        %v2345 = vsel %vm661, %v2334, 0
        %v2348 = vsel %vm661, %v2335, 0
        %v2351 = vsel %vm661, %v2336, 0
        %v2354 = vsel %vm661, %v2337, 0
        %v2357 = vsel %vm661, %v2338, 0
        %v2360 = vsel %vm661, %v2339, 0
        %v2363 = vsel %vm661, %v2340, 0
        %v2366 = vsel %vm686, %v2268, 0
        %v2369 = vsel %vm686, %v2269, 0
        %2371 = vmatpush.bf16.msra.mxu0 0
        %2372 = vmatpush.bf16.msra.mxu0 0
        %2373 = vmatpush.bf16.msra.mxu0 0
        %2374 = vmatpush.bf16.msra.mxu0 0
        %2375 = vmatpush.bf16.msra.mxu0 0
        %2376 = vmatpush.bf16.msra.mxu0 0
        %2377 = vmatpush.bf16.msra.mxu0 0
        %2378 = vmatpush.bf16.msra.mxu0 %v2366
        %2379 = vmatmul.bf16.gmra.mxu0 %v2342
        %v2380 = vpop.f32.mrf.mxu0
        %v2381 = vadd.f32 0.0, %v2380
        %v2382 = vpop.f32.mrf.mxu0
        %v2383 = vadd.f32 0.0, %v2382
        %2384 = vmatmul.bf16.gmra.mxu0 %v2345
        %v2385 = vpop.f32.mrf.mxu0
        %v2386 = vadd.f32 0.0, %v2385
        %v2387 = vpop.f32.mrf.mxu0
        %v2388 = vadd.f32 0.0, %v2387
        %2389 = vmatmul.bf16.gmra.mxu0 %v2348
        %v2390 = vpop.f32.mrf.mxu0
        %v2391 = vadd.f32 0.0, %v2390
        %v2392 = vpop.f32.mrf.mxu0
        %v2393 = vadd.f32 0.0, %v2392
        %2394 = vmatmul.bf16.gmra.mxu0 %v2351
        %v2395 = vpop.f32.mrf.mxu0
        %v2396 = vadd.f32 0.0, %v2395
        %v2397 = vpop.f32.mrf.mxu0
        %v2398 = vadd.f32 0.0, %v2397
        %2399 = vmatmul.bf16.gmra.mxu0 %v2354
        %v2400 = vpop.f32.mrf.mxu0
        %v2401 = vadd.f32 0.0, %v2400
        %v2402 = vpop.f32.mrf.mxu0
        %v2403 = vadd.f32 0.0, %v2402
        %2404 = vmatmul.bf16.gmra.mxu0 %v2357
        %v2405 = vpop.f32.mrf.mxu0
        %v2406 = vadd.f32 0.0, %v2405
        %v2407 = vpop.f32.mrf.mxu0
        %v2408 = vadd.f32 0.0, %v2407
        %2409 = vmatmul.bf16.gmra.mxu0 %v2360
        %v2410 = vpop.f32.mrf.mxu0
        %v2411 = vadd.f32 0.0, %v2410
        %v2412 = vpop.f32.mrf.mxu0
        %v2413 = vadd.f32 0.0, %v2412
        %2414 = vmatmul.bf16.gmra.mxu0 %v2363
        %v2415 = vpop.f32.mrf.mxu0
        %v2416 = vadd.f32 0.0, %v2415
        %v2417 = vpop.f32.mrf.mxu0
        %v2418 = vadd.f32 0.0, %v2417
        %2419 = vdwg.mxu0
        %2420 = vmatpush.bf16.msra.mxu0 0
        %2421 = vmatpush.bf16.msra.mxu0 0
        %2422 = vmatpush.bf16.msra.mxu0 0
        %2423 = vmatpush.bf16.msra.mxu0 0
        %2424 = vmatpush.bf16.msra.mxu0 0
        %2425 = vmatpush.bf16.msra.mxu0 0
        %2426 = vmatpush.bf16.msra.mxu0 0
        %2427 = vmatpush.bf16.msra.mxu0 %v2369
        %2428 = vmatmul.bf16.gmra.mxu0 %v2342
        %v2429 = vpop.f32.mrf.mxu0
        %v2430 = vadd.f32 0.0, %v2429
        %v2431 = vpop.f32.mrf.mxu0
        %v2432 = vadd.f32 0.0, %v2431
        %2433 = vmatmul.bf16.gmra.mxu0 %v2345
        %v2434 = vpop.f32.mrf.mxu0
        %v2435 = vadd.f32 0.0, %v2434
        %v2436 = vpop.f32.mrf.mxu0
        %v2437 = vadd.f32 0.0, %v2436
        %2438 = vmatmul.bf16.gmra.mxu0 %v2348
        %v2439 = vpop.f32.mrf.mxu0
        %v2440 = vadd.f32 0.0, %v2439
        %v2441 = vpop.f32.mrf.mxu0
        %v2442 = vadd.f32 0.0, %v2441
        %2443 = vmatmul.bf16.gmra.mxu0 %v2351
        %v2444 = vpop.f32.mrf.mxu0
        %v2445 = vadd.f32 0.0, %v2444
        %v2446 = vpop.f32.mrf.mxu0
        %v2447 = vadd.f32 0.0, %v2446
        %2448 = vmatmul.bf16.gmra.mxu0 %v2354
        %v2449 = vpop.f32.mrf.mxu0
        %v2450 = vadd.f32 0.0, %v2449
        %v2451 = vpop.f32.mrf.mxu0
        %v2452 = vadd.f32 0.0, %v2451
        %2453 = vmatmul.bf16.gmra.mxu0 %v2357
        %v2454 = vpop.f32.mrf.mxu0
        %v2455 = vadd.f32 0.0, %v2454
        %v2456 = vpop.f32.mrf.mxu0
        %v2457 = vadd.f32 0.0, %v2456
        %2458 = vmatmul.bf16.gmra.mxu0 %v2360
        %v2459 = vpop.f32.mrf.mxu0
        %v2460 = vadd.f32 0.0, %v2459
        %v2461 = vpop.f32.mrf.mxu0
        %v2462 = vadd.f32 0.0, %v2461
        %2463 = vmatmul.bf16.gmra.mxu0 %v2363
        %v2464 = vpop.f32.mrf.mxu0
        %v2465 = vadd.f32 0.0, %v2464
        %v2466 = vpop.f32.mrf.mxu0
        %v2467 = vadd.f32 0.0, %v2466
        %2468 = vdwg.mxu0
        %v2469 = vadd.f32 %v2220, %v2381
        %v2470 = vadd.f32 %v2221, %v2430
        %v2471 = vadd.f32 %v2222, %v2383
        %v2472 = vadd.f32 %v2223, %v2432
        %v2473 = vadd.f32 %v2224, %v2386
        %v2474 = vadd.f32 %v2225, %v2435
        %v2475 = vadd.f32 %v2226, %v2388
        %v2476 = vadd.f32 %v2227, %v2437
        %v2477 = vadd.f32 %v2228, %v2391
        %v2478 = vadd.f32 %v2229, %v2440
        %v2479 = vadd.f32 %v2230, %v2393
        %v2480 = vadd.f32 %v2231, %v2442
        %v2481 = vadd.f32 %v2232, %v2396
        %v2482 = vadd.f32 %v2233, %v2445
        %v2483 = vadd.f32 %v2234, %v2398
        %v2484 = vadd.f32 %v2235, %v2447
        %v2485 = vadd.f32 %v2236, %v2401
        %v2486 = vadd.f32 %v2237, %v2450
        %v2487 = vadd.f32 %v2238, %v2403
        %v2488 = vadd.f32 %v2239, %v2452
        %v2489 = vadd.f32 %v2240, %v2406
        %v2490 = vadd.f32 %v2241, %v2455
        %v2491 = vadd.f32 %v2242, %v2408
        %v2492 = vadd.f32 %v2243, %v2457
        %v2493 = vadd.f32 %v2244, %v2411
        %v2494 = vadd.f32 %v2245, %v2460
        %v2495 = vadd.f32 %v2246, %v2413
        %v2496 = vadd.f32 %v2247, %v2462
        %v2497 = vadd.f32 %v2248, %v2416
        %v2498 = vadd.f32 %v2249, %v2465
        %v2499 = vadd.f32 %v2250, %v2418
        %v2500 = vadd.f32 %v2251, %v2467
        %s2501 = scalar_lea.vmem %s4, 256
        %v2502 = vld [vmem:[%s2501] sm:$0xf]
        %v2503 = vld [vmem:[%s2501 + $0x4] sm:$0xf]
        %v2504 = vld [vmem:[%s2501 + $0x8] sm:$0xf]
        %v2505 = vld [vmem:[%s2501 + $0xc] sm:$0xf]
        %v2506 = vld [vmem:[%s2501 + $0x10] sm:$0xf]
        %v2507 = vld [vmem:[%s2501 + $0x14] sm:$0xf]
        %v2508 = vld [vmem:[%s2501 + $0x18] sm:$0xf]
        %v2509 = vld [vmem:[%s2501 + $0x1c] sm:$0xf]
        %v2510 = vld [vmem:[%s2501 + $0x20] sm:$0xf]
        %v2511 = vld [vmem:[%s2501 + $0x24] sm:$0xf]
        %v2512 = vld [vmem:[%s2501 + $0x28] sm:$0xf]
        %v2513 = vld [vmem:[%s2501 + $0x2c] sm:$0xf]
        %v2514 = vld [vmem:[%s2501 + $0x30] sm:$0xf]
        %v2515 = vld [vmem:[%s2501 + $0x34] sm:$0xf]
        %v2516 = vld [vmem:[%s2501 + $0x38] sm:$0xf]
        %v2517 = vld [vmem:[%s2501 + $0x3c] sm:$0xf]
        %v2534 = vunpack.c.l.b16 %v2502
        %v2535 = vunpack.c.l.b16 %v2503
        %v2536 = vunpack.c.l.b16 %v2504
        %v2537 = vunpack.c.l.b16 %v2505
        %v2538 = vunpack.c.l.b16 %v2506
        %v2539 = vunpack.c.l.b16 %v2507
        %v2540 = vunpack.c.l.b16 %v2508
        %v2541 = vunpack.c.l.b16 %v2509
        %v2542 = vunpack.c.l.b16 %v2510
        %v2543 = vunpack.c.l.b16 %v2511
        %v2544 = vunpack.c.l.b16 %v2512
        %v2545 = vunpack.c.l.b16 %v2513
        %v2546 = vunpack.c.l.b16 %v2514
        %v2547 = vunpack.c.l.b16 %v2515
        %v2548 = vunpack.c.l.b16 %v2516
        %v2549 = vunpack.c.l.b16 %v2517
        %v2550 = vpack.c.b16 %v2535, %v2534
        %v2551 = vpack.c.b16 %v2537, %v2536
        %v2552 = vpack.c.b16 %v2539, %v2538
        %v2553 = vpack.c.b16 %v2541, %v2540
        %v2554 = vpack.c.b16 %v2543, %v2542
        %v2555 = vpack.c.b16 %v2545, %v2544
        %v2556 = vpack.c.b16 %v2547, %v2546
        %v2557 = vpack.c.b16 %v2549, %v2548
        %v2559 = vsel %vm498, %v2550, 0
        %v2562 = vsel %vm498, %v2551, 0
        %v2565 = vsel %vm498, %v2552, 0
        %v2568 = vsel %vm498, %v2553, 0
        %v2571 = vsel %vm498, %v2554, 0
        %v2574 = vsel %vm498, %v2555, 0
        %v2577 = vsel %vm498, %v2556, 0
        %v2580 = vsel %vm498, %v2557, 0
        %2582 = vmatpush.bf16.msra.mxu0 0
        %2583 = vmatpush.bf16.msra.mxu0 0
        %2584 = vmatpush.bf16.msra.mxu0 0
        %2585 = vmatpush.bf16.msra.mxu0 0
        %2586 = vmatpush.bf16.msra.mxu0 0
        %2587 = vmatpush.bf16.msra.mxu0 0
        %2588 = vmatpush.bf16.msra.mxu0 %v2282
        %2589 = vmatpush.bf16.msra.mxu0 %v2280
        %2590 = vmatmul.bf16.gmra.mxu0 %v2559
        %v2591 = vpop.f32.mrf.mxu0
        %v2592 = vadd.f32 0.0, %v2591
        %v2593 = vpop.f32.mrf.mxu0
        %v2594 = vadd.f32 0.0, %v2593
        %2595 = vmatmul.bf16.gmra.mxu0 %v2562
        %v2596 = vpop.f32.mrf.mxu0
        %v2597 = vadd.f32 0.0, %v2596
        %v2598 = vpop.f32.mrf.mxu0
        %v2599 = vadd.f32 0.0, %v2598
        %2600 = vmatmul.bf16.gmra.mxu0 %v2565
        %v2601 = vpop.f32.mrf.mxu0
        %v2602 = vadd.f32 0.0, %v2601
        %v2603 = vpop.f32.mrf.mxu0
        %v2604 = vadd.f32 0.0, %v2603
        %2605 = vmatmul.bf16.gmra.mxu0 %v2568
        %v2606 = vpop.f32.mrf.mxu0
        %v2607 = vadd.f32 0.0, %v2606
        %v2608 = vpop.f32.mrf.mxu0
        %v2609 = vadd.f32 0.0, %v2608
        %2610 = vmatmul.bf16.gmra.mxu0 %v2571
        %v2611 = vpop.f32.mrf.mxu0
        %v2612 = vadd.f32 0.0, %v2611
        %v2613 = vpop.f32.mrf.mxu0
        %v2614 = vadd.f32 0.0, %v2613
        %2615 = vmatmul.bf16.gmra.mxu0 %v2574
        %v2616 = vpop.f32.mrf.mxu0
        %v2617 = vadd.f32 0.0, %v2616
        %v2618 = vpop.f32.mrf.mxu0
        %v2619 = vadd.f32 0.0, %v2618
        %2620 = vmatmul.bf16.gmra.mxu0 %v2577
        %v2621 = vpop.f32.mrf.mxu0
        %v2622 = vadd.f32 0.0, %v2621
        %v2623 = vpop.f32.mrf.mxu0
        %v2624 = vadd.f32 0.0, %v2623
        %2625 = vmatmul.bf16.gmra.mxu0 %v2580
        %v2626 = vpop.f32.mrf.mxu0
        %v2627 = vadd.f32 0.0, %v2626
        %v2628 = vpop.f32.mrf.mxu0
        %v2629 = vadd.f32 0.0, %v2628
        %2630 = vdwg.mxu0
        %2631 = vmatpush.bf16.msra.mxu0 0
        %2632 = vmatpush.bf16.msra.mxu0 0
        %2633 = vmatpush.bf16.msra.mxu0 0
        %2634 = vmatpush.bf16.msra.mxu0 0
        %2635 = vmatpush.bf16.msra.mxu0 0
        %2636 = vmatpush.bf16.msra.mxu0 0
        %2637 = vmatpush.bf16.msra.mxu0 %v2283
        %2638 = vmatpush.bf16.msra.mxu0 %v2281
        %2639 = vmatmul.bf16.gmra.mxu0 %v2559
        %v2640 = vpop.f32.mrf.mxu0
        %v2641 = vadd.f32 0.0, %v2640
        %v2642 = vpop.f32.mrf.mxu0
        %v2643 = vadd.f32 0.0, %v2642
        %2644 = vmatmul.bf16.gmra.mxu0 %v2562
        %v2645 = vpop.f32.mrf.mxu0
        %v2646 = vadd.f32 0.0, %v2645
        %v2647 = vpop.f32.mrf.mxu0
        %v2648 = vadd.f32 0.0, %v2647
        %2649 = vmatmul.bf16.gmra.mxu0 %v2565
        %v2650 = vpop.f32.mrf.mxu0
        %v2651 = vadd.f32 0.0, %v2650
        %v2652 = vpop.f32.mrf.mxu0
        %v2653 = vadd.f32 0.0, %v2652
        %2654 = vmatmul.bf16.gmra.mxu0 %v2568
        %v2655 = vpop.f32.mrf.mxu0
        %v2656 = vadd.f32 0.0, %v2655
        %v2657 = vpop.f32.mrf.mxu0
        %v2658 = vadd.f32 0.0, %v2657
        %2659 = vmatmul.bf16.gmra.mxu0 %v2571
        %v2660 = vpop.f32.mrf.mxu0
        %v2661 = vadd.f32 0.0, %v2660
        %v2662 = vpop.f32.mrf.mxu0
        %v2663 = vadd.f32 0.0, %v2662
        %2664 = vmatmul.bf16.gmra.mxu0 %v2574
        %v2665 = vpop.f32.mrf.mxu0
        %v2666 = vadd.f32 0.0, %v2665
        %v2667 = vpop.f32.mrf.mxu0
        %v2668 = vadd.f32 0.0, %v2667
        %2669 = vmatmul.bf16.gmra.mxu0 %v2577
        %v2670 = vpop.f32.mrf.mxu0
        %v2671 = vadd.f32 0.0, %v2670
        %v2672 = vpop.f32.mrf.mxu0
        %v2673 = vadd.f32 0.0, %v2672
        %2674 = vmatmul.bf16.gmra.mxu0 %v2580
        %v2675 = vpop.f32.mrf.mxu0
        %v2676 = vadd.f32 0.0, %v2675
        %v2677 = vpop.f32.mrf.mxu0
        %v2678 = vadd.f32 0.0, %v2677
        %2679 = vdwg.mxu0
        %v2680 = vadd.f32 %v2469, %v2592
        %v2681 = vadd.f32 %v2470, %v2641
        %v2682 = vadd.f32 %v2471, %v2594
        %v2683 = vadd.f32 %v2472, %v2643
        %v2684 = vadd.f32 %v2473, %v2597
        %v2685 = vadd.f32 %v2474, %v2646
        %v2686 = vadd.f32 %v2475, %v2599
        %v2687 = vadd.f32 %v2476, %v2648
        %v2688 = vadd.f32 %v2477, %v2602
        %v2689 = vadd.f32 %v2478, %v2651
        %v2690 = vadd.f32 %v2479, %v2604
        %v2691 = vadd.f32 %v2480, %v2653
        %v2692 = vadd.f32 %v2481, %v2607
        %v2693 = vadd.f32 %v2482, %v2656
        %v2694 = vadd.f32 %v2483, %v2609
        %v2695 = vadd.f32 %v2484, %v2658
        %v2696 = vadd.f32 %v2485, %v2612
        %v2697 = vadd.f32 %v2486, %v2661
        %v2698 = vadd.f32 %v2487, %v2614
        %v2699 = vadd.f32 %v2488, %v2663
        %v2700 = vadd.f32 %v2489, %v2617
        %v2701 = vadd.f32 %v2490, %v2666
        %v2702 = vadd.f32 %v2491, %v2619
        %v2703 = vadd.f32 %v2492, %v2668
        %v2704 = vadd.f32 %v2493, %v2622
        %v2705 = vadd.f32 %v2494, %v2671
        %v2706 = vadd.f32 %v2495, %v2624
        %v2707 = vadd.f32 %v2496, %v2673
        %v2708 = vadd.f32 %v2497, %v2627
        %v2709 = vadd.f32 %v2498, %v2676
        %v2710 = vadd.f32 %v2499, %v2629
        %v2711 = vadd.f32 %v2500, %v2678
        %2712 = vst [vmem:[#allocation1] ss:$2 sm:$0xff] %v356
        %v2713 = vld.sshfl [vmem:[#allocation1] sm:$0xff pattern:$0x75316420]
        %v2714 = vld.sshfl [vmem:[#allocation1 + $0x8] sm:$0xff pattern:$0x75316420]
        %2717 = vrot.lane.b32.xlu0 %v2713, 127
        %v2718 = vpop.permute.xlu0 %2717
        %2719 = vrot.lane.b32.xlu0 %v2714, 127
        %v2720 = vpop.permute.xlu0 %2719
        %vm2721 = vcmp.lt.s32.totalorder %v376, 127
        %v2722 = vsel %vm2721, %v2718, %v2720
        %v2723 = vsel %vm2721, %v2720, %v2718
        %2724 = vrot.lane.b32.xlu0 %v357, 127
        %v2725 = vpop.permute.xlu0 %2724
        %2726 = vrot.lane.b32.xlu0 %v359, 127
        %v2727 = vpop.permute.xlu0 %2726
        %2728 = vrot.lane.b32.xlu0 %v361, 127
        %v2729 = vpop.permute.xlu0 %2728
        %2730 = vrot.lane.b32.xlu0 %v363, 127
        %v2731 = vpop.permute.xlu0 %2730
        %2732 = vrot.lane.b32.xlu0 %v358, 127
        %v2733 = vpop.permute.xlu0 %2732
        %2734 = vrot.lane.b32.xlu0 %v360, 127
        %v2735 = vpop.permute.xlu0 %2734
        %2736 = vrot.lane.b32.xlu0 %v362, 127
        %v2737 = vpop.permute.xlu0 %2736
        %2738 = vrot.lane.b32.xlu0 %v364, 127
        %v2739 = vpop.permute.xlu0 %2738
        %v2740 = vsel %vm2721, %v2725, %v2733
        %v2741 = vsel %vm2721, %v2727, %v2735
        %v2742 = vsel %vm2721, %v2729, %v2737
        %v2743 = vsel %vm2721, %v2731, %v2739
        %v2744 = vsel %vm2721, %v2733, %v2725
        %v2745 = vsel %vm2721, %v2735, %v2727
        %v2746 = vsel %vm2721, %v2737, %v2729
        %v2747 = vsel %vm2721, %v2739, %v2731
        %s2748 = scalar_lea.vmem %s6, 10
        %v2749 = vld [vmem:[%s2748] sm:$0x3]
        %v2751 = vperm.slane %v2749, 0
        %v2752 = vperm.slane %v2749, 1
        %v2755 = vmul.f32 %v2722, %v2751
        %v2756 = vmul.f32 %v2723, %v2752
        %v2757 = vpack.c.bf16 %v2755, %v2755
        %v2758 = vpack.c.bf16 %v2756, %v2756
        %v2759 = vmul.f32 %v2740, %v2751
        %v2760 = vmul.f32 %v2744, %v2752
        %v2761 = vmul.f32 %v2741, %v2751
        %v2762 = vmul.f32 %v2745, %v2752
        %v2763 = vmul.f32 %v2742, %v2751
        %v2764 = vmul.f32 %v2746, %v2752
        %v2765 = vmul.f32 %v2743, %v2751
        %v2766 = vmul.f32 %v2747, %v2752
        %v2767 = vpack.c.bf16 %v2761, %v2759
        %v2768 = vpack.c.bf16 %v2762, %v2760
        %v2769 = vpack.c.bf16 %v2765, %v2763
        %v2770 = vpack.c.bf16 %v2766, %v2764
        %s2771 = scalar_lea.vmem %s3, 320
        %v2772 = vld [vmem:[%s2771] sm:$0xf]
        %v2773 = vld [vmem:[%s2771 + $0x4] sm:$0xf]
        %v2774 = vld [vmem:[%s2771 + $0x8] sm:$0xf]
        %v2775 = vld [vmem:[%s2771 + $0xc] sm:$0xf]
        %v2776 = vld [vmem:[%s2771 + $0x10] sm:$0xf]
        %v2777 = vld [vmem:[%s2771 + $0x14] sm:$0xf]
        %v2778 = vld [vmem:[%s2771 + $0x18] sm:$0xf]
        %v2779 = vld [vmem:[%s2771 + $0x1c] sm:$0xf]
        %v2780 = vld [vmem:[%s2771 + $0x20] sm:$0xf]
        %v2781 = vld [vmem:[%s2771 + $0x24] sm:$0xf]
        %v2782 = vld [vmem:[%s2771 + $0x28] sm:$0xf]
        %v2783 = vld [vmem:[%s2771 + $0x2c] sm:$0xf]
        %v2784 = vld [vmem:[%s2771 + $0x30] sm:$0xf]
        %v2785 = vld [vmem:[%s2771 + $0x34] sm:$0xf]
        %v2786 = vld [vmem:[%s2771 + $0x38] sm:$0xf]
        %v2787 = vld [vmem:[%s2771 + $0x3c] sm:$0xf]
        %v2804 = vunpack.c.l.b16 %v2772
        %v2805 = vunpack.c.l.b16 %v2773
        %v2806 = vunpack.c.l.b16 %v2774
        %v2807 = vunpack.c.l.b16 %v2775
        %v2808 = vunpack.c.l.b16 %v2776
        %v2809 = vunpack.c.l.b16 %v2777
        %v2810 = vunpack.c.l.b16 %v2778
        %v2811 = vunpack.c.l.b16 %v2779
        %v2812 = vunpack.c.l.b16 %v2780
        %v2813 = vunpack.c.l.b16 %v2781
        %v2814 = vunpack.c.l.b16 %v2782
        %v2815 = vunpack.c.l.b16 %v2783
        %v2816 = vunpack.c.l.b16 %v2784
        %v2817 = vunpack.c.l.b16 %v2785
        %v2818 = vunpack.c.l.b16 %v2786
        %v2819 = vunpack.c.l.b16 %v2787
        %v2820 = vpack.c.b16 %v2805, %v2804
        %v2821 = vpack.c.b16 %v2807, %v2806
        %v2822 = vpack.c.b16 %v2809, %v2808
        %v2823 = vpack.c.b16 %v2811, %v2810
        %v2824 = vpack.c.b16 %v2813, %v2812
        %v2825 = vpack.c.b16 %v2815, %v2814
        %v2826 = vpack.c.b16 %v2817, %v2816
        %v2827 = vpack.c.b16 %v2819, %v2818
        %v2829 = vsel %vm661, %v2820, 0
        %v2832 = vsel %vm661, %v2821, 0
        %v2835 = vsel %vm661, %v2822, 0
        %v2838 = vsel %vm661, %v2823, 0
        %v2841 = vsel %vm661, %v2824, 0
        %v2844 = vsel %vm661, %v2825, 0
        %v2847 = vsel %vm661, %v2826, 0
        %v2850 = vsel %vm661, %v2827, 0
        %v2853 = vsel %vm686, %v2757, 0
        %v2856 = vsel %vm686, %v2758, 0
        %2858 = vmatpush.bf16.msra.mxu0 0
        %2859 = vmatpush.bf16.msra.mxu0 0
        %2860 = vmatpush.bf16.msra.mxu0 0
        %2861 = vmatpush.bf16.msra.mxu0 0
        %2862 = vmatpush.bf16.msra.mxu0 0
        %2863 = vmatpush.bf16.msra.mxu0 0
        %2864 = vmatpush.bf16.msra.mxu0 0
        %2865 = vmatpush.bf16.msra.mxu0 %v2853
        %2866 = vmatmul.bf16.gmra.mxu0 %v2829
        %v2867 = vpop.f32.mrf.mxu0
        %v2868 = vadd.f32 0.0, %v2867
        %v2869 = vpop.f32.mrf.mxu0
        %v2870 = vadd.f32 0.0, %v2869
        %2871 = vmatmul.bf16.gmra.mxu0 %v2832
        %v2872 = vpop.f32.mrf.mxu0
        %v2873 = vadd.f32 0.0, %v2872
        %v2874 = vpop.f32.mrf.mxu0
        %v2875 = vadd.f32 0.0, %v2874
        %2876 = vmatmul.bf16.gmra.mxu0 %v2835
        %v2877 = vpop.f32.mrf.mxu0
        %v2878 = vadd.f32 0.0, %v2877
        %v2879 = vpop.f32.mrf.mxu0
        %v2880 = vadd.f32 0.0, %v2879
        %2881 = vmatmul.bf16.gmra.mxu0 %v2838
        %v2882 = vpop.f32.mrf.mxu0
        %v2883 = vadd.f32 0.0, %v2882
        %v2884 = vpop.f32.mrf.mxu0
        %v2885 = vadd.f32 0.0, %v2884
        %2886 = vmatmul.bf16.gmra.mxu0 %v2841
        %v2887 = vpop.f32.mrf.mxu0
        %v2888 = vadd.f32 0.0, %v2887
        %v2889 = vpop.f32.mrf.mxu0
        %v2890 = vadd.f32 0.0, %v2889
        %2891 = vmatmul.bf16.gmra.mxu0 %v2844
        %v2892 = vpop.f32.mrf.mxu0
        %v2893 = vadd.f32 0.0, %v2892
        %v2894 = vpop.f32.mrf.mxu0
        %v2895 = vadd.f32 0.0, %v2894
        %2896 = vmatmul.bf16.gmra.mxu0 %v2847
        %v2897 = vpop.f32.mrf.mxu0
        %v2898 = vadd.f32 0.0, %v2897
        %v2899 = vpop.f32.mrf.mxu0
        %v2900 = vadd.f32 0.0, %v2899
        %2901 = vmatmul.bf16.gmra.mxu0 %v2850
        %v2902 = vpop.f32.mrf.mxu0
        %v2903 = vadd.f32 0.0, %v2902
        %v2904 = vpop.f32.mrf.mxu0
        %v2905 = vadd.f32 0.0, %v2904
        %2906 = vdwg.mxu0
        %2907 = vmatpush.bf16.msra.mxu0 0
        %2908 = vmatpush.bf16.msra.mxu0 0
        %2909 = vmatpush.bf16.msra.mxu0 0
        %2910 = vmatpush.bf16.msra.mxu0 0
        %2911 = vmatpush.bf16.msra.mxu0 0
        %2912 = vmatpush.bf16.msra.mxu0 0
        %2913 = vmatpush.bf16.msra.mxu0 0
        %2914 = vmatpush.bf16.msra.mxu0 %v2856
        %2915 = vmatmul.bf16.gmra.mxu0 %v2829
        %v2916 = vpop.f32.mrf.mxu0
        %v2917 = vadd.f32 0.0, %v2916
        %v2918 = vpop.f32.mrf.mxu0
        %v2919 = vadd.f32 0.0, %v2918
        %2920 = vmatmul.bf16.gmra.mxu0 %v2832
        %v2921 = vpop.f32.mrf.mxu0
        %v2922 = vadd.f32 0.0, %v2921
        %v2923 = vpop.f32.mrf.mxu0
        %v2924 = vadd.f32 0.0, %v2923
        %2925 = vmatmul.bf16.gmra.mxu0 %v2835
        %v2926 = vpop.f32.mrf.mxu0
        %v2927 = vadd.f32 0.0, %v2926
        %v2928 = vpop.f32.mrf.mxu0
        %v2929 = vadd.f32 0.0, %v2928
        %2930 = vmatmul.bf16.gmra.mxu0 %v2838
        %v2931 = vpop.f32.mrf.mxu0
        %v2932 = vadd.f32 0.0, %v2931
        %v2933 = vpop.f32.mrf.mxu0
        %v2934 = vadd.f32 0.0, %v2933
        %2935 = vmatmul.bf16.gmra.mxu0 %v2841
        %v2936 = vpop.f32.mrf.mxu0
        %v2937 = vadd.f32 0.0, %v2936
        %v2938 = vpop.f32.mrf.mxu0
        %v2939 = vadd.f32 0.0, %v2938
        %2940 = vmatmul.bf16.gmra.mxu0 %v2844
        %v2941 = vpop.f32.mrf.mxu0
        %v2942 = vadd.f32 0.0, %v2941
        %v2943 = vpop.f32.mrf.mxu0
        %v2944 = vadd.f32 0.0, %v2943
        %2945 = vmatmul.bf16.gmra.mxu0 %v2847
        %v2946 = vpop.f32.mrf.mxu0
        %v2947 = vadd.f32 0.0, %v2946
        %v2948 = vpop.f32.mrf.mxu0
        %v2949 = vadd.f32 0.0, %v2948
        %2950 = vmatmul.bf16.gmra.mxu0 %v2850
        %v2951 = vpop.f32.mrf.mxu0
        %v2952 = vadd.f32 0.0, %v2951
        %v2953 = vpop.f32.mrf.mxu0
        %v2954 = vadd.f32 0.0, %v2953
        %2955 = vdwg.mxu0
        %v2956 = vadd.f32 %v2680, %v2868
        %v2957 = vadd.f32 %v2681, %v2917
        %v2958 = vadd.f32 %v2682, %v2870
        %v2959 = vadd.f32 %v2683, %v2919
        %v2960 = vadd.f32 %v2684, %v2873
        %v2961 = vadd.f32 %v2685, %v2922
        %v2962 = vadd.f32 %v2686, %v2875
        %v2963 = vadd.f32 %v2687, %v2924
        %v2964 = vadd.f32 %v2688, %v2878
        %v2965 = vadd.f32 %v2689, %v2927
        %v2966 = vadd.f32 %v2690, %v2880
        %v2967 = vadd.f32 %v2691, %v2929
        %v2968 = vadd.f32 %v2692, %v2883
        %v2969 = vadd.f32 %v2693, %v2932
        %v2970 = vadd.f32 %v2694, %v2885
        %v2971 = vadd.f32 %v2695, %v2934
        %v2972 = vadd.f32 %v2696, %v2888
        %v2973 = vadd.f32 %v2697, %v2937
        %v2974 = vadd.f32 %v2698, %v2890
        %v2975 = vadd.f32 %v2699, %v2939
        %v2976 = vadd.f32 %v2700, %v2893
        %v2977 = vadd.f32 %v2701, %v2942
        %v2978 = vadd.f32 %v2702, %v2895
        %v2979 = vadd.f32 %v2703, %v2944
        %v2980 = vadd.f32 %v2704, %v2898
        %v2981 = vadd.f32 %v2705, %v2947
        %v2982 = vadd.f32 %v2706, %v2900
        %v2983 = vadd.f32 %v2707, %v2949
        %v2984 = vadd.f32 %v2708, %v2903
        %v2985 = vadd.f32 %v2709, %v2952
        %v2986 = vadd.f32 %v2710, %v2905
        %v2987 = vadd.f32 %v2711, %v2954
        %s2988 = scalar_lea.vmem %s4, 320
        %v2989 = vld [vmem:[%s2988] sm:$0xf]
        %v2990 = vld [vmem:[%s2988 + $0x4] sm:$0xf]
        %v2991 = vld [vmem:[%s2988 + $0x8] sm:$0xf]
        %v2992 = vld [vmem:[%s2988 + $0xc] sm:$0xf]
        %v2993 = vld [vmem:[%s2988 + $0x10] sm:$0xf]
        %v2994 = vld [vmem:[%s2988 + $0x14] sm:$0xf]
        %v2995 = vld [vmem:[%s2988 + $0x18] sm:$0xf]
        %v2996 = vld [vmem:[%s2988 + $0x1c] sm:$0xf]
        %v2997 = vld [vmem:[%s2988 + $0x20] sm:$0xf]
        %v2998 = vld [vmem:[%s2988 + $0x24] sm:$0xf]
        %v2999 = vld [vmem:[%s2988 + $0x28] sm:$0xf]
        %v3000 = vld [vmem:[%s2988 + $0x2c] sm:$0xf]
        %v3001 = vld [vmem:[%s2988 + $0x30] sm:$0xf]
        %v3002 = vld [vmem:[%s2988 + $0x34] sm:$0xf]
        %v3003 = vld [vmem:[%s2988 + $0x38] sm:$0xf]
        %v3004 = vld [vmem:[%s2988 + $0x3c] sm:$0xf]
        %v3021 = vunpack.c.l.b16 %v2989
        %v3022 = vunpack.c.l.b16 %v2990
        %v3023 = vunpack.c.l.b16 %v2991
        %v3024 = vunpack.c.l.b16 %v2992
        %v3025 = vunpack.c.l.b16 %v2993
        %v3026 = vunpack.c.l.b16 %v2994
        %v3027 = vunpack.c.l.b16 %v2995
        %v3028 = vunpack.c.l.b16 %v2996
        %v3029 = vunpack.c.l.b16 %v2997
        %v3030 = vunpack.c.l.b16 %v2998
        %v3031 = vunpack.c.l.b16 %v2999
        %v3032 = vunpack.c.l.b16 %v3000
        %v3033 = vunpack.c.l.b16 %v3001
        %v3034 = vunpack.c.l.b16 %v3002
        %v3035 = vunpack.c.l.b16 %v3003
        %v3036 = vunpack.c.l.b16 %v3004
        %v3037 = vpack.c.b16 %v3022, %v3021
        %v3038 = vpack.c.b16 %v3024, %v3023
        %v3039 = vpack.c.b16 %v3026, %v3025
        %v3040 = vpack.c.b16 %v3028, %v3027
        %v3041 = vpack.c.b16 %v3030, %v3029
        %v3042 = vpack.c.b16 %v3032, %v3031
        %v3043 = vpack.c.b16 %v3034, %v3033
        %v3044 = vpack.c.b16 %v3036, %v3035
        %v3046 = vsel %vm498, %v3037, 0
        %v3049 = vsel %vm498, %v3038, 0
        %v3052 = vsel %vm498, %v3039, 0
        %v3055 = vsel %vm498, %v3040, 0
        %v3058 = vsel %vm498, %v3041, 0
        %v3061 = vsel %vm498, %v3042, 0
        %v3064 = vsel %vm498, %v3043, 0
        %v3067 = vsel %vm498, %v3044, 0
        %3069 = vmatpush.bf16.msra.mxu0 0
        %3070 = vmatpush.bf16.msra.mxu0 0
        %3071 = vmatpush.bf16.msra.mxu0 0
        %3072 = vmatpush.bf16.msra.mxu0 0
        %3073 = vmatpush.bf16.msra.mxu0 0
        %3074 = vmatpush.bf16.msra.mxu0 0
        %3075 = vmatpush.bf16.msra.mxu0 %v2769
        %3076 = vmatpush.bf16.msra.mxu0 %v2767
        %3077 = vmatmul.bf16.gmra.mxu0 %v3046
        %v3078 = vpop.f32.mrf.mxu0
        %v3079 = vadd.f32 0.0, %v3078
        %v3080 = vpop.f32.mrf.mxu0
        %v3081 = vadd.f32 0.0, %v3080
        %3082 = vmatmul.bf16.gmra.mxu0 %v3049
        %v3083 = vpop.f32.mrf.mxu0
        %v3084 = vadd.f32 0.0, %v3083
        %v3085 = vpop.f32.mrf.mxu0
        %v3086 = vadd.f32 0.0, %v3085
        %3087 = vmatmul.bf16.gmra.mxu0 %v3052
        %v3088 = vpop.f32.mrf.mxu0
        %v3089 = vadd.f32 0.0, %v3088
        %v3090 = vpop.f32.mrf.mxu0
        %v3091 = vadd.f32 0.0, %v3090
        %3092 = vmatmul.bf16.gmra.mxu0 %v3055
        %v3093 = vpop.f32.mrf.mxu0
        %v3094 = vadd.f32 0.0, %v3093
        %v3095 = vpop.f32.mrf.mxu0
        %v3096 = vadd.f32 0.0, %v3095
        %3097 = vmatmul.bf16.gmra.mxu0 %v3058
        %v3098 = vpop.f32.mrf.mxu0
        %v3099 = vadd.f32 0.0, %v3098
        %v3100 = vpop.f32.mrf.mxu0
        %v3101 = vadd.f32 0.0, %v3100
        %3102 = vmatmul.bf16.gmra.mxu0 %v3061
        %v3103 = vpop.f32.mrf.mxu0
        %v3104 = vadd.f32 0.0, %v3103
        %v3105 = vpop.f32.mrf.mxu0
        %v3106 = vadd.f32 0.0, %v3105
        %3107 = vmatmul.bf16.gmra.mxu0 %v3064
        %v3108 = vpop.f32.mrf.mxu0
        %v3109 = vadd.f32 0.0, %v3108
        %v3110 = vpop.f32.mrf.mxu0
        %v3111 = vadd.f32 0.0, %v3110
        %3112 = vmatmul.bf16.gmra.mxu0 %v3067
        %v3113 = vpop.f32.mrf.mxu0
        %v3114 = vadd.f32 0.0, %v3113
        %v3115 = vpop.f32.mrf.mxu0
        %v3116 = vadd.f32 0.0, %v3115
        %3117 = vdwg.mxu0
        %3118 = vmatpush.bf16.msra.mxu0 0
        %3119 = vmatpush.bf16.msra.mxu0 0
        %3120 = vmatpush.bf16.msra.mxu0 0
        %3121 = vmatpush.bf16.msra.mxu0 0
        %3122 = vmatpush.bf16.msra.mxu0 0
        %3123 = vmatpush.bf16.msra.mxu0 0
        %3124 = vmatpush.bf16.msra.mxu0 %v2770
        %3125 = vmatpush.bf16.msra.mxu0 %v2768
        %3126 = vmatmul.bf16.gmra.mxu0 %v3046
        %v3127 = vpop.f32.mrf.mxu0
        %v3128 = vadd.f32 0.0, %v3127
        %v3129 = vpop.f32.mrf.mxu0
        %v3130 = vadd.f32 0.0, %v3129
        %3131 = vmatmul.bf16.gmra.mxu0 %v3049
        %v3132 = vpop.f32.mrf.mxu0
        %v3133 = vadd.f32 0.0, %v3132
        %v3134 = vpop.f32.mrf.mxu0
        %v3135 = vadd.f32 0.0, %v3134
        %3136 = vmatmul.bf16.gmra.mxu0 %v3052
        %v3137 = vpop.f32.mrf.mxu0
        %v3138 = vadd.f32 0.0, %v3137
        %v3139 = vpop.f32.mrf.mxu0
        %v3140 = vadd.f32 0.0, %v3139
        %3141 = vmatmul.bf16.gmra.mxu0 %v3055
        %v3142 = vpop.f32.mrf.mxu0
        %v3143 = vadd.f32 0.0, %v3142
        %v3144 = vpop.f32.mrf.mxu0
        %v3145 = vadd.f32 0.0, %v3144
        %3146 = vmatmul.bf16.gmra.mxu0 %v3058
        %v3147 = vpop.f32.mrf.mxu0
        %v3148 = vadd.f32 0.0, %v3147
        %v3149 = vpop.f32.mrf.mxu0
        %v3150 = vadd.f32 0.0, %v3149
        %3151 = vmatmul.bf16.gmra.mxu0 %v3061
        %v3152 = vpop.f32.mrf.mxu0
        %v3153 = vadd.f32 0.0, %v3152
        %v3154 = vpop.f32.mrf.mxu0
        %v3155 = vadd.f32 0.0, %v3154
        %3156 = vmatmul.bf16.gmra.mxu0 %v3064
        %v3157 = vpop.f32.mrf.mxu0
        %v3158 = vadd.f32 0.0, %v3157
        %v3159 = vpop.f32.mrf.mxu0
        %v3160 = vadd.f32 0.0, %v3159
        %3161 = vmatmul.bf16.gmra.mxu0 %v3067
        %v3162 = vpop.f32.mrf.mxu0
        %v3163 = vadd.f32 0.0, %v3162
        %v3164 = vpop.f32.mrf.mxu0
        %v3165 = vadd.f32 0.0, %v3164
        %3166 = vdwg.mxu0
        %v3167 = vadd.f32 %v2956, %v3079
        %v3168 = vadd.f32 %v2957, %v3128
        %v3169 = vadd.f32 %v2958, %v3081
        %v3170 = vadd.f32 %v2959, %v3130
        %v3171 = vadd.f32 %v2960, %v3084
        %v3172 = vadd.f32 %v2961, %v3133
        %v3173 = vadd.f32 %v2962, %v3086
        %v3174 = vadd.f32 %v2963, %v3135
        %v3175 = vadd.f32 %v2964, %v3089
        %v3176 = vadd.f32 %v2965, %v3138
        %v3177 = vadd.f32 %v2966, %v3091
        %v3178 = vadd.f32 %v2967, %v3140
        %v3179 = vadd.f32 %v2968, %v3094
        %v3180 = vadd.f32 %v2969, %v3143
        %v3181 = vadd.f32 %v2970, %v3096
        %v3182 = vadd.f32 %v2971, %v3145
        %v3183 = vadd.f32 %v2972, %v3099
        %v3184 = vadd.f32 %v2973, %v3148
        %v3185 = vadd.f32 %v2974, %v3101
        %v3186 = vadd.f32 %v2975, %v3150
        %v3187 = vadd.f32 %v2976, %v3104
        %v3188 = vadd.f32 %v2977, %v3153
        %v3189 = vadd.f32 %v2978, %v3106
        %v3190 = vadd.f32 %v2979, %v3155
        %v3191 = vadd.f32 %v2980, %v3109
        %v3192 = vadd.f32 %v2981, %v3158
        %v3193 = vadd.f32 %v2982, %v3111
        %v3194 = vadd.f32 %v2983, %v3160
        %v3195 = vadd.f32 %v2984, %v3114
        %v3196 = vadd.f32 %v2985, %v3163
        %v3197 = vadd.f32 %v2986, %v3116
        %v3198 = vadd.f32 %v2987, %v3165
        %3199 = vst [vmem:[#allocation1] ss:$2 sm:$0xff] %v356
        %v3200 = vld.sshfl [vmem:[#allocation1] sm:$0xff pattern:$0x75316420]
        %v3201 = vld.sshfl [vmem:[#allocation1 + $0x8] sm:$0xff pattern:$0x75316420]
        %3204 = vrot.lane.b32.xlu0 %v3200, 113
        %v3205 = vpop.permute.xlu0 %3204
        %3206 = vrot.lane.b32.xlu0 %v3201, 113
        %v3207 = vpop.permute.xlu0 %3206
        %vm3208 = vcmp.lt.s32.totalorder %v376, 113
        %v3209 = vsel %vm3208, %v3205, %v3207
        %v3210 = vsel %vm3208, %v3207, %v3205
        %3211 = vrot.lane.b32.xlu0 %v357, 113
        %v3212 = vpop.permute.xlu0 %3211
        %3213 = vrot.lane.b32.xlu0 %v359, 113
        %v3214 = vpop.permute.xlu0 %3213
        %3215 = vrot.lane.b32.xlu0 %v361, 113
        %v3216 = vpop.permute.xlu0 %3215
        %3217 = vrot.lane.b32.xlu0 %v363, 113
        %v3218 = vpop.permute.xlu0 %3217
        %3219 = vrot.lane.b32.xlu0 %v358, 113
        %v3220 = vpop.permute.xlu0 %3219
        %3221 = vrot.lane.b32.xlu0 %v360, 113
        %v3222 = vpop.permute.xlu0 %3221
        %3223 = vrot.lane.b32.xlu0 %v362, 113
        %v3224 = vpop.permute.xlu0 %3223
        %3225 = vrot.lane.b32.xlu0 %v364, 113
        %v3226 = vpop.permute.xlu0 %3225
        %v3227 = vsel %vm3208, %v3212, %v3220
        %v3228 = vsel %vm3208, %v3214, %v3222
        %v3229 = vsel %vm3208, %v3216, %v3224
        %v3230 = vsel %vm3208, %v3218, %v3226
        %v3231 = vsel %vm3208, %v3220, %v3212
        %v3232 = vsel %vm3208, %v3222, %v3214
        %v3233 = vsel %vm3208, %v3224, %v3216
        %v3234 = vsel %vm3208, %v3226, %v3218
        %s3235 = scalar_lea.vmem %s6, 12
        %v3236 = vld [vmem:[%s3235] sm:$0x3]
        %v3238 = vperm.slane %v3236, 0
        %v3239 = vperm.slane %v3236, 1
        %v3242 = vmul.f32 %v3209, %v3238
        %v3243 = vmul.f32 %v3210, %v3239
        %v3244 = vpack.c.bf16 %v3242, %v3242
        %v3245 = vpack.c.bf16 %v3243, %v3243
        %v3246 = vmul.f32 %v3227, %v3238
        %v3247 = vmul.f32 %v3231, %v3239
        %v3248 = vmul.f32 %v3228, %v3238
        %v3249 = vmul.f32 %v3232, %v3239
        %v3250 = vmul.f32 %v3229, %v3238
        %v3251 = vmul.f32 %v3233, %v3239
        %v3252 = vmul.f32 %v3230, %v3238
        %v3253 = vmul.f32 %v3234, %v3239
        %v3254 = vpack.c.bf16 %v3248, %v3246
        %v3255 = vpack.c.bf16 %v3249, %v3247
        %v3256 = vpack.c.bf16 %v3252, %v3250
        %v3257 = vpack.c.bf16 %v3253, %v3251
        %s3258 = scalar_lea.vmem %s3, 384
        %v3259 = vld [vmem:[%s3258] sm:$0xf]
        %v3260 = vld [vmem:[%s3258 + $0x4] sm:$0xf]
        %v3261 = vld [vmem:[%s3258 + $0x8] sm:$0xf]
        %v3262 = vld [vmem:[%s3258 + $0xc] sm:$0xf]
        %v3263 = vld [vmem:[%s3258 + $0x10] sm:$0xf]
        %v3264 = vld [vmem:[%s3258 + $0x14] sm:$0xf]
        %v3265 = vld [vmem:[%s3258 + $0x18] sm:$0xf]
        %v3266 = vld [vmem:[%s3258 + $0x1c] sm:$0xf]
        %v3267 = vld [vmem:[%s3258 + $0x20] sm:$0xf]
        %v3268 = vld [vmem:[%s3258 + $0x24] sm:$0xf]
        %v3269 = vld [vmem:[%s3258 + $0x28] sm:$0xf]
        %v3270 = vld [vmem:[%s3258 + $0x2c] sm:$0xf]
        %v3271 = vld [vmem:[%s3258 + $0x30] sm:$0xf]
        %v3272 = vld [vmem:[%s3258 + $0x34] sm:$0xf]
        %v3273 = vld [vmem:[%s3258 + $0x38] sm:$0xf]
        %v3274 = vld [vmem:[%s3258 + $0x3c] sm:$0xf]
        %v3291 = vunpack.c.l.b16 %v3259
        %v3292 = vunpack.c.l.b16 %v3260
        %v3293 = vunpack.c.l.b16 %v3261
        %v3294 = vunpack.c.l.b16 %v3262
        %v3295 = vunpack.c.l.b16 %v3263
        %v3296 = vunpack.c.l.b16 %v3264
        %v3297 = vunpack.c.l.b16 %v3265
        %v3298 = vunpack.c.l.b16 %v3266
        %v3299 = vunpack.c.l.b16 %v3267
        %v3300 = vunpack.c.l.b16 %v3268
        %v3301 = vunpack.c.l.b16 %v3269
        %v3302 = vunpack.c.l.b16 %v3270
        %v3303 = vunpack.c.l.b16 %v3271
        %v3304 = vunpack.c.l.b16 %v3272
        %v3305 = vunpack.c.l.b16 %v3273
        %v3306 = vunpack.c.l.b16 %v3274
        %v3307 = vpack.c.b16 %v3292, %v3291
        %v3308 = vpack.c.b16 %v3294, %v3293
        %v3309 = vpack.c.b16 %v3296, %v3295
        %v3310 = vpack.c.b16 %v3298, %v3297
        %v3311 = vpack.c.b16 %v3300, %v3299
        %v3312 = vpack.c.b16 %v3302, %v3301
        %v3313 = vpack.c.b16 %v3304, %v3303
        %v3314 = vpack.c.b16 %v3306, %v3305
        %v3316 = vsel %vm661, %v3307, 0
        %v3319 = vsel %vm661, %v3308, 0
        %v3322 = vsel %vm661, %v3309, 0
        %v3325 = vsel %vm661, %v3310, 0
        %v3328 = vsel %vm661, %v3311, 0
        %v3331 = vsel %vm661, %v3312, 0
        %v3334 = vsel %vm661, %v3313, 0
        %v3337 = vsel %vm661, %v3314, 0
        %v3340 = vsel %vm686, %v3244, 0
        %v3343 = vsel %vm686, %v3245, 0
        %3345 = vmatpush.bf16.msra.mxu0 0
        %3346 = vmatpush.bf16.msra.mxu0 0
        %3347 = vmatpush.bf16.msra.mxu0 0
        %3348 = vmatpush.bf16.msra.mxu0 0
        %3349 = vmatpush.bf16.msra.mxu0 0
        %3350 = vmatpush.bf16.msra.mxu0 0
        %3351 = vmatpush.bf16.msra.mxu0 0
        %3352 = vmatpush.bf16.msra.mxu0 %v3340
        %3353 = vmatmul.bf16.gmra.mxu0 %v3316
        %v3354 = vpop.f32.mrf.mxu0
        %v3355 = vadd.f32 0.0, %v3354
        %v3356 = vpop.f32.mrf.mxu0
        %v3357 = vadd.f32 0.0, %v3356
        %3358 = vmatmul.bf16.gmra.mxu0 %v3319
        %v3359 = vpop.f32.mrf.mxu0
        %v3360 = vadd.f32 0.0, %v3359
        %v3361 = vpop.f32.mrf.mxu0
        %v3362 = vadd.f32 0.0, %v3361
        %3363 = vmatmul.bf16.gmra.mxu0 %v3322
        %v3364 = vpop.f32.mrf.mxu0
        %v3365 = vadd.f32 0.0, %v3364
        %v3366 = vpop.f32.mrf.mxu0
        %v3367 = vadd.f32 0.0, %v3366
        %3368 = vmatmul.bf16.gmra.mxu0 %v3325
        %v3369 = vpop.f32.mrf.mxu0
        %v3370 = vadd.f32 0.0, %v3369
        %v3371 = vpop.f32.mrf.mxu0
        %v3372 = vadd.f32 0.0, %v3371
        %3373 = vmatmul.bf16.gmra.mxu0 %v3328
        %v3374 = vpop.f32.mrf.mxu0
        %v3375 = vadd.f32 0.0, %v3374
        %v3376 = vpop.f32.mrf.mxu0
        %v3377 = vadd.f32 0.0, %v3376
        %3378 = vmatmul.bf16.gmra.mxu0 %v3331
        %v3379 = vpop.f32.mrf.mxu0
        %v3380 = vadd.f32 0.0, %v3379
        %v3381 = vpop.f32.mrf.mxu0
        %v3382 = vadd.f32 0.0, %v3381
        %3383 = vmatmul.bf16.gmra.mxu0 %v3334
        %v3384 = vpop.f32.mrf.mxu0
        %v3385 = vadd.f32 0.0, %v3384
        %v3386 = vpop.f32.mrf.mxu0
        %v3387 = vadd.f32 0.0, %v3386
        %3388 = vmatmul.bf16.gmra.mxu0 %v3337
        %v3389 = vpop.f32.mrf.mxu0
        %v3390 = vadd.f32 0.0, %v3389
        %v3391 = vpop.f32.mrf.mxu0
        %v3392 = vadd.f32 0.0, %v3391
        %3393 = vdwg.mxu0
        %3394 = vmatpush.bf16.msra.mxu0 0
        %3395 = vmatpush.bf16.msra.mxu0 0
        %3396 = vmatpush.bf16.msra.mxu0 0
        %3397 = vmatpush.bf16.msra.mxu0 0
        %3398 = vmatpush.bf16.msra.mxu0 0
        %3399 = vmatpush.bf16.msra.mxu0 0
        %3400 = vmatpush.bf16.msra.mxu0 0
        %3401 = vmatpush.bf16.msra.mxu0 %v3343
        %3402 = vmatmul.bf16.gmra.mxu0 %v3316
        %v3403 = vpop.f32.mrf.mxu0
        %v3404 = vadd.f32 0.0, %v3403
        %v3405 = vpop.f32.mrf.mxu0
        %v3406 = vadd.f32 0.0, %v3405
        %3407 = vmatmul.bf16.gmra.mxu0 %v3319
        %v3408 = vpop.f32.mrf.mxu0
        %v3409 = vadd.f32 0.0, %v3408
        %v3410 = vpop.f32.mrf.mxu0
        %v3411 = vadd.f32 0.0, %v3410
        %3412 = vmatmul.bf16.gmra.mxu0 %v3322
        %v3413 = vpop.f32.mrf.mxu0
        %v3414 = vadd.f32 0.0, %v3413
        %v3415 = vpop.f32.mrf.mxu0
        %v3416 = vadd.f32 0.0, %v3415
        %3417 = vmatmul.bf16.gmra.mxu0 %v3325
        %v3418 = vpop.f32.mrf.mxu0
        %v3419 = vadd.f32 0.0, %v3418
        %v3420 = vpop.f32.mrf.mxu0
        %v3421 = vadd.f32 0.0, %v3420
        %3422 = vmatmul.bf16.gmra.mxu0 %v3328
        %v3423 = vpop.f32.mrf.mxu0
        %v3424 = vadd.f32 0.0, %v3423
        %v3425 = vpop.f32.mrf.mxu0
        %v3426 = vadd.f32 0.0, %v3425
        %3427 = vmatmul.bf16.gmra.mxu0 %v3331
        %v3428 = vpop.f32.mrf.mxu0
        %v3429 = vadd.f32 0.0, %v3428
        %v3430 = vpop.f32.mrf.mxu0
        %v3431 = vadd.f32 0.0, %v3430
        %3432 = vmatmul.bf16.gmra.mxu0 %v3334
        %v3433 = vpop.f32.mrf.mxu0
        %v3434 = vadd.f32 0.0, %v3433
        %v3435 = vpop.f32.mrf.mxu0
        %v3436 = vadd.f32 0.0, %v3435
        %3437 = vmatmul.bf16.gmra.mxu0 %v3337
        %v3438 = vpop.f32.mrf.mxu0
        %v3439 = vadd.f32 0.0, %v3438
        %v3440 = vpop.f32.mrf.mxu0
        %v3441 = vadd.f32 0.0, %v3440
        %3442 = vdwg.mxu0
        %v3443 = vadd.f32 %v3167, %v3355
        %v3444 = vadd.f32 %v3168, %v3404
        %v3445 = vadd.f32 %v3169, %v3357
        %v3446 = vadd.f32 %v3170, %v3406
        %v3447 = vadd.f32 %v3171, %v3360
        %v3448 = vadd.f32 %v3172, %v3409
        %v3449 = vadd.f32 %v3173, %v3362
        %v3450 = vadd.f32 %v3174, %v3411
        %v3451 = vadd.f32 %v3175, %v3365
        %v3452 = vadd.f32 %v3176, %v3414
        %v3453 = vadd.f32 %v3177, %v3367
        %v3454 = vadd.f32 %v3178, %v3416
        %v3455 = vadd.f32 %v3179, %v3370
        %v3456 = vadd.f32 %v3180, %v3419
        %v3457 = vadd.f32 %v3181, %v3372
        %v3458 = vadd.f32 %v3182, %v3421
        %v3459 = vadd.f32 %v3183, %v3375
        %v3460 = vadd.f32 %v3184, %v3424
        %v3461 = vadd.f32 %v3185, %v3377
        %v3462 = vadd.f32 %v3186, %v3426
        %v3463 = vadd.f32 %v3187, %v3380
        %v3464 = vadd.f32 %v3188, %v3429
        %v3465 = vadd.f32 %v3189, %v3382
        %v3466 = vadd.f32 %v3190, %v3431
        %v3467 = vadd.f32 %v3191, %v3385
        %v3468 = vadd.f32 %v3192, %v3434
        %v3469 = vadd.f32 %v3193, %v3387
        %v3470 = vadd.f32 %v3194, %v3436
        %v3471 = vadd.f32 %v3195, %v3390
        %v3472 = vadd.f32 %v3196, %v3439
        %v3473 = vadd.f32 %v3197, %v3392
        %v3474 = vadd.f32 %v3198, %v3441
        %s3475 = scalar_lea.vmem %s4, 384
        %v3476 = vld [vmem:[%s3475] sm:$0xf]
        %v3477 = vld [vmem:[%s3475 + $0x4] sm:$0xf]
        %v3478 = vld [vmem:[%s3475 + $0x8] sm:$0xf]
        %v3479 = vld [vmem:[%s3475 + $0xc] sm:$0xf]
        %v3480 = vld [vmem:[%s3475 + $0x10] sm:$0xf]
        %v3481 = vld [vmem:[%s3475 + $0x14] sm:$0xf]
        %v3482 = vld [vmem:[%s3475 + $0x18] sm:$0xf]
        %v3483 = vld [vmem:[%s3475 + $0x1c] sm:$0xf]
        %v3484 = vld [vmem:[%s3475 + $0x20] sm:$0xf]
        %v3485 = vld [vmem:[%s3475 + $0x24] sm:$0xf]
        %v3486 = vld [vmem:[%s3475 + $0x28] sm:$0xf]
        %v3487 = vld [vmem:[%s3475 + $0x2c] sm:$0xf]
        %v3488 = vld [vmem:[%s3475 + $0x30] sm:$0xf]
        %v3489 = vld [vmem:[%s3475 + $0x34] sm:$0xf]
        %v3490 = vld [vmem:[%s3475 + $0x38] sm:$0xf]
        %v3491 = vld [vmem:[%s3475 + $0x3c] sm:$0xf]
        %v3508 = vunpack.c.l.b16 %v3476
        %v3509 = vunpack.c.l.b16 %v3477
        %v3510 = vunpack.c.l.b16 %v3478
        %v3511 = vunpack.c.l.b16 %v3479
        %v3512 = vunpack.c.l.b16 %v3480
        %v3513 = vunpack.c.l.b16 %v3481
        %v3514 = vunpack.c.l.b16 %v3482
        %v3515 = vunpack.c.l.b16 %v3483
        %v3516 = vunpack.c.l.b16 %v3484
        %v3517 = vunpack.c.l.b16 %v3485
        %v3518 = vunpack.c.l.b16 %v3486
        %v3519 = vunpack.c.l.b16 %v3487
        %v3520 = vunpack.c.l.b16 %v3488
        %v3521 = vunpack.c.l.b16 %v3489
        %v3522 = vunpack.c.l.b16 %v3490
        %v3523 = vunpack.c.l.b16 %v3491
        %v3524 = vpack.c.b16 %v3509, %v3508
        %v3525 = vpack.c.b16 %v3511, %v3510
        %v3526 = vpack.c.b16 %v3513, %v3512
        %v3527 = vpack.c.b16 %v3515, %v3514
        %v3528 = vpack.c.b16 %v3517, %v3516
        %v3529 = vpack.c.b16 %v3519, %v3518
        %v3530 = vpack.c.b16 %v3521, %v3520
        %v3531 = vpack.c.b16 %v3523, %v3522
        %v3533 = vsel %vm498, %v3524, 0
        %v3536 = vsel %vm498, %v3525, 0
        %v3539 = vsel %vm498, %v3526, 0
        %v3542 = vsel %vm498, %v3527, 0
        %v3545 = vsel %vm498, %v3528, 0
        %v3548 = vsel %vm498, %v3529, 0
        %v3551 = vsel %vm498, %v3530, 0
        %v3554 = vsel %vm498, %v3531, 0
        %3556 = vmatpush.bf16.msra.mxu0 0
        %3557 = vmatpush.bf16.msra.mxu0 0
        %3558 = vmatpush.bf16.msra.mxu0 0
        %3559 = vmatpush.bf16.msra.mxu0 0
        %3560 = vmatpush.bf16.msra.mxu0 0
        %3561 = vmatpush.bf16.msra.mxu0 0
        %3562 = vmatpush.bf16.msra.mxu0 %v3256
        %3563 = vmatpush.bf16.msra.mxu0 %v3254
        %3564 = vmatmul.bf16.gmra.mxu0 %v3533
        %v3565 = vpop.f32.mrf.mxu0
        %v3566 = vadd.f32 0.0, %v3565
        %v3567 = vpop.f32.mrf.mxu0
        %v3568 = vadd.f32 0.0, %v3567
        %3569 = vmatmul.bf16.gmra.mxu0 %v3536
        %v3570 = vpop.f32.mrf.mxu0
        %v3571 = vadd.f32 0.0, %v3570
        %v3572 = vpop.f32.mrf.mxu0
        %v3573 = vadd.f32 0.0, %v3572
        %3574 = vmatmul.bf16.gmra.mxu0 %v3539
        %v3575 = vpop.f32.mrf.mxu0
        %v3576 = vadd.f32 0.0, %v3575
        %v3577 = vpop.f32.mrf.mxu0
        %v3578 = vadd.f32 0.0, %v3577
        %3579 = vmatmul.bf16.gmra.mxu0 %v3542
        %v3580 = vpop.f32.mrf.mxu0
        %v3581 = vadd.f32 0.0, %v3580
        %v3582 = vpop.f32.mrf.mxu0
        %v3583 = vadd.f32 0.0, %v3582
        %3584 = vmatmul.bf16.gmra.mxu0 %v3545
        %v3585 = vpop.f32.mrf.mxu0
        %v3586 = vadd.f32 0.0, %v3585
        %v3587 = vpop.f32.mrf.mxu0
        %v3588 = vadd.f32 0.0, %v3587
        %3589 = vmatmul.bf16.gmra.mxu0 %v3548
        %v3590 = vpop.f32.mrf.mxu0
        %v3591 = vadd.f32 0.0, %v3590
        %v3592 = vpop.f32.mrf.mxu0
        %v3593 = vadd.f32 0.0, %v3592
        %3594 = vmatmul.bf16.gmra.mxu0 %v3551
        %v3595 = vpop.f32.mrf.mxu0
        %v3596 = vadd.f32 0.0, %v3595
        %v3597 = vpop.f32.mrf.mxu0
        %v3598 = vadd.f32 0.0, %v3597
        %3599 = vmatmul.bf16.gmra.mxu0 %v3554
        %v3600 = vpop.f32.mrf.mxu0
        %v3601 = vadd.f32 0.0, %v3600
        %v3602 = vpop.f32.mrf.mxu0
        %v3603 = vadd.f32 0.0, %v3602
        %3604 = vdwg.mxu0
        %3605 = vmatpush.bf16.msra.mxu0 0
        %3606 = vmatpush.bf16.msra.mxu0 0
        %3607 = vmatpush.bf16.msra.mxu0 0
        %3608 = vmatpush.bf16.msra.mxu0 0
        %3609 = vmatpush.bf16.msra.mxu0 0
        %3610 = vmatpush.bf16.msra.mxu0 0
        %3611 = vmatpush.bf16.msra.mxu0 %v3257
        %3612 = vmatpush.bf16.msra.mxu0 %v3255
        %3613 = vmatmul.bf16.gmra.mxu0 %v3533
        %v3614 = vpop.f32.mrf.mxu0
        %v3615 = vadd.f32 0.0, %v3614
        %v3616 = vpop.f32.mrf.mxu0
        %v3617 = vadd.f32 0.0, %v3616
        %3618 = vmatmul.bf16.gmra.mxu0 %v3536
        %v3619 = vpop.f32.mrf.mxu0
        %v3620 = vadd.f32 0.0, %v3619
        %v3621 = vpop.f32.mrf.mxu0
        %v3622 = vadd.f32 0.0, %v3621
        %3623 = vmatmul.bf16.gmra.mxu0 %v3539
        %v3624 = vpop.f32.mrf.mxu0
        %v3625 = vadd.f32 0.0, %v3624
        %v3626 = vpop.f32.mrf.mxu0
        %v3627 = vadd.f32 0.0, %v3626
        %3628 = vmatmul.bf16.gmra.mxu0 %v3542
        %v3629 = vpop.f32.mrf.mxu0
        %v3630 = vadd.f32 0.0, %v3629
        %v3631 = vpop.f32.mrf.mxu0
        %v3632 = vadd.f32 0.0, %v3631
        %3633 = vmatmul.bf16.gmra.mxu0 %v3545
        %v3634 = vpop.f32.mrf.mxu0
        %v3635 = vadd.f32 0.0, %v3634
        %v3636 = vpop.f32.mrf.mxu0
        %v3637 = vadd.f32 0.0, %v3636
        %3638 = vmatmul.bf16.gmra.mxu0 %v3548
        %v3639 = vpop.f32.mrf.mxu0
        %v3640 = vadd.f32 0.0, %v3639
        %v3641 = vpop.f32.mrf.mxu0
        %v3642 = vadd.f32 0.0, %v3641
        %3643 = vmatmul.bf16.gmra.mxu0 %v3551
        %v3644 = vpop.f32.mrf.mxu0
        %v3645 = vadd.f32 0.0, %v3644
        %v3646 = vpop.f32.mrf.mxu0
        %v3647 = vadd.f32 0.0, %v3646
        %3648 = vmatmul.bf16.gmra.mxu0 %v3554
        %v3649 = vpop.f32.mrf.mxu0
        %v3650 = vadd.f32 0.0, %v3649
        %v3651 = vpop.f32.mrf.mxu0
        %v3652 = vadd.f32 0.0, %v3651
        %3653 = vdwg.mxu0
        %v3654 = vadd.f32 %v3443, %v3566
        %v3655 = vadd.f32 %v3444, %v3615
        %v3656 = vadd.f32 %v3445, %v3568
        %v3657 = vadd.f32 %v3446, %v3617
        %v3658 = vadd.f32 %v3447, %v3571
        %v3659 = vadd.f32 %v3448, %v3620
        %v3660 = vadd.f32 %v3449, %v3573
        %v3661 = vadd.f32 %v3450, %v3622
        %v3662 = vadd.f32 %v3451, %v3576
        %v3663 = vadd.f32 %v3452, %v3625
        %v3664 = vadd.f32 %v3453, %v3578
        %v3665 = vadd.f32 %v3454, %v3627
        %v3666 = vadd.f32 %v3455, %v3581
        %v3667 = vadd.f32 %v3456, %v3630
        %v3668 = vadd.f32 %v3457, %v3583
        %v3669 = vadd.f32 %v3458, %v3632
        %v3670 = vadd.f32 %v3459, %v3586
        %v3671 = vadd.f32 %v3460, %v3635
        %v3672 = vadd.f32 %v3461, %v3588
        %v3673 = vadd.f32 %v3462, %v3637
        %v3674 = vadd.f32 %v3463, %v3591
        %v3675 = vadd.f32 %v3464, %v3640
        %v3676 = vadd.f32 %v3465, %v3593
        %v3677 = vadd.f32 %v3466, %v3642
        %v3678 = vadd.f32 %v3467, %v3596
        %v3679 = vadd.f32 %v3468, %v3645
        %v3680 = vadd.f32 %v3469, %v3598
        %v3681 = vadd.f32 %v3470, %v3647
        %v3682 = vadd.f32 %v3471, %v3601
        %v3683 = vadd.f32 %v3472, %v3650
        %v3684 = vadd.f32 %v3473, %v3603
        %v3685 = vadd.f32 %v3474, %v3652
        %3686 = vst [vmem:[#allocation1] ss:$2 sm:$0xff] %v356
        %v3687 = vld.sshfl [vmem:[#allocation1] sm:$0xff pattern:$0x75316420]
        %v3688 = vld.sshfl [vmem:[#allocation1 + $0x8] sm:$0xff pattern:$0x75316420]
        %3691 = vrot.lane.b32.xlu0 %v3687, 112
        %v3692 = vpop.permute.xlu0 %3691
        %3693 = vrot.lane.b32.xlu0 %v3688, 112
        %v3694 = vpop.permute.xlu0 %3693
        %vm3695 = vcmp.lt.s32.totalorder %v376, 112
        %v3696 = vsel %vm3695, %v3692, %v3694
        %v3697 = vsel %vm3695, %v3694, %v3692
        %3698 = vrot.lane.b32.xlu0 %v357, 112
        %v3699 = vpop.permute.xlu0 %3698
        %3700 = vrot.lane.b32.xlu0 %v359, 112
        %v3701 = vpop.permute.xlu0 %3700
        %3702 = vrot.lane.b32.xlu0 %v361, 112
        %v3703 = vpop.permute.xlu0 %3702
        %3704 = vrot.lane.b32.xlu0 %v363, 112
        %v3705 = vpop.permute.xlu0 %3704
        %3706 = vrot.lane.b32.xlu0 %v358, 112
        %v3707 = vpop.permute.xlu0 %3706
        %3708 = vrot.lane.b32.xlu0 %v360, 112
        %v3709 = vpop.permute.xlu0 %3708
        %3710 = vrot.lane.b32.xlu0 %v362, 112
        %v3711 = vpop.permute.xlu0 %3710
        %3712 = vrot.lane.b32.xlu0 %v364, 112
        %v3713 = vpop.permute.xlu0 %3712
        %v3714 = vsel %vm3695, %v3699, %v3707
        %v3715 = vsel %vm3695, %v3701, %v3709
        %v3716 = vsel %vm3695, %v3703, %v3711
        %v3717 = vsel %vm3695, %v3705, %v3713
        %v3718 = vsel %vm3695, %v3707, %v3699
        %v3719 = vsel %vm3695, %v3709, %v3701
        %v3720 = vsel %vm3695, %v3711, %v3703
        %v3721 = vsel %vm3695, %v3713, %v3705
        %s3722 = scalar_lea.vmem %s6, 14
        %v3723 = vld [vmem:[%s3722] sm:$0x3]
        %v3725 = vperm.slane %v3723, 0
        %v3726 = vperm.slane %v3723, 1
        %v3729 = vmul.f32 %v3696, %v3725
        %v3730 = vmul.f32 %v3697, %v3726
        %v3731 = vpack.c.bf16 %v3729, %v3729
        %v3732 = vpack.c.bf16 %v3730, %v3730
        %v3733 = vmul.f32 %v3714, %v3725
        %v3734 = vmul.f32 %v3718, %v3726
        %v3735 = vmul.f32 %v3715, %v3725
        %v3736 = vmul.f32 %v3719, %v3726
        %v3737 = vmul.f32 %v3716, %v3725
        %v3738 = vmul.f32 %v3720, %v3726
        %v3739 = vmul.f32 %v3717, %v3725
        %v3740 = vmul.f32 %v3721, %v3726
        %v3741 = vpack.c.bf16 %v3735, %v3733
        %v3742 = vpack.c.bf16 %v3736, %v3734
        %v3743 = vpack.c.bf16 %v3739, %v3737
        %v3744 = vpack.c.bf16 %v3740, %v3738
        %s3745 = scalar_lea.vmem %s3, 448
        %v3746 = vld [vmem:[%s3745] sm:$0xf]
        %v3747 = vld [vmem:[%s3745 + $0x4] sm:$0xf]
        %v3748 = vld [vmem:[%s3745 + $0x8] sm:$0xf]
        %v3749 = vld [vmem:[%s3745 + $0xc] sm:$0xf]
        %v3750 = vld [vmem:[%s3745 + $0x10] sm:$0xf]
        %v3751 = vld [vmem:[%s3745 + $0x14] sm:$0xf]
        %v3752 = vld [vmem:[%s3745 + $0x18] sm:$0xf]
        %v3753 = vld [vmem:[%s3745 + $0x1c] sm:$0xf]
        %v3754 = vld [vmem:[%s3745 + $0x20] sm:$0xf]
        %v3755 = vld [vmem:[%s3745 + $0x24] sm:$0xf]
        %v3756 = vld [vmem:[%s3745 + $0x28] sm:$0xf]
        %v3757 = vld [vmem:[%s3745 + $0x2c] sm:$0xf]
        %v3758 = vld [vmem:[%s3745 + $0x30] sm:$0xf]
        %v3759 = vld [vmem:[%s3745 + $0x34] sm:$0xf]
        %v3760 = vld [vmem:[%s3745 + $0x38] sm:$0xf]
        %v3761 = vld [vmem:[%s3745 + $0x3c] sm:$0xf]
        %v3778 = vunpack.c.l.b16 %v3746
        %v3779 = vunpack.c.l.b16 %v3747
        %v3780 = vunpack.c.l.b16 %v3748
        %v3781 = vunpack.c.l.b16 %v3749
        %v3782 = vunpack.c.l.b16 %v3750
        %v3783 = vunpack.c.l.b16 %v3751
        %v3784 = vunpack.c.l.b16 %v3752
        %v3785 = vunpack.c.l.b16 %v3753
        %v3786 = vunpack.c.l.b16 %v3754
        %v3787 = vunpack.c.l.b16 %v3755
        %v3788 = vunpack.c.l.b16 %v3756
        %v3789 = vunpack.c.l.b16 %v3757
        %v3790 = vunpack.c.l.b16 %v3758
        %v3791 = vunpack.c.l.b16 %v3759
        %v3792 = vunpack.c.l.b16 %v3760
        %v3793 = vunpack.c.l.b16 %v3761
        %v3794 = vpack.c.b16 %v3779, %v3778
        %v3795 = vpack.c.b16 %v3781, %v3780
        %v3796 = vpack.c.b16 %v3783, %v3782
        %v3797 = vpack.c.b16 %v3785, %v3784
        %v3798 = vpack.c.b16 %v3787, %v3786
        %v3799 = vpack.c.b16 %v3789, %v3788
        %v3800 = vpack.c.b16 %v3791, %v3790
        %v3801 = vpack.c.b16 %v3793, %v3792
        %v3803 = vsel %vm661, %v3794, 0
        %v3806 = vsel %vm661, %v3795, 0
        %v3809 = vsel %vm661, %v3796, 0
        %v3812 = vsel %vm661, %v3797, 0
        %v3815 = vsel %vm661, %v3798, 0
        %v3818 = vsel %vm661, %v3799, 0
        %v3821 = vsel %vm661, %v3800, 0
        %v3824 = vsel %vm661, %v3801, 0
        %v3827 = vsel %vm686, %v3731, 0
        %v3830 = vsel %vm686, %v3732, 0
        %3832 = vmatpush.bf16.msra.mxu0 0
        %3833 = vmatpush.bf16.msra.mxu0 0
        %3834 = vmatpush.bf16.msra.mxu0 0
        %3835 = vmatpush.bf16.msra.mxu0 0
        %3836 = vmatpush.bf16.msra.mxu0 0
        %3837 = vmatpush.bf16.msra.mxu0 0
        %3838 = vmatpush.bf16.msra.mxu0 0
        %3839 = vmatpush.bf16.msra.mxu0 %v3827
        %3840 = vmatmul.bf16.gmra.mxu0 %v3803
        %v3841 = vpop.f32.mrf.mxu0
        %v3842 = vadd.f32 0.0, %v3841
        %v3843 = vpop.f32.mrf.mxu0
        %v3844 = vadd.f32 0.0, %v3843
        %3845 = vmatmul.bf16.gmra.mxu0 %v3806
        %v3846 = vpop.f32.mrf.mxu0
        %v3847 = vadd.f32 0.0, %v3846
        %v3848 = vpop.f32.mrf.mxu0
        %v3849 = vadd.f32 0.0, %v3848
        %3850 = vmatmul.bf16.gmra.mxu0 %v3809
        %v3851 = vpop.f32.mrf.mxu0
        %v3852 = vadd.f32 0.0, %v3851
        %v3853 = vpop.f32.mrf.mxu0
        %v3854 = vadd.f32 0.0, %v3853
        %3855 = vmatmul.bf16.gmra.mxu0 %v3812
        %v3856 = vpop.f32.mrf.mxu0
        %v3857 = vadd.f32 0.0, %v3856
        %v3858 = vpop.f32.mrf.mxu0
        %v3859 = vadd.f32 0.0, %v3858
        %3860 = vmatmul.bf16.gmra.mxu0 %v3815
        %v3861 = vpop.f32.mrf.mxu0
        %v3862 = vadd.f32 0.0, %v3861
        %v3863 = vpop.f32.mrf.mxu0
        %v3864 = vadd.f32 0.0, %v3863
        %3865 = vmatmul.bf16.gmra.mxu0 %v3818
        %v3866 = vpop.f32.mrf.mxu0
        %v3867 = vadd.f32 0.0, %v3866
        %v3868 = vpop.f32.mrf.mxu0
        %v3869 = vadd.f32 0.0, %v3868
        %3870 = vmatmul.bf16.gmra.mxu0 %v3821
        %v3871 = vpop.f32.mrf.mxu0
        %v3872 = vadd.f32 0.0, %v3871
        %v3873 = vpop.f32.mrf.mxu0
        %v3874 = vadd.f32 0.0, %v3873
        %3875 = vmatmul.bf16.gmra.mxu0 %v3824
        %v3876 = vpop.f32.mrf.mxu0
        %v3877 = vadd.f32 0.0, %v3876
        %v3878 = vpop.f32.mrf.mxu0
        %v3879 = vadd.f32 0.0, %v3878
        %3880 = vdwg.mxu0
        %3881 = vmatpush.bf16.msra.mxu0 0
        %3882 = vmatpush.bf16.msra.mxu0 0
        %3883 = vmatpush.bf16.msra.mxu0 0
        %3884 = vmatpush.bf16.msra.mxu0 0
        %3885 = vmatpush.bf16.msra.mxu0 0
        %3886 = vmatpush.bf16.msra.mxu0 0
        %3887 = vmatpush.bf16.msra.mxu0 0
        %3888 = vmatpush.bf16.msra.mxu0 %v3830
        %3889 = vmatmul.bf16.gmra.mxu0 %v3803
        %v3890 = vpop.f32.mrf.mxu0
        %v3891 = vadd.f32 0.0, %v3890
        %v3892 = vpop.f32.mrf.mxu0
        %v3893 = vadd.f32 0.0, %v3892
        %3894 = vmatmul.bf16.gmra.mxu0 %v3806
        %v3895 = vpop.f32.mrf.mxu0
        %v3896 = vadd.f32 0.0, %v3895
        %v3897 = vpop.f32.mrf.mxu0
        %v3898 = vadd.f32 0.0, %v3897
        %3899 = vmatmul.bf16.gmra.mxu0 %v3809
        %v3900 = vpop.f32.mrf.mxu0
        %v3901 = vadd.f32 0.0, %v3900
        %v3902 = vpop.f32.mrf.mxu0
        %v3903 = vadd.f32 0.0, %v3902
        %3904 = vmatmul.bf16.gmra.mxu0 %v3812
        %v3905 = vpop.f32.mrf.mxu0
        %v3906 = vadd.f32 0.0, %v3905
        %v3907 = vpop.f32.mrf.mxu0
        %v3908 = vadd.f32 0.0, %v3907
        %3909 = vmatmul.bf16.gmra.mxu0 %v3815
        %v3910 = vpop.f32.mrf.mxu0
        %v3911 = vadd.f32 0.0, %v3910
        %v3912 = vpop.f32.mrf.mxu0
        %v3913 = vadd.f32 0.0, %v3912
        %3914 = vmatmul.bf16.gmra.mxu0 %v3818
        %v3915 = vpop.f32.mrf.mxu0
        %v3916 = vadd.f32 0.0, %v3915
        %v3917 = vpop.f32.mrf.mxu0
        %v3918 = vadd.f32 0.0, %v3917
        %3919 = vmatmul.bf16.gmra.mxu0 %v3821
        %v3920 = vpop.f32.mrf.mxu0
        %v3921 = vadd.f32 0.0, %v3920
        %v3922 = vpop.f32.mrf.mxu0
        %v3923 = vadd.f32 0.0, %v3922
        %3924 = vmatmul.bf16.gmra.mxu0 %v3824
        %v3925 = vpop.f32.mrf.mxu0
        %v3926 = vadd.f32 0.0, %v3925
        %v3927 = vpop.f32.mrf.mxu0
        %v3928 = vadd.f32 0.0, %v3927
        %3929 = vdwg.mxu0
        %v3930 = vadd.f32 %v3654, %v3842
        %v3931 = vadd.f32 %v3655, %v3891
        %v3932 = vadd.f32 %v3656, %v3844
        %v3933 = vadd.f32 %v3657, %v3893
        %v3934 = vadd.f32 %v3658, %v3847
        %v3935 = vadd.f32 %v3659, %v3896
        %v3936 = vadd.f32 %v3660, %v3849
        %v3937 = vadd.f32 %v3661, %v3898
        %v3938 = vadd.f32 %v3662, %v3852
        %v3939 = vadd.f32 %v3663, %v3901
        %v3940 = vadd.f32 %v3664, %v3854
        %v3941 = vadd.f32 %v3665, %v3903
        %v3942 = vadd.f32 %v3666, %v3857
        %v3943 = vadd.f32 %v3667, %v3906
        %v3944 = vadd.f32 %v3668, %v3859
        %v3945 = vadd.f32 %v3669, %v3908
        %v3946 = vadd.f32 %v3670, %v3862
        %v3947 = vadd.f32 %v3671, %v3911
        %v3948 = vadd.f32 %v3672, %v3864
        %v3949 = vadd.f32 %v3673, %v3913
        %v3950 = vadd.f32 %v3674, %v3867
        %v3951 = vadd.f32 %v3675, %v3916
        %v3952 = vadd.f32 %v3676, %v3869
        %v3953 = vadd.f32 %v3677, %v3918
        %v3954 = vadd.f32 %v3678, %v3872
        %v3955 = vadd.f32 %v3679, %v3921
        %v3956 = vadd.f32 %v3680, %v3874
        %v3957 = vadd.f32 %v3681, %v3923
        %v3958 = vadd.f32 %v3682, %v3877
        %v3959 = vadd.f32 %v3683, %v3926
        %v3960 = vadd.f32 %v3684, %v3879
        %v3961 = vadd.f32 %v3685, %v3928
        %s3962 = scalar_lea.vmem %s4, 448
        %v3963 = vld [vmem:[%s3962] sm:$0xf]
        %v3964 = vld [vmem:[%s3962 + $0x4] sm:$0xf]
        %v3965 = vld [vmem:[%s3962 + $0x8] sm:$0xf]
        %v3966 = vld [vmem:[%s3962 + $0xc] sm:$0xf]
        %v3967 = vld [vmem:[%s3962 + $0x10] sm:$0xf]
        %v3968 = vld [vmem:[%s3962 + $0x14] sm:$0xf]
        %v3969 = vld [vmem:[%s3962 + $0x18] sm:$0xf]
        %v3970 = vld [vmem:[%s3962 + $0x1c] sm:$0xf]
        %v3971 = vld [vmem:[%s3962 + $0x20] sm:$0xf]
        %v3972 = vld [vmem:[%s3962 + $0x24] sm:$0xf]
        %v3973 = vld [vmem:[%s3962 + $0x28] sm:$0xf]
        %v3974 = vld [vmem:[%s3962 + $0x2c] sm:$0xf]
        %v3975 = vld [vmem:[%s3962 + $0x30] sm:$0xf]
        %v3976 = vld [vmem:[%s3962 + $0x34] sm:$0xf]
        %v3977 = vld [vmem:[%s3962 + $0x38] sm:$0xf]
        %v3978 = vld [vmem:[%s3962 + $0x3c] sm:$0xf]
        %v3995 = vunpack.c.l.b16 %v3963
        %v3996 = vunpack.c.l.b16 %v3964
        %v3997 = vunpack.c.l.b16 %v3965
        %v3998 = vunpack.c.l.b16 %v3966
        %v3999 = vunpack.c.l.b16 %v3967
        %v4000 = vunpack.c.l.b16 %v3968
        %v4001 = vunpack.c.l.b16 %v3969
        %v4002 = vunpack.c.l.b16 %v3970
        %v4003 = vunpack.c.l.b16 %v3971
        %v4004 = vunpack.c.l.b16 %v3972
        %v4005 = vunpack.c.l.b16 %v3973
        %v4006 = vunpack.c.l.b16 %v3974
        %v4007 = vunpack.c.l.b16 %v3975
        %v4008 = vunpack.c.l.b16 %v3976
        %v4009 = vunpack.c.l.b16 %v3977
        %v4010 = vunpack.c.l.b16 %v3978
        %v4011 = vpack.c.b16 %v3996, %v3995
        %v4012 = vpack.c.b16 %v3998, %v3997
        %v4013 = vpack.c.b16 %v4000, %v3999
        %v4014 = vpack.c.b16 %v4002, %v4001
        %v4015 = vpack.c.b16 %v4004, %v4003
        %v4016 = vpack.c.b16 %v4006, %v4005
        %v4017 = vpack.c.b16 %v4008, %v4007
        %v4018 = vpack.c.b16 %v4010, %v4009
        %v4020 = vsel %vm498, %v4011, 0
        %v4023 = vsel %vm498, %v4012, 0
        %v4026 = vsel %vm498, %v4013, 0
        %v4029 = vsel %vm498, %v4014, 0
        %v4032 = vsel %vm498, %v4015, 0
        %v4035 = vsel %vm498, %v4016, 0
        %v4038 = vsel %vm498, %v4017, 0
        %v4041 = vsel %vm498, %v4018, 0
        %4043 = vmatpush.bf16.msra.mxu0 0
        %4044 = vmatpush.bf16.msra.mxu0 0
        %4045 = vmatpush.bf16.msra.mxu0 0
        %4046 = vmatpush.bf16.msra.mxu0 0
        %4047 = vmatpush.bf16.msra.mxu0 0
        %4048 = vmatpush.bf16.msra.mxu0 0
        %4049 = vmatpush.bf16.msra.mxu0 %v3743
        %4050 = vmatpush.bf16.msra.mxu0 %v3741
        %4051 = vmatmul.bf16.gmra.mxu0 %v4020
        %v4052 = vpop.f32.mrf.mxu0
        %v4053 = vadd.f32 0.0, %v4052
        %v4054 = vpop.f32.mrf.mxu0
        %v4055 = vadd.f32 0.0, %v4054
        %4056 = vmatmul.bf16.gmra.mxu0 %v4023
        %v4057 = vpop.f32.mrf.mxu0
        %v4058 = vadd.f32 0.0, %v4057
        %v4059 = vpop.f32.mrf.mxu0
        %v4060 = vadd.f32 0.0, %v4059
        %4061 = vmatmul.bf16.gmra.mxu0 %v4026
        %v4062 = vpop.f32.mrf.mxu0
        %v4063 = vadd.f32 0.0, %v4062
        %v4064 = vpop.f32.mrf.mxu0
        %v4065 = vadd.f32 0.0, %v4064
        %4066 = vmatmul.bf16.gmra.mxu0 %v4029
        %v4067 = vpop.f32.mrf.mxu0
        %v4068 = vadd.f32 0.0, %v4067
        %v4069 = vpop.f32.mrf.mxu0
        %v4070 = vadd.f32 0.0, %v4069
        %4071 = vmatmul.bf16.gmra.mxu0 %v4032
        %v4072 = vpop.f32.mrf.mxu0
        %v4073 = vadd.f32 0.0, %v4072
        %v4074 = vpop.f32.mrf.mxu0
        %v4075 = vadd.f32 0.0, %v4074
        %4076 = vmatmul.bf16.gmra.mxu0 %v4035
        %v4077 = vpop.f32.mrf.mxu0
        %v4078 = vadd.f32 0.0, %v4077
        %v4079 = vpop.f32.mrf.mxu0
        %v4080 = vadd.f32 0.0, %v4079
        %4081 = vmatmul.bf16.gmra.mxu0 %v4038
        %v4082 = vpop.f32.mrf.mxu0
        %v4083 = vadd.f32 0.0, %v4082
        %v4084 = vpop.f32.mrf.mxu0
        %v4085 = vadd.f32 0.0, %v4084
        %4086 = vmatmul.bf16.gmra.mxu0 %v4041
        %v4087 = vpop.f32.mrf.mxu0
        %v4088 = vadd.f32 0.0, %v4087
        %v4089 = vpop.f32.mrf.mxu0
        %v4090 = vadd.f32 0.0, %v4089
        %4091 = vdwg.mxu0
        %4092 = vmatpush.bf16.msra.mxu0 0
        %4093 = vmatpush.bf16.msra.mxu0 0
        %4094 = vmatpush.bf16.msra.mxu0 0
        %4095 = vmatpush.bf16.msra.mxu0 0
        %4096 = vmatpush.bf16.msra.mxu0 0
        %4097 = vmatpush.bf16.msra.mxu0 0
        %4098 = vmatpush.bf16.msra.mxu0 %v3744
        %4099 = vmatpush.bf16.msra.mxu0 %v3742
        %4100 = vmatmul.bf16.gmra.mxu0 %v4020
        %v4101 = vpop.f32.mrf.mxu0
        %v4102 = vadd.f32 0.0, %v4101
        %v4103 = vpop.f32.mrf.mxu0
        %v4104 = vadd.f32 0.0, %v4103
        %4105 = vmatmul.bf16.gmra.mxu0 %v4023
        %v4106 = vpop.f32.mrf.mxu0
        %v4107 = vadd.f32 0.0, %v4106
        %v4108 = vpop.f32.mrf.mxu0
        %v4109 = vadd.f32 0.0, %v4108
        %4110 = vmatmul.bf16.gmra.mxu0 %v4026
        %v4111 = vpop.f32.mrf.mxu0
        %v4112 = vadd.f32 0.0, %v4111
        %v4113 = vpop.f32.mrf.mxu0
        %v4114 = vadd.f32 0.0, %v4113
        %4115 = vmatmul.bf16.gmra.mxu0 %v4029
        %v4116 = vpop.f32.mrf.mxu0
        %v4117 = vadd.f32 0.0, %v4116
        %v4118 = vpop.f32.mrf.mxu0
        %v4119 = vadd.f32 0.0, %v4118
        %4120 = vmatmul.bf16.gmra.mxu0 %v4032
        %v4121 = vpop.f32.mrf.mxu0
        %v4122 = vadd.f32 0.0, %v4121
        %v4123 = vpop.f32.mrf.mxu0
        %v4124 = vadd.f32 0.0, %v4123
        %4125 = vmatmul.bf16.gmra.mxu0 %v4035
        %v4126 = vpop.f32.mrf.mxu0
        %v4127 = vadd.f32 0.0, %v4126
        %v4128 = vpop.f32.mrf.mxu0
        %v4129 = vadd.f32 0.0, %v4128
        %4130 = vmatmul.bf16.gmra.mxu0 %v4038
        %v4131 = vpop.f32.mrf.mxu0
        %v4132 = vadd.f32 0.0, %v4131
        %v4133 = vpop.f32.mrf.mxu0
        %v4134 = vadd.f32 0.0, %v4133
        %4135 = vmatmul.bf16.gmra.mxu0 %v4041
        %v4136 = vpop.f32.mrf.mxu0
        %v4137 = vadd.f32 0.0, %v4136
        %v4138 = vpop.f32.mrf.mxu0
        %v4139 = vadd.f32 0.0, %v4138
        %4140 = vdwg.mxu0
        %v4141 = vadd.f32 %v3930, %v4053
        %v4142 = vadd.f32 %v3931, %v4102
        %v4143 = vadd.f32 %v3932, %v4055
        %v4144 = vadd.f32 %v3933, %v4104
        %v4145 = vadd.f32 %v3934, %v4058
        %v4146 = vadd.f32 %v3935, %v4107
        %v4147 = vadd.f32 %v3936, %v4060
        %v4148 = vadd.f32 %v3937, %v4109
        %v4149 = vadd.f32 %v3938, %v4063
        %v4150 = vadd.f32 %v3939, %v4112
        %v4151 = vadd.f32 %v3940, %v4065
        %v4152 = vadd.f32 %v3941, %v4114
        %v4153 = vadd.f32 %v3942, %v4068
        %v4154 = vadd.f32 %v3943, %v4117
        %v4155 = vadd.f32 %v3944, %v4070
        %v4156 = vadd.f32 %v3945, %v4119
        %v4157 = vadd.f32 %v3946, %v4073
        %v4158 = vadd.f32 %v3947, %v4122
        %v4159 = vadd.f32 %v3948, %v4075
        %v4160 = vadd.f32 %v3949, %v4124
        %v4161 = vadd.f32 %v3950, %v4078
        %v4162 = vadd.f32 %v3951, %v4127
        %v4163 = vadd.f32 %v3952, %v4080
        %v4164 = vadd.f32 %v3953, %v4129
        %v4165 = vadd.f32 %v3954, %v4083
        %v4166 = vadd.f32 %v3955, %v4132
        %v4167 = vadd.f32 %v3956, %v4085
        %v4168 = vadd.f32 %v3957, %v4134
        %v4169 = vadd.f32 %v3958, %v4088
        %v4170 = vadd.f32 %v3959, %v4137
        %v4171 = vadd.f32 %v3960, %v4090
        %v4172 = vadd.f32 %v3961, %v4139
        %4173 = vst [vmem:[#allocation1] ss:$2 sm:$0xff] %v356
        %v4174 = vld.sshfl [vmem:[#allocation1] sm:$0xff pattern:$0x75316420]
        %v4175 = vld.sshfl [vmem:[#allocation1 + $0x8] sm:$0xff pattern:$0x75316420]
        %4178 = vrot.lane.b32.xlu0 %v4174, 111
        %v4179 = vpop.permute.xlu0 %4178
        %4180 = vrot.lane.b32.xlu0 %v4175, 111
        %v4181 = vpop.permute.xlu0 %4180
        %vm4182 = vcmp.lt.s32.totalorder %v376, 111
        %v4183 = vsel %vm4182, %v4179, %v4181
        %v4184 = vsel %vm4182, %v4181, %v4179
        %4185 = vrot.lane.b32.xlu0 %v357, 111
        %v4186 = vpop.permute.xlu0 %4185
        %4187 = vrot.lane.b32.xlu0 %v359, 111
        %v4188 = vpop.permute.xlu0 %4187
        %4189 = vrot.lane.b32.xlu0 %v361, 111
        %v4190 = vpop.permute.xlu0 %4189
        %4191 = vrot.lane.b32.xlu0 %v363, 111
        %v4192 = vpop.permute.xlu0 %4191
        %4193 = vrot.lane.b32.xlu0 %v358, 111
        %v4194 = vpop.permute.xlu0 %4193
        %4195 = vrot.lane.b32.xlu0 %v360, 111
        %v4196 = vpop.permute.xlu0 %4195
        %4197 = vrot.lane.b32.xlu0 %v362, 111
        %v4198 = vpop.permute.xlu0 %4197
        %4199 = vrot.lane.b32.xlu0 %v364, 111
        %v4200 = vpop.permute.xlu0 %4199
        %v4201 = vsel %vm4182, %v4186, %v4194
        %v4202 = vsel %vm4182, %v4188, %v4196
        %v4203 = vsel %vm4182, %v4190, %v4198
        %v4204 = vsel %vm4182, %v4192, %v4200
        %v4205 = vsel %vm4182, %v4194, %v4186
        %v4206 = vsel %vm4182, %v4196, %v4188
        %v4207 = vsel %vm4182, %v4198, %v4190
        %v4208 = vsel %vm4182, %v4200, %v4192
        %s4209 = scalar_lea.vmem %s6, 16
        %v4210 = vld [vmem:[%s4209] sm:$0x3]
        %v4212 = vperm.slane %v4210, 0
        %v4213 = vperm.slane %v4210, 1
        %v4216 = vmul.f32 %v4183, %v4212
        %v4217 = vmul.f32 %v4184, %v4213
        %v4218 = vpack.c.bf16 %v4216, %v4216
        %v4219 = vpack.c.bf16 %v4217, %v4217
        %v4220 = vmul.f32 %v4201, %v4212
        %v4221 = vmul.f32 %v4205, %v4213
        %v4222 = vmul.f32 %v4202, %v4212
        %v4223 = vmul.f32 %v4206, %v4213
        %v4224 = vmul.f32 %v4203, %v4212
        %v4225 = vmul.f32 %v4207, %v4213
        %v4226 = vmul.f32 %v4204, %v4212
        %v4227 = vmul.f32 %v4208, %v4213
        %v4228 = vpack.c.bf16 %v4222, %v4220
        %v4229 = vpack.c.bf16 %v4223, %v4221
        %v4230 = vpack.c.bf16 %v4226, %v4224
        %v4231 = vpack.c.bf16 %v4227, %v4225
        %s4232 = scalar_lea.vmem %s3, 512
        %v4233 = vld [vmem:[%s4232] sm:$0xf]
        %v4234 = vld [vmem:[%s4232 + $0x4] sm:$0xf]
        %v4235 = vld [vmem:[%s4232 + $0x8] sm:$0xf]
        %v4236 = vld [vmem:[%s4232 + $0xc] sm:$0xf]
        %v4237 = vld [vmem:[%s4232 + $0x10] sm:$0xf]
        %v4238 = vld [vmem:[%s4232 + $0x14] sm:$0xf]
        %v4239 = vld [vmem:[%s4232 + $0x18] sm:$0xf]
        %v4240 = vld [vmem:[%s4232 + $0x1c] sm:$0xf]
        %v4241 = vld [vmem:[%s4232 + $0x20] sm:$0xf]
        %v4242 = vld [vmem:[%s4232 + $0x24] sm:$0xf]
        %v4243 = vld [vmem:[%s4232 + $0x28] sm:$0xf]
        %v4244 = vld [vmem:[%s4232 + $0x2c] sm:$0xf]
        %v4245 = vld [vmem:[%s4232 + $0x30] sm:$0xf]
        %v4246 = vld [vmem:[%s4232 + $0x34] sm:$0xf]
        %v4247 = vld [vmem:[%s4232 + $0x38] sm:$0xf]
        %v4248 = vld [vmem:[%s4232 + $0x3c] sm:$0xf]
        %v4265 = vunpack.c.l.b16 %v4233
        %v4266 = vunpack.c.l.b16 %v4234
        %v4267 = vunpack.c.l.b16 %v4235
        %v4268 = vunpack.c.l.b16 %v4236
        %v4269 = vunpack.c.l.b16 %v4237
        %v4270 = vunpack.c.l.b16 %v4238
        %v4271 = vunpack.c.l.b16 %v4239
        %v4272 = vunpack.c.l.b16 %v4240
        %v4273 = vunpack.c.l.b16 %v4241
        %v4274 = vunpack.c.l.b16 %v4242
        %v4275 = vunpack.c.l.b16 %v4243
        %v4276 = vunpack.c.l.b16 %v4244
        %v4277 = vunpack.c.l.b16 %v4245
        %v4278 = vunpack.c.l.b16 %v4246
        %v4279 = vunpack.c.l.b16 %v4247
        %v4280 = vunpack.c.l.b16 %v4248
        %v4281 = vpack.c.b16 %v4266, %v4265
        %v4282 = vpack.c.b16 %v4268, %v4267
        %v4283 = vpack.c.b16 %v4270, %v4269
        %v4284 = vpack.c.b16 %v4272, %v4271
        %v4285 = vpack.c.b16 %v4274, %v4273
        %v4286 = vpack.c.b16 %v4276, %v4275
        %v4287 = vpack.c.b16 %v4278, %v4277
        %v4288 = vpack.c.b16 %v4280, %v4279
        %v4290 = vsel %vm661, %v4281, 0
        %v4293 = vsel %vm661, %v4282, 0
        %v4296 = vsel %vm661, %v4283, 0
        %v4299 = vsel %vm661, %v4284, 0
        %v4302 = vsel %vm661, %v4285, 0
        %v4305 = vsel %vm661, %v4286, 0
        %v4308 = vsel %vm661, %v4287, 0
        %v4311 = vsel %vm661, %v4288, 0
        %v4314 = vsel %vm686, %v4218, 0
        %v4317 = vsel %vm686, %v4219, 0
        %4319 = vmatpush.bf16.msra.mxu0 0
        %4320 = vmatpush.bf16.msra.mxu0 0
        %4321 = vmatpush.bf16.msra.mxu0 0
        %4322 = vmatpush.bf16.msra.mxu0 0
        %4323 = vmatpush.bf16.msra.mxu0 0
        %4324 = vmatpush.bf16.msra.mxu0 0
        %4325 = vmatpush.bf16.msra.mxu0 0
        %4326 = vmatpush.bf16.msra.mxu0 %v4314
        %4327 = vmatmul.bf16.gmra.mxu0 %v4290
        %v4328 = vpop.f32.mrf.mxu0
        %v4329 = vadd.f32 0.0, %v4328
        %v4330 = vpop.f32.mrf.mxu0
        %v4331 = vadd.f32 0.0, %v4330
        %4332 = vmatmul.bf16.gmra.mxu0 %v4293
        %v4333 = vpop.f32.mrf.mxu0
        %v4334 = vadd.f32 0.0, %v4333
        %v4335 = vpop.f32.mrf.mxu0
        %v4336 = vadd.f32 0.0, %v4335
        %4337 = vmatmul.bf16.gmra.mxu0 %v4296
        %v4338 = vpop.f32.mrf.mxu0
        %v4339 = vadd.f32 0.0, %v4338
        %v4340 = vpop.f32.mrf.mxu0
        %v4341 = vadd.f32 0.0, %v4340
        %4342 = vmatmul.bf16.gmra.mxu0 %v4299
        %v4343 = vpop.f32.mrf.mxu0
        %v4344 = vadd.f32 0.0, %v4343
        %v4345 = vpop.f32.mrf.mxu0
        %v4346 = vadd.f32 0.0, %v4345
        %4347 = vmatmul.bf16.gmra.mxu0 %v4302
        %v4348 = vpop.f32.mrf.mxu0
        %v4349 = vadd.f32 0.0, %v4348
        %v4350 = vpop.f32.mrf.mxu0
        %v4351 = vadd.f32 0.0, %v4350
        %4352 = vmatmul.bf16.gmra.mxu0 %v4305
        %v4353 = vpop.f32.mrf.mxu0
        %v4354 = vadd.f32 0.0, %v4353
        %v4355 = vpop.f32.mrf.mxu0
        %v4356 = vadd.f32 0.0, %v4355
        %4357 = vmatmul.bf16.gmra.mxu0 %v4308
        %v4358 = vpop.f32.mrf.mxu0
        %v4359 = vadd.f32 0.0, %v4358
        %v4360 = vpop.f32.mrf.mxu0
        %v4361 = vadd.f32 0.0, %v4360
        %4362 = vmatmul.bf16.gmra.mxu0 %v4311
        %v4363 = vpop.f32.mrf.mxu0
        %v4364 = vadd.f32 0.0, %v4363
        %v4365 = vpop.f32.mrf.mxu0
        %v4366 = vadd.f32 0.0, %v4365
        %4367 = vdwg.mxu0
        %4368 = vmatpush.bf16.msra.mxu0 0
        %4369 = vmatpush.bf16.msra.mxu0 0
        %4370 = vmatpush.bf16.msra.mxu0 0
        %4371 = vmatpush.bf16.msra.mxu0 0
        %4372 = vmatpush.bf16.msra.mxu0 0
        %4373 = vmatpush.bf16.msra.mxu0 0
        %4374 = vmatpush.bf16.msra.mxu0 0
        %4375 = vmatpush.bf16.msra.mxu0 %v4317
        %4376 = vmatmul.bf16.gmra.mxu0 %v4290
        %v4377 = vpop.f32.mrf.mxu0
        %v4378 = vadd.f32 0.0, %v4377
        %v4379 = vpop.f32.mrf.mxu0
        %v4380 = vadd.f32 0.0, %v4379
        %4381 = vmatmul.bf16.gmra.mxu0 %v4293
        %v4382 = vpop.f32.mrf.mxu0
        %v4383 = vadd.f32 0.0, %v4382
        %v4384 = vpop.f32.mrf.mxu0
        %v4385 = vadd.f32 0.0, %v4384
        %4386 = vmatmul.bf16.gmra.mxu0 %v4296
        %v4387 = vpop.f32.mrf.mxu0
        %v4388 = vadd.f32 0.0, %v4387
        %v4389 = vpop.f32.mrf.mxu0
        %v4390 = vadd.f32 0.0, %v4389
        %4391 = vmatmul.bf16.gmra.mxu0 %v4299
        %v4392 = vpop.f32.mrf.mxu0
        %v4393 = vadd.f32 0.0, %v4392
        %v4394 = vpop.f32.mrf.mxu0
        %v4395 = vadd.f32 0.0, %v4394
        %4396 = vmatmul.bf16.gmra.mxu0 %v4302
        %v4397 = vpop.f32.mrf.mxu0
        %v4398 = vadd.f32 0.0, %v4397
        %v4399 = vpop.f32.mrf.mxu0
        %v4400 = vadd.f32 0.0, %v4399
        %4401 = vmatmul.bf16.gmra.mxu0 %v4305
        %v4402 = vpop.f32.mrf.mxu0
        %v4403 = vadd.f32 0.0, %v4402
        %v4404 = vpop.f32.mrf.mxu0
        %v4405 = vadd.f32 0.0, %v4404
        %4406 = vmatmul.bf16.gmra.mxu0 %v4308
        %v4407 = vpop.f32.mrf.mxu0
        %v4408 = vadd.f32 0.0, %v4407
        %v4409 = vpop.f32.mrf.mxu0
        %v4410 = vadd.f32 0.0, %v4409
        %4411 = vmatmul.bf16.gmra.mxu0 %v4311
        %v4412 = vpop.f32.mrf.mxu0
        %v4413 = vadd.f32 0.0, %v4412
        %v4414 = vpop.f32.mrf.mxu0
        %v4415 = vadd.f32 0.0, %v4414
        %4416 = vdwg.mxu0
        %v4417 = vadd.f32 %v4141, %v4329
        %v4418 = vadd.f32 %v4142, %v4378
        %v4419 = vadd.f32 %v4143, %v4331
        %v4420 = vadd.f32 %v4144, %v4380
        %v4421 = vadd.f32 %v4145, %v4334
        %v4422 = vadd.f32 %v4146, %v4383
        %v4423 = vadd.f32 %v4147, %v4336
        %v4424 = vadd.f32 %v4148, %v4385
        %v4425 = vadd.f32 %v4149, %v4339
        %v4426 = vadd.f32 %v4150, %v4388
        %v4427 = vadd.f32 %v4151, %v4341
        %v4428 = vadd.f32 %v4152, %v4390
        %v4429 = vadd.f32 %v4153, %v4344
        %v4430 = vadd.f32 %v4154, %v4393
        %v4431 = vadd.f32 %v4155, %v4346
        %v4432 = vadd.f32 %v4156, %v4395
        %v4433 = vadd.f32 %v4157, %v4349
        %v4434 = vadd.f32 %v4158, %v4398
        %v4435 = vadd.f32 %v4159, %v4351
        %v4436 = vadd.f32 %v4160, %v4400
        %v4437 = vadd.f32 %v4161, %v4354
        %v4438 = vadd.f32 %v4162, %v4403
        %v4439 = vadd.f32 %v4163, %v4356
        %v4440 = vadd.f32 %v4164, %v4405
        %v4441 = vadd.f32 %v4165, %v4359
        %v4442 = vadd.f32 %v4166, %v4408
        %v4443 = vadd.f32 %v4167, %v4361
        %v4444 = vadd.f32 %v4168, %v4410
        %v4445 = vadd.f32 %v4169, %v4364
        %v4446 = vadd.f32 %v4170, %v4413
        %v4447 = vadd.f32 %v4171, %v4366
        %v4448 = vadd.f32 %v4172, %v4415
        %s4449 = scalar_lea.vmem %s4, 512
        %v4450 = vld [vmem:[%s4449] sm:$0xf]
        %v4451 = vld [vmem:[%s4449 + $0x4] sm:$0xf]
        %v4452 = vld [vmem:[%s4449 + $0x8] sm:$0xf]
        %v4453 = vld [vmem:[%s4449 + $0xc] sm:$0xf]
        %v4454 = vld [vmem:[%s4449 + $0x10] sm:$0xf]
        %v4455 = vld [vmem:[%s4449 + $0x14] sm:$0xf]
        %v4456 = vld [vmem:[%s4449 + $0x18] sm:$0xf]
        %v4457 = vld [vmem:[%s4449 + $0x1c] sm:$0xf]
        %v4458 = vld [vmem:[%s4449 + $0x20] sm:$0xf]
        %v4459 = vld [vmem:[%s4449 + $0x24] sm:$0xf]
        %v4460 = vld [vmem:[%s4449 + $0x28] sm:$0xf]
        %v4461 = vld [vmem:[%s4449 + $0x2c] sm:$0xf]
        %v4462 = vld [vmem:[%s4449 + $0x30] sm:$0xf]
        %v4463 = vld [vmem:[%s4449 + $0x34] sm:$0xf]
        %v4464 = vld [vmem:[%s4449 + $0x38] sm:$0xf]
        %v4465 = vld [vmem:[%s4449 + $0x3c] sm:$0xf]
        %v4482 = vunpack.c.l.b16 %v4450
        %v4483 = vunpack.c.l.b16 %v4451
        %v4484 = vunpack.c.l.b16 %v4452
        %v4485 = vunpack.c.l.b16 %v4453
        %v4486 = vunpack.c.l.b16 %v4454
        %v4487 = vunpack.c.l.b16 %v4455
        %v4488 = vunpack.c.l.b16 %v4456
        %v4489 = vunpack.c.l.b16 %v4457
        %v4490 = vunpack.c.l.b16 %v4458
        %v4491 = vunpack.c.l.b16 %v4459
        %v4492 = vunpack.c.l.b16 %v4460
        %v4493 = vunpack.c.l.b16 %v4461
        %v4494 = vunpack.c.l.b16 %v4462
        %v4495 = vunpack.c.l.b16 %v4463
        %v4496 = vunpack.c.l.b16 %v4464
        %v4497 = vunpack.c.l.b16 %v4465
        %v4498 = vpack.c.b16 %v4483, %v4482
        %v4499 = vpack.c.b16 %v4485, %v4484
        %v4500 = vpack.c.b16 %v4487, %v4486
        %v4501 = vpack.c.b16 %v4489, %v4488
        %v4502 = vpack.c.b16 %v4491, %v4490
        %v4503 = vpack.c.b16 %v4493, %v4492
        %v4504 = vpack.c.b16 %v4495, %v4494
        %v4505 = vpack.c.b16 %v4497, %v4496
        %v4507 = vsel %vm498, %v4498, 0
        %v4510 = vsel %vm498, %v4499, 0
        %v4513 = vsel %vm498, %v4500, 0
        %v4516 = vsel %vm498, %v4501, 0
        %v4519 = vsel %vm498, %v4502, 0
        %v4522 = vsel %vm498, %v4503, 0
        %v4525 = vsel %vm498, %v4504, 0
        %v4528 = vsel %vm498, %v4505, 0
        %4530 = vmatpush.bf16.msra.mxu0 0
        %4531 = vmatpush.bf16.msra.mxu0 0
        %4532 = vmatpush.bf16.msra.mxu0 0
        %4533 = vmatpush.bf16.msra.mxu0 0
        %4534 = vmatpush.bf16.msra.mxu0 0
        %4535 = vmatpush.bf16.msra.mxu0 0
        %4536 = vmatpush.bf16.msra.mxu0 %v4230
        %4537 = vmatpush.bf16.msra.mxu0 %v4228
        %4538 = vmatmul.bf16.gmra.mxu0 %v4507
        %v4539 = vpop.f32.mrf.mxu0
        %v4540 = vadd.f32 0.0, %v4539
        %v4541 = vpop.f32.mrf.mxu0
        %v4542 = vadd.f32 0.0, %v4541
        %4543 = vmatmul.bf16.gmra.mxu0 %v4510
        %v4544 = vpop.f32.mrf.mxu0
        %v4545 = vadd.f32 0.0, %v4544
        %v4546 = vpop.f32.mrf.mxu0
        %v4547 = vadd.f32 0.0, %v4546
        %4548 = vmatmul.bf16.gmra.mxu0 %v4513
        %v4549 = vpop.f32.mrf.mxu0
        %v4550 = vadd.f32 0.0, %v4549
        %v4551 = vpop.f32.mrf.mxu0
        %v4552 = vadd.f32 0.0, %v4551
        %4553 = vmatmul.bf16.gmra.mxu0 %v4516
        %v4554 = vpop.f32.mrf.mxu0
        %v4555 = vadd.f32 0.0, %v4554
        %v4556 = vpop.f32.mrf.mxu0
        %v4557 = vadd.f32 0.0, %v4556
        %4558 = vmatmul.bf16.gmra.mxu0 %v4519
        %v4559 = vpop.f32.mrf.mxu0
        %v4560 = vadd.f32 0.0, %v4559
        %v4561 = vpop.f32.mrf.mxu0
        %v4562 = vadd.f32 0.0, %v4561
        %4563 = vmatmul.bf16.gmra.mxu0 %v4522
        %v4564 = vpop.f32.mrf.mxu0
        %v4565 = vadd.f32 0.0, %v4564
        %v4566 = vpop.f32.mrf.mxu0
        %v4567 = vadd.f32 0.0, %v4566
        %4568 = vmatmul.bf16.gmra.mxu0 %v4525
        %v4569 = vpop.f32.mrf.mxu0
        %v4570 = vadd.f32 0.0, %v4569
        %v4571 = vpop.f32.mrf.mxu0
        %v4572 = vadd.f32 0.0, %v4571
        %4573 = vmatmul.bf16.gmra.mxu0 %v4528
        %v4574 = vpop.f32.mrf.mxu0
        %v4575 = vadd.f32 0.0, %v4574
        %v4576 = vpop.f32.mrf.mxu0
        %v4577 = vadd.f32 0.0, %v4576
        %4578 = vdwg.mxu0
        %4579 = vmatpush.bf16.msra.mxu0 0
        %4580 = vmatpush.bf16.msra.mxu0 0
        %4581 = vmatpush.bf16.msra.mxu0 0
        %4582 = vmatpush.bf16.msra.mxu0 0
        %4583 = vmatpush.bf16.msra.mxu0 0
        %4584 = vmatpush.bf16.msra.mxu0 0
        %4585 = vmatpush.bf16.msra.mxu0 %v4231
        %4586 = vmatpush.bf16.msra.mxu0 %v4229
        %4587 = vmatmul.bf16.gmra.mxu0 %v4507
        %v4588 = vpop.f32.mrf.mxu0
        %v4589 = vadd.f32 0.0, %v4588
        %v4590 = vpop.f32.mrf.mxu0
        %v4591 = vadd.f32 0.0, %v4590
        %4592 = vmatmul.bf16.gmra.mxu0 %v4510
        %v4593 = vpop.f32.mrf.mxu0
        %v4594 = vadd.f32 0.0, %v4593
        %v4595 = vpop.f32.mrf.mxu0
        %v4596 = vadd.f32 0.0, %v4595
        %4597 = vmatmul.bf16.gmra.mxu0 %v4513
        %v4598 = vpop.f32.mrf.mxu0
        %v4599 = vadd.f32 0.0, %v4598
        %v4600 = vpop.f32.mrf.mxu0
        %v4601 = vadd.f32 0.0, %v4600
        %4602 = vmatmul.bf16.gmra.mxu0 %v4516
        %v4603 = vpop.f32.mrf.mxu0
        %v4604 = vadd.f32 0.0, %v4603
        %v4605 = vpop.f32.mrf.mxu0
        %v4606 = vadd.f32 0.0, %v4605
        %4607 = vmatmul.bf16.gmra.mxu0 %v4519
        %v4608 = vpop.f32.mrf.mxu0
        %v4609 = vadd.f32 0.0, %v4608
        %v4610 = vpop.f32.mrf.mxu0
        %v4611 = vadd.f32 0.0, %v4610
        %4612 = vmatmul.bf16.gmra.mxu0 %v4522
        %v4613 = vpop.f32.mrf.mxu0
        %v4614 = vadd.f32 0.0, %v4613
        %v4615 = vpop.f32.mrf.mxu0
        %v4616 = vadd.f32 0.0, %v4615
        %4617 = vmatmul.bf16.gmra.mxu0 %v4525
        %v4618 = vpop.f32.mrf.mxu0
        %v4619 = vadd.f32 0.0, %v4618
        %v4620 = vpop.f32.mrf.mxu0
        %v4621 = vadd.f32 0.0, %v4620
        %4622 = vmatmul.bf16.gmra.mxu0 %v4528
        %v4623 = vpop.f32.mrf.mxu0
        %v4624 = vadd.f32 0.0, %v4623
        %v4625 = vpop.f32.mrf.mxu0
        %v4626 = vadd.f32 0.0, %v4625
        %4627 = vdwg.mxu0
        %v4628 = vadd.f32 %v4417, %v4540
        %v4629 = vadd.f32 %v4418, %v4589
        %v4630 = vadd.f32 %v4419, %v4542
        %v4631 = vadd.f32 %v4420, %v4591
        %v4632 = vadd.f32 %v4421, %v4545
        %v4633 = vadd.f32 %v4422, %v4594
        %v4634 = vadd.f32 %v4423, %v4547
        %v4635 = vadd.f32 %v4424, %v4596
        %v4636 = vadd.f32 %v4425, %v4550
        %v4637 = vadd.f32 %v4426, %v4599
        %v4638 = vadd.f32 %v4427, %v4552
        %v4639 = vadd.f32 %v4428, %v4601
        %v4640 = vadd.f32 %v4429, %v4555
        %v4641 = vadd.f32 %v4430, %v4604
        %v4642 = vadd.f32 %v4431, %v4557
        %v4643 = vadd.f32 %v4432, %v4606
        %v4644 = vadd.f32 %v4433, %v4560
        %v4645 = vadd.f32 %v4434, %v4609
        %v4646 = vadd.f32 %v4435, %v4562
        %v4647 = vadd.f32 %v4436, %v4611
        %v4648 = vadd.f32 %v4437, %v4565
        %v4649 = vadd.f32 %v4438, %v4614
        %v4650 = vadd.f32 %v4439, %v4567
        %v4651 = vadd.f32 %v4440, %v4616
        %v4652 = vadd.f32 %v4441, %v4570
        %v4653 = vadd.f32 %v4442, %v4619
        %v4654 = vadd.f32 %v4443, %v4572
        %v4655 = vadd.f32 %v4444, %v4621
        %v4656 = vadd.f32 %v4445, %v4575
        %v4657 = vadd.f32 %v4446, %v4624
        %v4658 = vadd.f32 %v4447, %v4577
        %v4659 = vadd.f32 %v4448, %v4626
        %v4660 = vld [vmem:[%s5] sm:$0xff]
        %v4661 = vld [vmem:[%s5 + $0x8] sm:$0xff]
        %v4662 = vld [vmem:[%s5 + $0x10] sm:$0xff]
        %v4663 = vld [vmem:[%s5 + $0x18] sm:$0xff]
        %v4664 = vld [vmem:[%s5 + $0x20] sm:$0xff]
        %v4665 = vld [vmem:[%s5 + $0x28] sm:$0xff]
        %v4666 = vld [vmem:[%s5 + $0x30] sm:$0xff]
        %v4667 = vld [vmem:[%s5 + $0x38] sm:$0xff]
        %v4668 = vld [vmem:[%s5 + $0x40] sm:$0xff]
        %v4669 = vld [vmem:[%s5 + $0x48] sm:$0xff]
        %v4670 = vld [vmem:[%s5 + $0x50] sm:$0xff]
        %v4671 = vld [vmem:[%s5 + $0x58] sm:$0xff]
        %v4672 = vld [vmem:[%s5 + $0x60] sm:$0xff]
        %v4673 = vld [vmem:[%s5 + $0x68] sm:$0xff]
        %v4674 = vld [vmem:[%s5 + $0x70] sm:$0xff]
        %v4675 = vld [vmem:[%s5 + $0x78] sm:$0xff]
        %4677 = vset.pattern.permute.xlu0 0
        %4678 = vperm.xlu0 %4677, %v4660
        %v4679 = vpop.permute.xlu0 %4678
        %4682 = vset.pattern.permute.xlu0 0
        %4683 = vperm.xlu0 %4682, %v4661
        %v4684 = vpop.permute.xlu0 %4683
        %4687 = vset.pattern.permute.xlu0 0
        %4688 = vperm.xlu0 %4687, %v4662
        %v4689 = vpop.permute.xlu0 %4688
        %4692 = vset.pattern.permute.xlu0 0
        %4693 = vperm.xlu0 %4692, %v4663
        %v4694 = vpop.permute.xlu0 %4693
        %4697 = vset.pattern.permute.xlu0 0
        %4698 = vperm.xlu0 %4697, %v4664
        %v4699 = vpop.permute.xlu0 %4698
        %4702 = vset.pattern.permute.xlu0 0
        %4703 = vperm.xlu0 %4702, %v4665
        %v4704 = vpop.permute.xlu0 %4703
        %4707 = vset.pattern.permute.xlu0 0
        %4708 = vperm.xlu0 %4707, %v4666
        %v4709 = vpop.permute.xlu0 %4708
        %4712 = vset.pattern.permute.xlu0 0
        %4713 = vperm.xlu0 %4712, %v4667
        %v4714 = vpop.permute.xlu0 %4713
        %4717 = vset.pattern.permute.xlu0 0
        %4718 = vperm.xlu0 %4717, %v4668
        %v4719 = vpop.permute.xlu0 %4718
        %4722 = vset.pattern.permute.xlu0 0
        %4723 = vperm.xlu0 %4722, %v4669
        %v4724 = vpop.permute.xlu0 %4723
        %4727 = vset.pattern.permute.xlu0 0
        %4728 = vperm.xlu0 %4727, %v4670
        %v4729 = vpop.permute.xlu0 %4728
        %4732 = vset.pattern.permute.xlu0 0
        %4733 = vperm.xlu0 %4732, %v4671
        %v4734 = vpop.permute.xlu0 %4733
        %4737 = vset.pattern.permute.xlu0 0
        %4738 = vperm.xlu0 %4737, %v4672
        %v4739 = vpop.permute.xlu0 %4738
        %4742 = vset.pattern.permute.xlu0 0
        %4743 = vperm.xlu0 %4742, %v4673
        %v4744 = vpop.permute.xlu0 %4743
        %4747 = vset.pattern.permute.xlu0 0
        %4748 = vperm.xlu0 %4747, %v4674
        %v4749 = vpop.permute.xlu0 %4748
        %4752 = vset.pattern.permute.xlu0 0
        %4753 = vperm.xlu0 %4752, %v4675
        %v4754 = vpop.permute.xlu0 %4753
        %v4756 = vadd.f32 %v4628, %v4679
        %v4757 = vadd.f32 %v4629, %v4679
        %v4758 = vadd.f32 %v4630, %v4684
        %v4759 = vadd.f32 %v4631, %v4684
        %v4760 = vadd.f32 %v4632, %v4689
        %v4761 = vadd.f32 %v4633, %v4689
        %v4762 = vadd.f32 %v4634, %v4694
        %v4763 = vadd.f32 %v4635, %v4694
        %v4764 = vadd.f32 %v4636, %v4699
        %v4765 = vadd.f32 %v4637, %v4699
        %v4766 = vadd.f32 %v4638, %v4704
        %v4767 = vadd.f32 %v4639, %v4704
        %v4768 = vadd.f32 %v4640, %v4709
        %v4769 = vadd.f32 %v4641, %v4709
        %v4770 = vadd.f32 %v4642, %v4714
        %v4771 = vadd.f32 %v4643, %v4714
        %v4772 = vadd.f32 %v4644, %v4719
        %v4773 = vadd.f32 %v4645, %v4719
        %v4774 = vadd.f32 %v4646, %v4724
        %v4775 = vadd.f32 %v4647, %v4724
        %v4776 = vadd.f32 %v4648, %v4729
        %v4777 = vadd.f32 %v4649, %v4729
        %v4778 = vadd.f32 %v4650, %v4734
        %v4779 = vadd.f32 %v4651, %v4734
        %v4780 = vadd.f32 %v4652, %v4739
        %v4781 = vadd.f32 %v4653, %v4739
        %v4782 = vadd.f32 %v4654, %v4744
        %v4783 = vadd.f32 %v4655, %v4744
        %v4784 = vadd.f32 %v4656, %v4749
        %v4785 = vadd.f32 %v4657, %v4749
        %v4786 = vadd.f32 %v4658, %v4754
        %v4787 = vadd.f32 %v4659, %v4754
        %v4788 = vxor.u32 %v4756, 2147483648
        %v4789 = vxor.u32 %v4757, 2147483648
        %v4790 = vxor.u32 %v4758, 2147483648
        %v4791 = vxor.u32 %v4759, 2147483648
        %v4792 = vxor.u32 %v4760, 2147483648
        %v4793 = vxor.u32 %v4761, 2147483648
        %v4794 = vxor.u32 %v4762, 2147483648
        %v4795 = vxor.u32 %v4763, 2147483648
        %v4796 = vmul.f32 %v4788, 1.442695
        %v4797 = vpow.pop %v4796
        %v4798 = vmul.f32 %v4789, 1.442695
        %v4799 = vpow.pop %v4798
        %v4800 = vmul.f32 %v4790, 1.442695
        %v4801 = vpow.pop %v4800
        %v4802 = vmul.f32 %v4791, 1.442695
        %v4803 = vpow.pop %v4802
        %v4804 = vmul.f32 %v4792, 1.442695
        %v4805 = vpow.pop %v4804
        %v4806 = vmul.f32 %v4793, 1.442695
        %v4807 = vpow.pop %v4806
        %v4808 = vmul.f32 %v4794, 1.442695
        %v4809 = vpow.pop %v4808
        %v4810 = vmul.f32 %v4795, 1.442695
        %v4811 = vpow.pop %v4810
        %v4812 = vadd.f32 %v4797, 1.0
        %v4813 = vadd.f32 %v4799, 1.0
        %v4814 = vadd.f32 %v4801, 1.0
        %v4815 = vadd.f32 %v4803, 1.0
        %v4816 = vadd.f32 %v4805, 1.0
        %v4817 = vadd.f32 %v4807, 1.0
        %v4818 = vadd.f32 %v4809, 1.0
        %v4819 = vadd.f32 %v4811, 1.0
        %v4820 = vrcp.pop %v4812
        %v4821 = vmul.f32 %v4812, %v4820
        %v4822 = vsub.f32 1.0, %v4821
        %v4823 = vmul.f32 %v4820, %v4822
        %v4824 = vadd.f32 %v4820, %v4823
        %vm4825 = vweird.f32 %v4812
        %vm4826 = vweird.f32 %v4820
        %vm4827 = vmor %vm4825, %vm4826
        %v4828 = vsel %vm4827, %v4820, %v4824
        %v4829 = vand.u32 2147483647, %v4812
        %vm4830 = vcmp.eq.f32.partialorder %v4829, 8.507059e+37
        %v4831 = vand.u32 %v4812, 2147483648
        %v4832 = vor.u32 1.1754944e-38, %v4831
        %v4833 = vsel %vm4830, %v4832, %v4828
        %v4834 = vmul.f32 1.0, %v4833
        %v4835 = vrcp.pop %v4813
        %v4836 = vmul.f32 %v4813, %v4835
        %v4837 = vsub.f32 1.0, %v4836
        %v4838 = vmul.f32 %v4835, %v4837
        %v4839 = vadd.f32 %v4835, %v4838
        %vm4840 = vweird.f32 %v4813
        %vm4841 = vweird.f32 %v4835
        %vm4842 = vmor %vm4840, %vm4841
        %v4843 = vsel %vm4842, %v4835, %v4839
        %v4844 = vand.u32 2147483647, %v4813
        %vm4845 = vcmp.eq.f32.partialorder %v4844, 8.507059e+37
        %v4846 = vand.u32 %v4813, 2147483648
        %v4847 = vor.u32 1.1754944e-38, %v4846
        %v4848 = vsel %vm4845, %v4847, %v4843
        %v4849 = vmul.f32 1.0, %v4848
        %v4850 = vrcp.pop %v4814
        %v4851 = vmul.f32 %v4814, %v4850
        %v4852 = vsub.f32 1.0, %v4851
        %v4853 = vmul.f32 %v4850, %v4852
        %v4854 = vadd.f32 %v4850, %v4853
        %vm4855 = vweird.f32 %v4814
        %vm4856 = vweird.f32 %v4850
        %vm4857 = vmor %vm4855, %vm4856
        %v4858 = vsel %vm4857, %v4850, %v4854
        %v4859 = vand.u32 2147483647, %v4814
        %vm4860 = vcmp.eq.f32.partialorder %v4859, 8.507059e+37
        %v4861 = vand.u32 %v4814, 2147483648
        %v4862 = vor.u32 1.1754944e-38, %v4861
        %v4863 = vsel %vm4860, %v4862, %v4858
        %v4864 = vmul.f32 1.0, %v4863
        %v4865 = vrcp.pop %v4815
        %v4866 = vmul.f32 %v4815, %v4865
        %v4867 = vsub.f32 1.0, %v4866
        %v4868 = vmul.f32 %v4865, %v4867
        %v4869 = vadd.f32 %v4865, %v4868
        %vm4870 = vweird.f32 %v4815
        %vm4871 = vweird.f32 %v4865
        %vm4872 = vmor %vm4870, %vm4871
        %v4873 = vsel %vm4872, %v4865, %v4869
        %v4874 = vand.u32 2147483647, %v4815
        %vm4875 = vcmp.eq.f32.partialorder %v4874, 8.507059e+37
        %v4876 = vand.u32 %v4815, 2147483648
        %v4877 = vor.u32 1.1754944e-38, %v4876
        %v4878 = vsel %vm4875, %v4877, %v4873
        %v4879 = vmul.f32 1.0, %v4878
        %v4880 = vrcp.pop %v4816
        %v4881 = vmul.f32 %v4816, %v4880
        %v4882 = vsub.f32 1.0, %v4881
        %v4883 = vmul.f32 %v4880, %v4882
        %v4884 = vadd.f32 %v4880, %v4883
        %vm4885 = vweird.f32 %v4816
        %vm4886 = vweird.f32 %v4880
        %vm4887 = vmor %vm4885, %vm4886
        %v4888 = vsel %vm4887, %v4880, %v4884
        %v4889 = vand.u32 2147483647, %v4816
        %vm4890 = vcmp.eq.f32.partialorder %v4889, 8.507059e+37
        %v4891 = vand.u32 %v4816, 2147483648
        %v4892 = vor.u32 1.1754944e-38, %v4891
        %v4893 = vsel %vm4890, %v4892, %v4888
        %v4894 = vmul.f32 1.0, %v4893
        %v4895 = vrcp.pop %v4817
        %v4896 = vmul.f32 %v4817, %v4895
        %v4897 = vsub.f32 1.0, %v4896
        %v4898 = vmul.f32 %v4895, %v4897
        %v4899 = vadd.f32 %v4895, %v4898
        %vm4900 = vweird.f32 %v4817
        %vm4901 = vweird.f32 %v4895
        %vm4902 = vmor %vm4900, %vm4901
        %v4903 = vsel %vm4902, %v4895, %v4899
        %v4904 = vand.u32 2147483647, %v4817
        %vm4905 = vcmp.eq.f32.partialorder %v4904, 8.507059e+37
        %v4906 = vand.u32 %v4817, 2147483648
        %v4907 = vor.u32 1.1754944e-38, %v4906
        %v4908 = vsel %vm4905, %v4907, %v4903
        %v4909 = vmul.f32 1.0, %v4908
        %v4910 = vrcp.pop %v4818
        %v4911 = vmul.f32 %v4818, %v4910
        %v4912 = vsub.f32 1.0, %v4911
        %v4913 = vmul.f32 %v4910, %v4912
        %v4914 = vadd.f32 %v4910, %v4913
        %vm4915 = vweird.f32 %v4818
        %vm4916 = vweird.f32 %v4910
        %vm4917 = vmor %vm4915, %vm4916
        %v4918 = vsel %vm4917, %v4910, %v4914
        %v4919 = vand.u32 2147483647, %v4818
        %vm4920 = vcmp.eq.f32.partialorder %v4919, 8.507059e+37
        %v4921 = vand.u32 %v4818, 2147483648
        %v4922 = vor.u32 1.1754944e-38, %v4921
        %v4923 = vsel %vm4920, %v4922, %v4918
        %v4924 = vmul.f32 1.0, %v4923
        %v4925 = vrcp.pop %v4819
        %v4926 = vmul.f32 %v4819, %v4925
        %v4927 = vsub.f32 1.0, %v4926
        %v4928 = vmul.f32 %v4925, %v4927
        %v4929 = vadd.f32 %v4925, %v4928
        %vm4930 = vweird.f32 %v4819
        %vm4931 = vweird.f32 %v4925
        %vm4932 = vmor %vm4930, %vm4931
        %v4933 = vsel %vm4932, %v4925, %v4929
        %v4934 = vand.u32 2147483647, %v4819
        %vm4935 = vcmp.eq.f32.partialorder %v4934, 8.507059e+37
        %v4936 = vand.u32 %v4819, 2147483648
        %v4937 = vor.u32 1.1754944e-38, %v4936
        %v4938 = vsel %vm4935, %v4937, %v4933
        %v4939 = vmul.f32 1.0, %v4938
        %v4940 = vxor.u32 %v4764, 2147483648
        %v4941 = vxor.u32 %v4765, 2147483648
        %v4942 = vxor.u32 %v4766, 2147483648
        %v4943 = vxor.u32 %v4767, 2147483648
        %v4944 = vxor.u32 %v4768, 2147483648
        %v4945 = vxor.u32 %v4769, 2147483648
        %v4946 = vxor.u32 %v4770, 2147483648
        %v4947 = vxor.u32 %v4771, 2147483648
        %v4948 = vmul.f32 %v4940, 1.442695
        %v4949 = vpow.pop %v4948
        %v4950 = vmul.f32 %v4941, 1.442695
        %v4951 = vpow.pop %v4950
        %v4952 = vmul.f32 %v4942, 1.442695
        %v4953 = vpow.pop %v4952
        %v4954 = vmul.f32 %v4943, 1.442695
        %v4955 = vpow.pop %v4954
        %v4956 = vmul.f32 %v4944, 1.442695
        %v4957 = vpow.pop %v4956
        %v4958 = vmul.f32 %v4945, 1.442695
        %v4959 = vpow.pop %v4958
        %v4960 = vmul.f32 %v4946, 1.442695
        %v4961 = vpow.pop %v4960
        %v4962 = vmul.f32 %v4947, 1.442695
        %v4963 = vpow.pop %v4962
        %v4964 = vadd.f32 %v4949, 1.0
        %v4965 = vadd.f32 %v4951, 1.0
        %v4966 = vadd.f32 %v4953, 1.0
        %v4967 = vadd.f32 %v4955, 1.0
        %v4968 = vadd.f32 %v4957, 1.0
        %v4969 = vadd.f32 %v4959, 1.0
        %v4970 = vadd.f32 %v4961, 1.0
        %v4971 = vadd.f32 %v4963, 1.0
        %v4972 = vrcp.pop %v4964
        %v4973 = vmul.f32 %v4964, %v4972
        %v4974 = vsub.f32 1.0, %v4973
        %v4975 = vmul.f32 %v4972, %v4974
        %v4976 = vadd.f32 %v4972, %v4975
        %vm4977 = vweird.f32 %v4964
        %vm4978 = vweird.f32 %v4972
        %vm4979 = vmor %vm4977, %vm4978
        %v4980 = vsel %vm4979, %v4972, %v4976
        %v4981 = vand.u32 2147483647, %v4964
        %vm4982 = vcmp.eq.f32.partialorder %v4981, 8.507059e+37
        %v4983 = vand.u32 %v4964, 2147483648
        %v4984 = vor.u32 1.1754944e-38, %v4983
        %v4985 = vsel %vm4982, %v4984, %v4980
        %v4986 = vmul.f32 1.0, %v4985
        %v4987 = vrcp.pop %v4965
        %v4988 = vmul.f32 %v4965, %v4987
        %v4989 = vsub.f32 1.0, %v4988
        %v4990 = vmul.f32 %v4987, %v4989
        %v4991 = vadd.f32 %v4987, %v4990
        %vm4992 = vweird.f32 %v4965
        %vm4993 = vweird.f32 %v4987
        %vm4994 = vmor %vm4992, %vm4993
        %v4995 = vsel %vm4994, %v4987, %v4991
        %v4996 = vand.u32 2147483647, %v4965
        %vm4997 = vcmp.eq.f32.partialorder %v4996, 8.507059e+37
        %v4998 = vand.u32 %v4965, 2147483648
        %v4999 = vor.u32 1.1754944e-38, %v4998
        %v5000 = vsel %vm4997, %v4999, %v4995
        %v5001 = vmul.f32 1.0, %v5000
        %v5002 = vrcp.pop %v4966
        %v5003 = vmul.f32 %v4966, %v5002
        %v5004 = vsub.f32 1.0, %v5003
        %v5005 = vmul.f32 %v5002, %v5004
        %v5006 = vadd.f32 %v5002, %v5005
        %vm5007 = vweird.f32 %v4966
        %vm5008 = vweird.f32 %v5002
        %vm5009 = vmor %vm5007, %vm5008
        %v5010 = vsel %vm5009, %v5002, %v5006
        %v5011 = vand.u32 2147483647, %v4966
        %vm5012 = vcmp.eq.f32.partialorder %v5011, 8.507059e+37
        %v5013 = vand.u32 %v4966, 2147483648
        %v5014 = vor.u32 1.1754944e-38, %v5013
        %v5015 = vsel %vm5012, %v5014, %v5010
        %v5016 = vmul.f32 1.0, %v5015
        %v5017 = vrcp.pop %v4967
        %v5018 = vmul.f32 %v4967, %v5017
        %v5019 = vsub.f32 1.0, %v5018
        %v5020 = vmul.f32 %v5017, %v5019
        %v5021 = vadd.f32 %v5017, %v5020
        %vm5022 = vweird.f32 %v4967
        %vm5023 = vweird.f32 %v5017
        %vm5024 = vmor %vm5022, %vm5023
        %v5025 = vsel %vm5024, %v5017, %v5021
        %v5026 = vand.u32 2147483647, %v4967
        %vm5027 = vcmp.eq.f32.partialorder %v5026, 8.507059e+37
        %v5028 = vand.u32 %v4967, 2147483648
        %v5029 = vor.u32 1.1754944e-38, %v5028
        %v5030 = vsel %vm5027, %v5029, %v5025
        %v5031 = vmul.f32 1.0, %v5030
        %v5032 = vrcp.pop %v4968
        %v5033 = vmul.f32 %v4968, %v5032
        %v5034 = vsub.f32 1.0, %v5033
        %v5035 = vmul.f32 %v5032, %v5034
        %v5036 = vadd.f32 %v5032, %v5035
        %vm5037 = vweird.f32 %v4968
        %vm5038 = vweird.f32 %v5032
        %vm5039 = vmor %vm5037, %vm5038
        %v5040 = vsel %vm5039, %v5032, %v5036
        %v5041 = vand.u32 2147483647, %v4968
        %vm5042 = vcmp.eq.f32.partialorder %v5041, 8.507059e+37
        %v5043 = vand.u32 %v4968, 2147483648
        %v5044 = vor.u32 1.1754944e-38, %v5043
        %v5045 = vsel %vm5042, %v5044, %v5040
        %v5046 = vmul.f32 1.0, %v5045
        %v5047 = vrcp.pop %v4969
        %v5048 = vmul.f32 %v4969, %v5047
        %v5049 = vsub.f32 1.0, %v5048
        %v5050 = vmul.f32 %v5047, %v5049
        %v5051 = vadd.f32 %v5047, %v5050
        %vm5052 = vweird.f32 %v4969
        %vm5053 = vweird.f32 %v5047
        %vm5054 = vmor %vm5052, %vm5053
        %v5055 = vsel %vm5054, %v5047, %v5051
        %v5056 = vand.u32 2147483647, %v4969
        %vm5057 = vcmp.eq.f32.partialorder %v5056, 8.507059e+37
        %v5058 = vand.u32 %v4969, 2147483648
        %v5059 = vor.u32 1.1754944e-38, %v5058
        %v5060 = vsel %vm5057, %v5059, %v5055
        %v5061 = vmul.f32 1.0, %v5060
        %v5062 = vrcp.pop %v4970
        %v5063 = vmul.f32 %v4970, %v5062
        %v5064 = vsub.f32 1.0, %v5063
        %v5065 = vmul.f32 %v5062, %v5064
        %v5066 = vadd.f32 %v5062, %v5065
        %vm5067 = vweird.f32 %v4970
        %vm5068 = vweird.f32 %v5062
        %vm5069 = vmor %vm5067, %vm5068
        %v5070 = vsel %vm5069, %v5062, %v5066
        %v5071 = vand.u32 2147483647, %v4970
        %vm5072 = vcmp.eq.f32.partialorder %v5071, 8.507059e+37
        %v5073 = vand.u32 %v4970, 2147483648
        %v5074 = vor.u32 1.1754944e-38, %v5073
        %v5075 = vsel %vm5072, %v5074, %v5070
        %v5076 = vmul.f32 1.0, %v5075
        %v5077 = vrcp.pop %v4971
        %v5078 = vmul.f32 %v4971, %v5077
        %v5079 = vsub.f32 1.0, %v5078
        %v5080 = vmul.f32 %v5077, %v5079
        %v5081 = vadd.f32 %v5077, %v5080
        %vm5082 = vweird.f32 %v4971
        %vm5083 = vweird.f32 %v5077
        %vm5084 = vmor %vm5082, %vm5083
        %v5085 = vsel %vm5084, %v5077, %v5081
        %v5086 = vand.u32 2147483647, %v4971
        %vm5087 = vcmp.eq.f32.partialorder %v5086, 8.507059e+37
        %v5088 = vand.u32 %v4971, 2147483648
        %v5089 = vor.u32 1.1754944e-38, %v5088
        %v5090 = vsel %vm5087, %v5089, %v5085
        %v5091 = vmul.f32 1.0, %v5090
        %v5092 = vxor.u32 %v4772, 2147483648
        %v5093 = vxor.u32 %v4773, 2147483648
        %v5094 = vxor.u32 %v4774, 2147483648
        %v5095 = vxor.u32 %v4775, 2147483648
        %v5096 = vxor.u32 %v4776, 2147483648
        %v5097 = vxor.u32 %v4777, 2147483648
        %v5098 = vxor.u32 %v4778, 2147483648
        %v5099 = vxor.u32 %v4779, 2147483648
        %v5100 = vmul.f32 %v5092, 1.442695
        %v5101 = vpow.pop %v5100
        %v5102 = vmul.f32 %v5093, 1.442695
        %v5103 = vpow.pop %v5102
        %v5104 = vmul.f32 %v5094, 1.442695
        %v5105 = vpow.pop %v5104
        %v5106 = vmul.f32 %v5095, 1.442695
        %v5107 = vpow.pop %v5106
        %v5108 = vmul.f32 %v5096, 1.442695
        %v5109 = vpow.pop %v5108
        %v5110 = vmul.f32 %v5097, 1.442695
        %v5111 = vpow.pop %v5110
        %v5112 = vmul.f32 %v5098, 1.442695
        %v5113 = vpow.pop %v5112
        %v5114 = vmul.f32 %v5099, 1.442695
        %v5115 = vpow.pop %v5114
        %v5116 = vadd.f32 %v5101, 1.0
        %v5117 = vadd.f32 %v5103, 1.0
        %v5118 = vadd.f32 %v5105, 1.0
        %v5119 = vadd.f32 %v5107, 1.0
        %v5120 = vadd.f32 %v5109, 1.0
        %v5121 = vadd.f32 %v5111, 1.0
        %v5122 = vadd.f32 %v5113, 1.0
        %v5123 = vadd.f32 %v5115, 1.0
        %v5124 = vrcp.pop %v5116
        %v5125 = vmul.f32 %v5116, %v5124
        %v5126 = vsub.f32 1.0, %v5125
        %v5127 = vmul.f32 %v5124, %v5126
        %v5128 = vadd.f32 %v5124, %v5127
        %vm5129 = vweird.f32 %v5116
        %vm5130 = vweird.f32 %v5124
        %vm5131 = vmor %vm5129, %vm5130
        %v5132 = vsel %vm5131, %v5124, %v5128
        %v5133 = vand.u32 2147483647, %v5116
        %vm5134 = vcmp.eq.f32.partialorder %v5133, 8.507059e+37
        %v5135 = vand.u32 %v5116, 2147483648
        %v5136 = vor.u32 1.1754944e-38, %v5135
        %v5137 = vsel %vm5134, %v5136, %v5132
        %v5138 = vmul.f32 1.0, %v5137
        %v5139 = vrcp.pop %v5117
        %v5140 = vmul.f32 %v5117, %v5139
        %v5141 = vsub.f32 1.0, %v5140
        %v5142 = vmul.f32 %v5139, %v5141
        %v5143 = vadd.f32 %v5139, %v5142
        %vm5144 = vweird.f32 %v5117
        %vm5145 = vweird.f32 %v5139
        %vm5146 = vmor %vm5144, %vm5145
        %v5147 = vsel %vm5146, %v5139, %v5143
        %v5148 = vand.u32 2147483647, %v5117
        %vm5149 = vcmp.eq.f32.partialorder %v5148, 8.507059e+37
        %v5150 = vand.u32 %v5117, 2147483648
        %v5151 = vor.u32 1.1754944e-38, %v5150
        %v5152 = vsel %vm5149, %v5151, %v5147
        %v5153 = vmul.f32 1.0, %v5152
        %v5154 = vrcp.pop %v5118
        %v5155 = vmul.f32 %v5118, %v5154
        %v5156 = vsub.f32 1.0, %v5155
        %v5157 = vmul.f32 %v5154, %v5156
        %v5158 = vadd.f32 %v5154, %v5157
        %vm5159 = vweird.f32 %v5118
        %vm5160 = vweird.f32 %v5154
        %vm5161 = vmor %vm5159, %vm5160
        %v5162 = vsel %vm5161, %v5154, %v5158
        %v5163 = vand.u32 2147483647, %v5118
        %vm5164 = vcmp.eq.f32.partialorder %v5163, 8.507059e+37
        %v5165 = vand.u32 %v5118, 2147483648
        %v5166 = vor.u32 1.1754944e-38, %v5165
        %v5167 = vsel %vm5164, %v5166, %v5162
        %v5168 = vmul.f32 1.0, %v5167
        %v5169 = vrcp.pop %v5119
        %v5170 = vmul.f32 %v5119, %v5169
        %v5171 = vsub.f32 1.0, %v5170
        %v5172 = vmul.f32 %v5169, %v5171
        %v5173 = vadd.f32 %v5169, %v5172
        %vm5174 = vweird.f32 %v5119
        %vm5175 = vweird.f32 %v5169
        %vm5176 = vmor %vm5174, %vm5175
        %v5177 = vsel %vm5176, %v5169, %v5173
        %v5178 = vand.u32 2147483647, %v5119
        %vm5179 = vcmp.eq.f32.partialorder %v5178, 8.507059e+37
        %v5180 = vand.u32 %v5119, 2147483648
        %v5181 = vor.u32 1.1754944e-38, %v5180
        %v5182 = vsel %vm5179, %v5181, %v5177
        %v5183 = vmul.f32 1.0, %v5182
        %v5184 = vrcp.pop %v5120
        %v5185 = vmul.f32 %v5120, %v5184
        %v5186 = vsub.f32 1.0, %v5185
        %v5187 = vmul.f32 %v5184, %v5186
        %v5188 = vadd.f32 %v5184, %v5187
        %vm5189 = vweird.f32 %v5120
        %vm5190 = vweird.f32 %v5184
        %vm5191 = vmor %vm5189, %vm5190
        %v5192 = vsel %vm5191, %v5184, %v5188
        %v5193 = vand.u32 2147483647, %v5120
        %vm5194 = vcmp.eq.f32.partialorder %v5193, 8.507059e+37
        %v5195 = vand.u32 %v5120, 2147483648
        %v5196 = vor.u32 1.1754944e-38, %v5195
        %v5197 = vsel %vm5194, %v5196, %v5192
        %v5198 = vmul.f32 1.0, %v5197
        %v5199 = vrcp.pop %v5121
        %v5200 = vmul.f32 %v5121, %v5199
        %v5201 = vsub.f32 1.0, %v5200
        %v5202 = vmul.f32 %v5199, %v5201
        %v5203 = vadd.f32 %v5199, %v5202
        %vm5204 = vweird.f32 %v5121
        %vm5205 = vweird.f32 %v5199
        %vm5206 = vmor %vm5204, %vm5205
        %v5207 = vsel %vm5206, %v5199, %v5203
        %v5208 = vand.u32 2147483647, %v5121
        %vm5209 = vcmp.eq.f32.partialorder %v5208, 8.507059e+37
        %v5210 = vand.u32 %v5121, 2147483648
        %v5211 = vor.u32 1.1754944e-38, %v5210
        %v5212 = vsel %vm5209, %v5211, %v5207
        %v5213 = vmul.f32 1.0, %v5212
        %v5214 = vrcp.pop %v5122
        %v5215 = vmul.f32 %v5122, %v5214
        %v5216 = vsub.f32 1.0, %v5215
        %v5217 = vmul.f32 %v5214, %v5216
        %v5218 = vadd.f32 %v5214, %v5217
        %vm5219 = vweird.f32 %v5122
        %vm5220 = vweird.f32 %v5214
        %vm5221 = vmor %vm5219, %vm5220
        %v5222 = vsel %vm5221, %v5214, %v5218
        %v5223 = vand.u32 2147483647, %v5122
        %vm5224 = vcmp.eq.f32.partialorder %v5223, 8.507059e+37
        %v5225 = vand.u32 %v5122, 2147483648
        %v5226 = vor.u32 1.1754944e-38, %v5225
        %v5227 = vsel %vm5224, %v5226, %v5222
        %v5228 = vmul.f32 1.0, %v5227
        %v5229 = vrcp.pop %v5123
        %v5230 = vmul.f32 %v5123, %v5229
        %v5231 = vsub.f32 1.0, %v5230
        %v5232 = vmul.f32 %v5229, %v5231
        %v5233 = vadd.f32 %v5229, %v5232
        %vm5234 = vweird.f32 %v5123
        %vm5235 = vweird.f32 %v5229
        %vm5236 = vmor %vm5234, %vm5235
        %v5237 = vsel %vm5236, %v5229, %v5233
        %v5238 = vand.u32 2147483647, %v5123
        %vm5239 = vcmp.eq.f32.partialorder %v5238, 8.507059e+37
        %v5240 = vand.u32 %v5123, 2147483648
        %v5241 = vor.u32 1.1754944e-38, %v5240
        %v5242 = vsel %vm5239, %v5241, %v5237
        %v5243 = vmul.f32 1.0, %v5242
        %v5244 = vtanh.pop %v4780
        %v5245 = vtanh.pop %v4781
        %v5246 = vtanh.pop %v4782
        %v5247 = vtanh.pop %v4783
        %v5248 = vtanh.pop %v4784
        %v5249 = vtanh.pop %v4785
        %v5250 = vtanh.pop %v4786
        %v5251 = vtanh.pop %v4787
        %v5252 = vld [vmem:[%s354] sm:$0xff]
        %v5253 = vld [vmem:[%s354 + $0x8] sm:$0xff]
        %v5254 = vld [vmem:[%s354 + $0x10] sm:$0xff]
        %v5255 = vld [vmem:[%s354 + $0x18] sm:$0xff]
        %v5256 = vld [vmem:[%s354 + $0x20] sm:$0xff]
        %v5257 = vld [vmem:[%s354 + $0x28] sm:$0xff]
        %v5258 = vld [vmem:[%s354 + $0x30] sm:$0xff]
        %v5259 = vld [vmem:[%s354 + $0x38] sm:$0xff]
        %v5260 = vmul.f32 %v4986, %v5252
        %v5261 = vmul.f32 %v5001, %v5253
        %v5262 = vmul.f32 %v5016, %v5254
        %v5263 = vmul.f32 %v5031, %v5255
        %v5264 = vmul.f32 %v5046, %v5256
        %v5265 = vmul.f32 %v5061, %v5257
        %v5266 = vmul.f32 %v5076, %v5258
        %v5267 = vmul.f32 %v5091, %v5259
        %v5268 = vmul.f32 %v4834, %v5244
        %v5269 = vmul.f32 %v4849, %v5245
        %v5270 = vmul.f32 %v4864, %v5246
        %v5271 = vmul.f32 %v4879, %v5247
        %v5272 = vmul.f32 %v4894, %v5248
        %v5273 = vmul.f32 %v4909, %v5249
        %v5274 = vmul.f32 %v4924, %v5250
        %v5275 = vmul.f32 %v4939, %v5251
        %v5276 = vadd.f32 %v5260, %v5268
        %v5277 = vadd.f32 %v5261, %v5269
        %v5278 = vadd.f32 %v5262, %v5270
        %v5279 = vadd.f32 %v5263, %v5271
        %v5280 = vadd.f32 %v5264, %v5272
        %v5281 = vadd.f32 %v5265, %v5273
        %v5282 = vadd.f32 %v5266, %v5274
        %v5283 = vadd.f32 %v5267, %v5275
        %v5284 = vtanh.pop %v5276
        %v5285 = vtanh.pop %v5277
        %v5286 = vtanh.pop %v5278
        %v5287 = vtanh.pop %v5279
        %v5288 = vtanh.pop %v5280
        %v5289 = vtanh.pop %v5281
        %v5290 = vtanh.pop %v5282
        %v5291 = vtanh.pop %v5283
        %v5292 = vmul.f32 %v5138, %v5284
        %v5293 = vmul.f32 %v5153, %v5285
        %v5294 = vmul.f32 %v5168, %v5286
        %v5295 = vmul.f32 %v5183, %v5287
        %v5296 = vmul.f32 %v5198, %v5288
        %v5297 = vmul.f32 %v5213, %v5289
        %v5298 = vmul.f32 %v5228, %v5290
        %v5299 = vmul.f32 %v5243, %v5291
        %5300 = vst [vmem:[%s339] sm:$0xff] %v5276
        %5301 = vst [vmem:[%s339 + $0x8] sm:$0xff] %v5277
        %5302 = vst [vmem:[%s339 + $0x10] sm:$0xff] %v5278
        %5303 = vst [vmem:[%s339 + $0x18] sm:$0xff] %v5279
        %5304 = vst [vmem:[%s339 + $0x20] sm:$0xff] %v5280
        %5305 = vst [vmem:[%s339 + $0x28] sm:$0xff] %v5281
        %5306 = vst [vmem:[%s339 + $0x30] sm:$0xff] %v5282
        %5307 = vst [vmem:[%s339 + $0x38] sm:$0xff] %v5283
        %5308 = vst [vmem:[%s332] sm:$0xff] %v5292
        %5309 = vst [vmem:[%s332 + $0x8] sm:$0xff] %v5293
        %5310 = vst [vmem:[%s332 + $0x10] sm:$0xff] %v5294
        %5311 = vst [vmem:[%s332 + $0x18] sm:$0xff] %v5295
        %5312 = vst [vmem:[%s332 + $0x20] sm:$0xff] %v5296
        %5313 = vst [vmem:[%s332 + $0x28] sm:$0xff] %v5297
        %5314 = vst [vmem:[%s332 + $0x30] sm:$0xff] %v5298
        %5315 = vst [vmem:[%s332 + $0x38] sm:$0xff] %v5299
        %s5316 = sand.u32 %s196, 1
        %s5317 = scalar_lea.sflag [#allocation3], %s5316
        %s5318 = sand.u32 %s196, 1
        %s5319 = smul.addr %s5318, 64
        %s5320 = scalar_lea.vmem [#allocation2], %s5319
        %s5321 = sand.u32 %s222, 1
        %s5322 = scalar_lea.sflag [#allocation5], %s5321
        %s5323 = sand.u32 %s222, 1
        %s5324 = smul.addr %s5323, 64
        %s5325 = scalar_lea.vmem [#allocation4], %s5324
        // Predicated region
        $region49: #{tpu_custom_call.1} parent=47 // pred_check
          %p5326 = pneg %p206
        $region50: #{tpu_custom_call.1} parent=47 // pred_check_branch
          %5328 = sbr.rel (%p5326) target = $region52
        $region51: #{tpu_custom_call.1} parent=47 // pred_region
          %5330 = vsyncadd %s5317, 0
          %s5331 = smul.addr %s26, 8
          %s5332 = smul.addr %s5331, 8
          %s5333 = scalar_lea.hbm %s7, %s5332
          %s5334 = sshll.u32 %s5320, 4
          %s5335 = int_to_ptr.vmem [resolvable:$true] %s5334
          %s5336 = sshll.u32 %s5333, 4
          %s5337 = int_to_ptr.hbm [resolvable:$true] %s5336
          %5342 = dma.vmem_to_hbm [thread:$0]  %s5335, 1024, %s5337, %s5317, 256, 256, 16
        $region52: #{tpu_custom_call.1} parent=47 // pred_fallthru
          _
        // Predicated region
        $region53: #{tpu_custom_call.1} parent=47 // pred_check
          %p5343 = pneg %p232
        $region54: #{tpu_custom_call.1} parent=47 // pred_check_branch
          %5345 = sbr.rel (%p5343) target = $region56
        $region55: #{tpu_custom_call.1} parent=47 // pred_region
          %5347 = vsyncadd %s5322, 0
          %s5348 = smul.addr %s26, 8
          %s5349 = smul.addr %s5348, 8
          %s5350 = scalar_lea.hbm %s8, %s5349
          %s5351 = sshll.u32 %s5325, 4
          %s5352 = int_to_ptr.vmem [resolvable:$true] %s5351
          %s5353 = sshll.u32 %s5350, 4
          %s5354 = int_to_ptr.hbm [resolvable:$true] %s5353
          %5359 = dma.vmem_to_hbm [thread:$0]  %s5352, 1024, %s5354, %s5322, 256, 256, 16
        $region56: #{tpu_custom_call.1} parent=47 // pred_fallthru
          _
      $region48: #{tpu_custom_call.1} parent=5 // pred_fallthru
        _
      %p5360 = scmp.le.s32.totalorder 2, %s21
      // Predicated region
      $region57: #{tpu_custom_call.1} parent=5 // pred_check
        %p5361 = pneg %p5360
      $region58: #{tpu_custom_call.1} parent=5 // pred_check_branch
        %5363 = sbr.rel (%p5361) target = $region60
      $region59: #{tpu_custom_call.1} parent=5 // pred_region
        %s5364 = ssub.s32 %s21, 2
        // Predicated region
        $region61: #{tpu_custom_call.1} parent=59 // pred_check
          %p5365 = pneg %p212
        $region62: #{tpu_custom_call.1} parent=59 // pred_check_branch
          %5367 = sbr.rel (%p5365) target = $region64
        $region63: #{tpu_custom_call.1} parent=59 // pred_region
          %s5368 = sand.u32 %s197, 1
          %s5369 = scalar_lea.sflag [#allocation3], %s5368
          %s5370 = sand.u32 %s197, 1
          %s5371 = smul.addr %s5370, 64
          %s5372 = scalar_lea.vmem [#allocation2], %s5371
          %5374 = dma.done %s5369, 1024
        $region64: #{tpu_custom_call.1} parent=59 // pred_fallthru
          _
        // Predicated region
        $region65: #{tpu_custom_call.1} parent=59 // pred_check
          %p5375 = pneg %p238
        $region66: #{tpu_custom_call.1} parent=59 // pred_check_branch
          %5377 = sbr.rel (%p5375) target = $region68
        $region67: #{tpu_custom_call.1} parent=59 // pred_region
          %s5378 = sand.u32 %s223, 1
          %s5379 = scalar_lea.sflag [#allocation5], %s5378
          %s5380 = sand.u32 %s223, 1
          %s5381 = smul.addr %s5380, 64
          %s5382 = scalar_lea.vmem [#allocation4], %s5381
          %5384 = dma.done %s5379, 1024
        $region68: #{tpu_custom_call.1} parent=59 // pred_fallthru
          _
      $region60: #{tpu_custom_call.1} parent=5 // pred_fallthru
        _
    $region6: #{tpu_custom_call.1} parent=1 // loop_footer
      %s25 = sadd.s32 1, %s21
    $region7: #{tpu_custom_call.1} parent=1 // loop_footer_branch
      %20 = sbr.rel target = $region3
    $region8: #{tpu_custom_call.1} parent=1 // loop_exit
      _
    %5385 = vsyncpa [#allocation3], 1
    %s5386 = scalar_lea.sflag [#allocation3], 1
    %5387 = vsyncpa %s5386, 1
    %5388 = vsyncpa [#allocation5], 1
    %s5389 = scalar_lea.sflag [#allocation5], 1
    %5390 = vsyncpa %s5389, 1

</llo_original>
